<compile_context>
chip_gen: v7x
topology: tpu7x:2x2x1
jax: 0.10.0
libtpu: 0.0.40
codegen_flags: <defaults>
</compile_context>

<pallas_src>
import math
import numpy as np
import jax
import jax.numpy as jnp
from jax import lax
from jax.experimental import pallas as pl
from jax.experimental.pallas import tpu as pltpu  # noqa: F401  (TPU backend assumed)

# ---- config (small, consistent with the module) ----
B = 2
DIM = 32
NUM_HEADS = 4
HEAD_DIM = DIM // NUM_HEADS
MLP_RATIO = 4.0
HIDDEN = int(DIM * MLP_RATIO)
SR = 2                      # sr_ratio > 1 path (Conv2d + LayerNorm on kv tokens)
SEARCH_H = SEARCH_W = 8
TEMPLATE_H = TEMPLATE_W = 4
N_SEARCH = SEARCH_H * SEARCH_W
N_TEMPLATE = TEMPLATE_H * TEMPLATE_W
N = N_SEARCH + N_TEMPLATE                                   # 80 tokens per batch element
KV_SEARCH = (SEARCH_H // SR) * (SEARCH_W // SR)             # 16
KV_TEMPLATE = (TEMPLATE_H // SR) * (TEMPLATE_W // SR)       # 4
N_KV = KV_SEARCH + KV_TEMPLATE                              # 20 kv tokens per batch element
EPS = 1e-5
SCALE = HEAD_DIM ** -0.5
NEG_INF = -1e30


# ---------------- in-kernel helpers ----------------

def _ln(z, g, b):
    mu = jnp.mean(z, axis=-1, keepdims=True)
    var = jnp.mean((z - mu) ** 2, axis=-1, keepdims=True)
    return (z - mu) * lax.rsqrt(var + EPS) * g + b


# ---------------- fused Pallas kernel ----------------

def _block_kernel(x_ref, sel_ref, wsr_ref, wq_ref, wkv_ref, wp_ref,
                  w1_ref, w2_ref, gb_ref, o_ref):
    x = x_ref[...]                                     # (B*N, C) = (160, 32)
    gb = gb_ref[...]                                   # packed gains/biases (10, 128)
    g1 = gb[0:1, :DIM];  b1 = gb[1:2, :DIM]
    bsr = gb[2:3, :DIM]; gsr = gb[3:4, :DIM]; bsrln = gb[4:5, :DIM]
    bp = gb[5:6, :DIM];  g2 = gb[6:7, :DIM]; b2 = gb[7:8, :DIM]
    b2m = gb[8:9, :DIM]; b1m = gb[9:10, :]

    xn = _ln(x, g1, b1)                                # norm1

    # ---- spatial-reduction Conv2d (kernel=stride=SR), batched over B ----
    # one lane-dense (160,32)@(32,128) tap-weight matmul, then 4 one-hot gather matmuls
    y = jnp.dot(xn, wsr_ref[...], preferred_element_type=jnp.float32)     # (160, 128)
    xr = jnp.zeros((B * N_KV, DIM), jnp.float32) + bsr                    # conv bias
    for t in range(SR * SR):                           # static unroll (4 taps)
        xr = xr + jnp.dot(sel_ref[t], y[:, t * DIM:(t + 1) * DIM],
                          preferred_element_type=jnp.float32)
    xr = _ln(xr, gsr, bsrln)                           # LayerNorm on kv tokens, (40, 32)

    # ---- attention (batch fused via block-diagonal mask, scale folded into wq) ----
    q_all = jnp.dot(xn, wq_ref[...], preferred_element_type=jnp.float32)   # (160, 32)
    kv_all = jnp.dot(xr, wkv_ref[...], preferred_element_type=jnp.float32)  # (40, 64)

    # block-diagonal batch mask (static, built in-kernel from iotas)
    r_id = lax.broadcasted_iota(jnp.int32, (B * N, B * N_KV), 0)
    c_id = lax.broadcasted_iota(jnp.int32, (B * N, B * N_KV), 1)
    same = None
    for bb in range(B):                                # static unroll (B = 2)
        in_b = ((r_id >= bb * N) & (r_id < (bb + 1) * N)
                & (c_id >= bb * N_KV) & (c_id < (bb + 1) * N_KV))
        same = in_b if same is None else (same | in_b)
    neg = jnp.where(same, 0.0, NEG_INF).astype(jnp.float32)               # (160, 40)

    head_outs = []
    for h in range(NUM_HEADS):                         # static unroll (4 heads)
        ks = slice(h * HEAD_DIM, (h + 1) * HEAD_DIM)
        vs = slice(DIM + h * HEAD_DIM, DIM + (h + 1) * HEAD_DIM)
        qh = q_all[:, ks]                              # (160, 8)
        kh = kv_all[:, ks]                             # (40, 8)
        vh = kv_all[:, vs]                             # (40, 8)
        s = lax.dot_general(qh, kh, (((1,), (1,)), ((), ())),
                            preferred_element_type=jnp.float32) + neg      # (160, 40)
        s = s - jnp.max(s, axis=-1, keepdims=True)
        p = jnp.exp(s)
        p = p * pl.reciprocal(jnp.sum(p, axis=-1, keepdims=True), approx=True)
        head_outs.append(jnp.dot(p, vh, preferred_element_type=jnp.float32))  # (160, 8)

    o_heads = jnp.concatenate(head_outs, axis=-1)      # (160, 32)
    attn_out = jnp.dot(o_heads, wp_ref[...], preferred_element_type=jnp.float32) + bp

    x1 = x + attn_out                                  # residual 1
    y2 = _ln(x1, g2, b2)                               # norm2
    h1 = jnp.dot(y2, w1_ref[...], preferred_element_type=jnp.float32) + b1m   # (160, 128)
    # tanh-approx GELU (tanh -> EUP; error negligible at these magnitudes)
    act = 0.5 * h1 * (1.0 + jnp.tanh(0.7978845608028654
                                     * (h1 + 0.044715 * h1 * h1 * h1)))
    o_ref[...] = x1 + jnp.dot(act, w2_ref[...],
                              preferred_element_type=jnp.float32) + b2m        # residual 2


# ---------------- static block-diagonal one-hot tap-selection tensor ----------------

def _build_sel_bd():
    """sel[t] @ (batch-stacked tokens) gathers, for conv tap t=(kh*SR+kw), the input
    token of every output kv position, for both batch elements (block diagonal)."""
    sel = np.zeros((SR * SR, B * N_KV, B * N), np.float32)
    for bb in range(B):
        ro, co = bb * N_KV, bb * N
        for kh in range(SR):
            for kw in range(SR):
                t = kh * SR + kw
                for oh in range(SEARCH_H // SR):
                    for ow in range(SEARCH_W // SR):
                        r = oh * (SEARCH_W // SR) + ow
                        c = (oh * SR + kh) * SEARCH_W + (ow * SR + kw)
                        sel[t, ro + r, co + c] = 1.0
                for oh in range(TEMPLATE_H // SR):
                    for ow in range(TEMPLATE_W // SR):
                        r = KV_SEARCH + oh * (TEMPLATE_W // SR) + ow
                        c = N_SEARCH + (oh * SR + kh) * TEMPLATE_W + (ow * SR + kw)
                        sel[t, ro + r, co + c] = 1.0
    return jnp.asarray(sel)


_SEL_BD = _build_sel_bd()


# ---------------- wrapper ----------------

def block_forward(x, params):
    x2d = x.reshape(B * N, DIM)
    out2d = pl.pallas_call(
        _block_kernel,
        out_shape=jax.ShapeDtypeStruct((B * N, DIM), jnp.float32),
    )(x2d, _SEL_BD, params["wsr_cat"], params["wq_scaled"], params["wkv"],
      params["wproj"], params["w1"], params["w2"], params["gb_packed"])
    return out2d.reshape(B, N, DIM)


# ---------------- deterministic parameter init ----------------

def init_params(key):
    ks = jax.random.split(key, 10)
    nrm = lambda k, shape: 0.02 * jax.random.normal(k, shape, jnp.float32)
    w_conv = nrm(ks[0], (DIM, DIM, SR, SR))          # OIHW, like PyTorch Conv2d.weight
    # per-tap weight (c_in, c_out), tap index t = kh*SR + kw, concatenated along lanes
    wsr_cat = jnp.concatenate([w_conv[:, :, kh, kw].T
                               for kh in range(SR) for kw in range(SR)], axis=1)  # (32,128)
    ones = jnp.ones((1, DIM), jnp.float32)
    zeros = jnp.zeros((1, DIM), jnp.float32)
    p = dict(
        g1=ones, b1=zeros,
        wq=nrm(ks[1], (DIM, DIM)),                   # qkv_bias=False
        wkv=nrm(ks[2], (DIM, 2 * DIM)),
        wproj=nrm(ks[3], (DIM, DIM)), bproj=nrm(ks[4], (1, DIM)),
        w_conv=w_conv, wsr_cat=wsr_cat,
        bsr=nrm(ks[5], (1, DIM)),
        gsr=ones, bsr_ln=zeros,
        g2=ones, b2=zeros,
        w1=nrm(ks[6], (DIM, HIDDEN)), b1m=nrm(ks[7], (1, HIDDEN)),
        w2=nrm(ks[8], (HIDDEN, DIM)), b2m=nrm(ks[9], (1, DIM)),
    )
    p["wq_scaled"] = p["wq"] * SCALE                 # fold attention scale into wq
    # pack the ten tiny gain/bias vectors into one (10, HIDDEN) operand
    gb = jnp.zeros((10, HIDDEN), jnp.float32)
    for i, name in enumerate(["g1", "b1", "bsr", "gsr", "bsr_ln",
                              "bproj", "g2", "b2", "b2m"]):
        gb = gb.at[i, :DIM].set(p[name].reshape(-1))
    gb = gb.at[9, :].set(p["b1m"].reshape(-1))
    p["gb_packed"] = gb
    return p


# ---------------- pure-JAX reference (independent, real conv + exact erf) ----------------

def reference_block(x, params):
    def ln(z, g, b):
        mu = z.mean(-1, keepdims=True)
        var = ((z - mu) ** 2).mean(-1, keepdims=True)
        return (z - mu) / jnp.sqrt(var + EPS) * g.reshape(-1) + b.reshape(-1)

    xn = ln(x, params["g1"], params["b1"])
    q = (xn @ params["wq"]).reshape(B, N, NUM_HEADS, HEAD_DIM).transpose(0, 2, 1, 3)

    def sr_branch(tok, H, W):
        img = tok.transpose(0, 2, 1).reshape(B, DIM, H, W)          # NCHW
        y = lax.conv_general_dilated(img, params["w_conv"], (SR, SR), "VALID",
                                     dimension_numbers=("NCHW", "OIHW", "NCHW"))
        y = y + params["bsr"].reshape(1, DIM, 1, 1)
        y = y.reshape(B, DIM, -1).transpose(0, 2, 1)
        return ln(y, params["gsr"], params["bsr_ln"])

    xs = sr_branch(xn[:, :N_SEARCH, :], SEARCH_H, SEARCH_W)
    xt = sr_branch(xn[:, N_SEARCH:, :], TEMPLATE_H, TEMPLATE_W)
    x_ = jnp.concatenate([xs, xt], axis=1)
    kv = (x_ @ params["wkv"]).reshape(B, N_KV, 2, NUM_HEADS, HEAD_DIM).transpose(2, 0, 3, 1, 4)
    k, v = kv[0], kv[1]
    attn = jnp.einsum("bhqd,bhkd->bhqk", q, k) * SCALE
    attn = jax.nn.softmax(attn, axis=-1)
    o = jnp.einsum("bhqk,bhkd->bhqd", attn, v).transpose(0, 2, 1, 3).reshape(B, N, DIM)
    o = o @ params["wproj"] + params["bproj"].reshape(-1)
    x = x + o
    xn2 = ln(x, params["g2"], params["b2"])
    h = xn2 @ params["w1"] + params["b1m"].reshape(-1)
    a = 0.5 * h * (1.0 + lax.erf(h / math.sqrt(2.0)))               # exact-erf GELU
    return x + a @ params["w2"] + params["b2m"].reshape(-1)


if __name__ == "__main__":
    key = jax.random.PRNGKey(0)
    kx, kp = jax.random.split(key)
    x = jax.random.normal(kx, (B, N, DIM), jnp.float32)
    params = init_params(kp)

    out = block_forward(x, params)
    out = jax.block_until_ready(out)
    assert out.shape == (B, N, DIM)

    ref = reference_block(x, params)
    err = float(jnp.max(jnp.abs(out - ref)))
    if not err < 1e-2:
        raise AssertionError(f"Pallas block mismatch vs reference, max abs err = {err}")
    print("KERNEL_OK")
</pallas_src>

<mosaic_0001>
module attributes {stable_mosaic.version = 11 : i64} {
  func.func @_block_kernel(%arg0: memref<160x32xf32, #tpu.memory_space<vmem>>, %arg1: memref<4x40x160xf32, #tpu.memory_space<vmem>>, %arg2: memref<32x128xf32, #tpu.memory_space<vmem>>, %arg3: memref<32x32xf32, #tpu.memory_space<vmem>>, %arg4: memref<32x64xf32, #tpu.memory_space<vmem>>, %arg5: memref<32x32xf32, #tpu.memory_space<vmem>>, %arg6: memref<32x128xf32, #tpu.memory_space<vmem>>, %arg7: memref<128x32xf32, #tpu.memory_space<vmem>>, %arg8: memref<10x128xf32, #tpu.memory_space<vmem>>, %arg9: memref<160x32xf32, #tpu.memory_space<vmem>>) attributes {dimension_semantics = [], scalar_prefetch = 0 : i64, scratch_operands = 0 : i64, tpu.core_type = #tpu.core_type<tc>} {
    %c0 = arith.constant 0 : index
    %c0_0 = arith.constant 0 : index
    %0 = vector.load %arg0[%c0, %c0_0] : memref<160x32xf32, #tpu.memory_space<vmem>>, vector<160x32xf32>
    %c0_1 = arith.constant 0 : index
    %c0_2 = arith.constant 0 : index
    %1 = vector.load %arg8[%c0_1, %c0_2] : memref<10x128xf32, #tpu.memory_space<vmem>>, vector<10x128xf32>
    %2 = vector.extract_strided_slice %1 {offsets = [0, 0], sizes = [1, 32], strides = [1, 1]} : vector<10x128xf32> to vector<1x32xf32>
    %3 = vector.extract_strided_slice %1 {offsets = [1, 0], sizes = [1, 32], strides = [1, 1]} : vector<10x128xf32> to vector<1x32xf32>
    %4 = vector.extract_strided_slice %1 {offsets = [2, 0], sizes = [1, 32], strides = [1, 1]} : vector<10x128xf32> to vector<1x32xf32>
    %5 = vector.extract_strided_slice %1 {offsets = [3, 0], sizes = [1, 32], strides = [1, 1]} : vector<10x128xf32> to vector<1x32xf32>
    %6 = vector.extract_strided_slice %1 {offsets = [4, 0], sizes = [1, 32], strides = [1, 1]} : vector<10x128xf32> to vector<1x32xf32>
    %7 = vector.extract_strided_slice %1 {offsets = [5, 0], sizes = [1, 32], strides = [1, 1]} : vector<10x128xf32> to vector<1x32xf32>
    %8 = vector.extract_strided_slice %1 {offsets = [6, 0], sizes = [1, 32], strides = [1, 1]} : vector<10x128xf32> to vector<1x32xf32>
    %9 = vector.extract_strided_slice %1 {offsets = [7, 0], sizes = [1, 32], strides = [1, 1]} : vector<10x128xf32> to vector<1x32xf32>
    %10 = vector.extract_strided_slice %1 {offsets = [8, 0], sizes = [1, 32], strides = [1, 1]} : vector<10x128xf32> to vector<1x32xf32>
    %11 = vector.extract_strided_slice %1 {offsets = [9, 0], sizes = [1, 128], strides = [1, 1]} : vector<10x128xf32> to vector<1x128xf32>
    %cst = arith.constant dense<0.000000e+00> : vector<160xf32>
    %12 = vector.multi_reduction <add>, %0, %cst [1] : vector<160x32xf32> to vector<160xf32>
    %13 = vector.shape_cast %12 : vector<160xf32> to vector<160x1xf32>
    %cst_3 = arith.constant 3.200000e+01 : f32
    %14 = vector.broadcast %cst_3 : f32 to vector<160x1xf32>
    %15 = arith.divf %13, %14 : vector<160x1xf32>
    %16 = vector.broadcast %15 : vector<160x1xf32> to vector<160x32xf32>
    %17 = arith.subf %0, %16 : vector<160x32xf32>
    %18 = arith.mulf %17, %17 : vector<160x32xf32>
    %cst_4 = arith.constant dense<0.000000e+00> : vector<160xf32>
    %19 = vector.multi_reduction <add>, %18, %cst_4 [1] : vector<160x32xf32> to vector<160xf32>
    %20 = vector.shape_cast %19 : vector<160xf32> to vector<160x1xf32>
    %cst_5 = arith.constant 3.200000e+01 : f32
    %21 = vector.broadcast %cst_5 : f32 to vector<160x1xf32>
    %22 = arith.divf %20, %21 : vector<160x1xf32>
    %23 = vector.broadcast %15 : vector<160x1xf32> to vector<160x32xf32>
    %24 = arith.subf %0, %23 : vector<160x32xf32>
    %cst_6 = arith.constant 9.99999974E-6 : f32
    %25 = vector.broadcast %cst_6 : f32 to vector<160x1xf32>
    %26 = arith.addf %22, %25 : vector<160x1xf32>
    %27 = math.rsqrt %26 : vector<160x1xf32>
    %28 = vector.broadcast %27 : vector<160x1xf32> to vector<160x32xf32>
    %29 = arith.mulf %24, %28 : vector<160x32xf32>
    %30 = vector.broadcast %2 : vector<1x32xf32> to vector<160x32xf32>
    %31 = arith.mulf %29, %30 : vector<160x32xf32>
    %32 = vector.broadcast %3 : vector<1x32xf32> to vector<160x32xf32>
    %33 = arith.addf %31, %32 : vector<160x32xf32>
    %c0_7 = arith.constant 0 : index
    %c0_8 = arith.constant 0 : index
    %34 = vector.load %arg2[%c0_7, %c0_8] : memref<32x128xf32, #tpu.memory_space<vmem>>, vector<32x128xf32>
    %cst_9 = arith.constant dense<0.000000e+00> : vector<160x128xf32>
    %35 = tpu.matmul %33, %34, %cst_9 {dimension_numbers = #tpu.dot_dimension_numbers<[1], [0], [0], [1], [0, 0, 1, 1], [], []>} : vector<160x32xf32>, vector<32x128xf32>, vector<160x128xf32> -> vector<160x128xf32>
    %cst_10 = arith.constant 0.000000e+00 : f32
    %36 = vector.broadcast %cst_10 : f32 to vector<40x32xf32>
    %37 = vector.broadcast %4 : vector<1x32xf32> to vector<40x32xf32>
    %38 = arith.addf %36, %37 : vector<40x32xf32>
    %c0_11 = arith.constant 0 : index
    %c0_12 = arith.constant 0 : index
    %c0_13 = arith.constant 0 : index
    %39 = vector.load %arg1[%c0_11, %c0_12, %c0_13] : memref<4x40x160xf32, #tpu.memory_space<vmem>>, vector<1x40x160xf32>
    %40 = vector.shape_cast %39 : vector<1x40x160xf32> to vector<40x160xf32>
    %41 = vector.extract_strided_slice %35 {offsets = [0, 0], sizes = [160, 32], strides = [1, 1]} : vector<160x128xf32> to vector<160x32xf32>
    %cst_14 = arith.constant dense<0.000000e+00> : vector<40x32xf32>
    %42 = tpu.matmul %40, %41, %cst_14 {dimension_numbers = #tpu.dot_dimension_numbers<[1], [0], [0], [1], [0, 0, 1, 1], [], []>} : vector<40x160xf32>, vector<160x32xf32>, vector<40x32xf32> -> vector<40x32xf32>
    %43 = arith.addf %38, %42 : vector<40x32xf32>
    %c1 = arith.constant 1 : index
    %c0_15 = arith.constant 0 : index
    %c0_16 = arith.constant 0 : index
    %44 = vector.load %arg1[%c1, %c0_15, %c0_16] : memref<4x40x160xf32, #tpu.memory_space<vmem>>, vector<1x40x160xf32>
    %45 = vector.shape_cast %44 : vector<1x40x160xf32> to vector<40x160xf32>
    %46 = vector.extract_strided_slice %35 {offsets = [0, 32], sizes = [160, 32], strides = [1, 1]} : vector<160x128xf32> to vector<160x32xf32>
    %cst_17 = arith.constant dense<0.000000e+00> : vector<40x32xf32>
    %47 = tpu.matmul %45, %46, %cst_17 {dimension_numbers = #tpu.dot_dimension_numbers<[1], [0], [0], [1], [0, 0, 1, 1], [], []>} : vector<40x160xf32>, vector<160x32xf32>, vector<40x32xf32> -> vector<40x32xf32>
    %48 = arith.addf %43, %47 : vector<40x32xf32>
    %c2 = arith.constant 2 : index
    %c0_18 = arith.constant 0 : index
    %c0_19 = arith.constant 0 : index
    %49 = vector.load %arg1[%c2, %c0_18, %c0_19] : memref<4x40x160xf32, #tpu.memory_space<vmem>>, vector<1x40x160xf32>
    %50 = vector.shape_cast %49 : vector<1x40x160xf32> to vector<40x160xf32>
    %51 = vector.extract_strided_slice %35 {offsets = [0, 64], sizes = [160, 32], strides = [1, 1]} : vector<160x128xf32> to vector<160x32xf32>
    %cst_20 = arith.constant dense<0.000000e+00> : vector<40x32xf32>
    %52 = tpu.matmul %50, %51, %cst_20 {dimension_numbers = #tpu.dot_dimension_numbers<[1], [0], [0], [1], [0, 0, 1, 1], [], []>} : vector<40x160xf32>, vector<160x32xf32>, vector<40x32xf32> -> vector<40x32xf32>
    %53 = arith.addf %48, %52 : vector<40x32xf32>
    %c3 = arith.constant 3 : index
    %c0_21 = arith.constant 0 : index
    %c0_22 = arith.constant 0 : index
    %54 = vector.load %arg1[%c3, %c0_21, %c0_22] : memref<4x40x160xf32, #tpu.memory_space<vmem>>, vector<1x40x160xf32>
    %55 = vector.shape_cast %54 : vector<1x40x160xf32> to vector<40x160xf32>
    %56 = vector.extract_strided_slice %35 {offsets = [0, 96], sizes = [160, 32], strides = [1, 1]} : vector<160x128xf32> to vector<160x32xf32>
    %cst_23 = arith.constant dense<0.000000e+00> : vector<40x32xf32>
    %57 = tpu.matmul %55, %56, %cst_23 {dimension_numbers = #tpu.dot_dimension_numbers<[1], [0], [0], [1], [0, 0, 1, 1], [], []>} : vector<40x160xf32>, vector<160x32xf32>, vector<40x32xf32> -> vector<40x32xf32>
    %58 = arith.addf %53, %57 : vector<40x32xf32>
    %cst_24 = arith.constant dense<0.000000e+00> : vector<40xf32>
    %59 = vector.multi_reduction <add>, %58, %cst_24 [1] : vector<40x32xf32> to vector<40xf32>
    %60 = vector.shape_cast %59 : vector<40xf32> to vector<40x1xf32>
    %cst_25 = arith.constant 3.200000e+01 : f32
    %61 = vector.broadcast %cst_25 : f32 to vector<40x1xf32>
    %62 = arith.divf %60, %61 : vector<40x1xf32>
    %63 = vector.broadcast %62 : vector<40x1xf32> to vector<40x32xf32>
    %64 = arith.subf %58, %63 : vector<40x32xf32>
    %65 = arith.mulf %64, %64 : vector<40x32xf32>
    %cst_26 = arith.constant dense<0.000000e+00> : vector<40xf32>
    %66 = vector.multi_reduction <add>, %65, %cst_26 [1] : vector<40x32xf32> to vector<40xf32>
    %67 = vector.shape_cast %66 : vector<40xf32> to vector<40x1xf32>
    %cst_27 = arith.constant 3.200000e+01 : f32
    %68 = vector.broadcast %cst_27 : f32 to vector<40x1xf32>
    %69 = arith.divf %67, %68 : vector<40x1xf32>
    %70 = vector.broadcast %62 : vector<40x1xf32> to vector<40x32xf32>
    %71 = arith.subf %58, %70 : vector<40x32xf32>
    %cst_28 = arith.constant 9.99999974E-6 : f32
    %72 = vector.broadcast %cst_28 : f32 to vector<40x1xf32>
    %73 = arith.addf %69, %72 : vector<40x1xf32>
    %74 = math.rsqrt %73 : vector<40x1xf32>
    %75 = vector.broadcast %74 : vector<40x1xf32> to vector<40x32xf32>
    %76 = arith.mulf %71, %75 : vector<40x32xf32>
    %77 = vector.broadcast %5 : vector<1x32xf32> to vector<40x32xf32>
    %78 = arith.mulf %76, %77 : vector<40x32xf32>
    %79 = vector.broadcast %6 : vector<1x32xf32> to vector<40x32xf32>
    %80 = arith.addf %78, %79 : vector<40x32xf32>
    %c0_29 = arith.constant 0 : index
    %c0_30 = arith.constant 0 : index
    %81 = vector.load %arg3[%c0_29, %c0_30] : memref<32x32xf32, #tpu.memory_space<vmem>>, vector<32x32xf32>
    %cst_31 = arith.constant dense<0.000000e+00> : vector<160x32xf32>
    %82 = tpu.matmul %33, %81, %cst_31 {dimension_numbers = #tpu.dot_dimension_numbers<[1], [0], [0], [1], [0, 0, 1, 1], [], []>} : vector<160x32xf32>, vector<32x32xf32>, vector<160x32xf32> -> vector<160x32xf32>
    %c0_32 = arith.constant 0 : index
    %c0_33 = arith.constant 0 : index
    %83 = vector.load %arg4[%c0_32, %c0_33] : memref<32x64xf32, #tpu.memory_space<vmem>>, vector<32x64xf32>
    %cst_34 = arith.constant dense<0.000000e+00> : vector<40x64xf32>
    %84 = tpu.matmul %80, %83, %cst_34 {dimension_numbers = #tpu.dot_dimension_numbers<[1], [0], [0], [1], [0, 0, 1, 1], [], []>} : vector<40x32xf32>, vector<32x64xf32>, vector<40x64xf32> -> vector<40x64xf32>
    %85 = tpu.iota {dimensions = array<i32: 0>} : vector<160x40xi32>
    %86 = tpu.iota {dimensions = array<i32: 1>} : vector<160x40xi32>
    %c0_i32 = arith.constant 0 : i32
    %87 = vector.broadcast %c0_i32 : i32 to vector<160x40xi32>
    %88 = arith.cmpi sge, %85, %87 : vector<160x40xi32>
    %c80_i32 = arith.constant 80 : i32
    %89 = vector.broadcast %c80_i32 : i32 to vector<160x40xi32>
    %90 = arith.cmpi slt, %85, %89 : vector<160x40xi32>
    %91 = arith.andi %88, %90 : vector<160x40xi1>
    %c0_i32_35 = arith.constant 0 : i32
    %92 = vector.broadcast %c0_i32_35 : i32 to vector<160x40xi32>
    %93 = arith.cmpi sge, %86, %92 : vector<160x40xi32>
    %94 = arith.andi %91, %93 : vector<160x40xi1>
    %c20_i32 = arith.constant 20 : i32
    %95 = vector.broadcast %c20_i32 : i32 to vector<160x40xi32>
    %96 = arith.cmpi slt, %86, %95 : vector<160x40xi32>
    %97 = arith.andi %94, %96 : vector<160x40xi1>
    %c80_i32_36 = arith.constant 80 : i32
    %98 = vector.broadcast %c80_i32_36 : i32 to vector<160x40xi32>
    %99 = arith.cmpi sge, %85, %98 : vector<160x40xi32>
    %c160_i32 = arith.constant 160 : i32
    %100 = vector.broadcast %c160_i32 : i32 to vector<160x40xi32>
    %101 = arith.cmpi slt, %85, %100 : vector<160x40xi32>
    %102 = arith.andi %99, %101 : vector<160x40xi1>
    %c20_i32_37 = arith.constant 20 : i32
    %103 = vector.broadcast %c20_i32_37 : i32 to vector<160x40xi32>
    %104 = arith.cmpi sge, %86, %103 : vector<160x40xi32>
    %105 = arith.andi %102, %104 : vector<160x40xi1>
    %c40_i32 = arith.constant 40 : i32
    %106 = vector.broadcast %c40_i32 : i32 to vector<160x40xi32>
    %107 = arith.cmpi slt, %86, %106 : vector<160x40xi32>
    %108 = arith.andi %105, %107 : vector<160x40xi1>
    %109 = arith.ori %97, %108 : vector<160x40xi1>
    %cst_38 = arith.constant 0.000000e+00 : f32
    %cst_39 = arith.constant -1.000000e+30 : f32
    %110 = vector.broadcast %cst_38 : f32 to vector<160x40xf32>
    %111 = vector.broadcast %cst_39 : f32 to vector<160x40xf32>
    %112 = arith.select %109, %110, %111 : vector<160x40xi1>, vector<160x40xf32>
    %113 = vector.extract_strided_slice %82 {offsets = [0, 0], sizes = [160, 8], strides = [1, 1]} : vector<160x32xf32> to vector<160x8xf32>
    %114 = vector.extract_strided_slice %84 {offsets = [0, 0], sizes = [40, 8], strides = [1, 1]} : vector<40x64xf32> to vector<40x8xf32>
    %115 = vector.extract_strided_slice %84 {offsets = [0, 32], sizes = [40, 8], strides = [1, 1]} : vector<40x64xf32> to vector<40x8xf32>
    %cst_40 = arith.constant dense<0.000000e+00> : vector<160x40xf32>
    %116 = tpu.matmul %113, %114, %cst_40 {dimension_numbers = #tpu.dot_dimension_numbers<[1], [1], [0], [0], [0, 0, 1, 0], [], []>} : vector<160x8xf32>, vector<40x8xf32>, vector<160x40xf32> -> vector<160x40xf32>
    %117 = arith.addf %116, %112 : vector<160x40xf32>
    %cst_41 = arith.constant dense<0xFF800000> : vector<160xf32>
    %118 = vector.multi_reduction <maximumf>, %117, %cst_41 [1] : vector<160x40xf32> to vector<160xf32>
    %119 = vector.shape_cast %118 : vector<160xf32> to vector<160x1xf32>
    %120 = vector.broadcast %119 : vector<160x1xf32> to vector<160x40xf32>
    %121 = arith.subf %117, %120 : vector<160x40xf32>
    %122 = math.exp %121 : vector<160x40xf32>
    %cst_42 = arith.constant dense<0.000000e+00> : vector<160xf32>
    %123 = vector.multi_reduction <add>, %122, %cst_42 [1] : vector<160x40xf32> to vector<160xf32>
    %124 = vector.shape_cast %123 : vector<160xf32> to vector<160x1xf32>
    %125 = tpu.reciprocal %124 {approx = true} : vector<160x1xf32> -> vector<160x1xf32>
    %126 = vector.broadcast %125 : vector<160x1xf32> to vector<160x40xf32>
    %127 = arith.mulf %122, %126 : vector<160x40xf32>
    %cst_43 = arith.constant dense<0.000000e+00> : vector<160x8xf32>
    %128 = tpu.matmul %127, %115, %cst_43 {dimension_numbers = #tpu.dot_dimension_numbers<[1], [0], [0], [1], [0, 0, 1, 1], [], []>} : vector<160x40xf32>, vector<40x8xf32>, vector<160x8xf32> -> vector<160x8xf32>
    %129 = vector.extract_strided_slice %82 {offsets = [0, 8], sizes = [160, 8], strides = [1, 1]} : vector<160x32xf32> to vector<160x8xf32>
    %130 = vector.extract_strided_slice %84 {offsets = [0, 8], sizes = [40, 8], strides = [1, 1]} : vector<40x64xf32> to vector<40x8xf32>
    %131 = vector.extract_strided_slice %84 {offsets = [0, 40], sizes = [40, 8], strides = [1, 1]} : vector<40x64xf32> to vector<40x8xf32>
    %cst_44 = arith.constant dense<0.000000e+00> : vector<160x40xf32>
    %132 = tpu.matmul %129, %130, %cst_44 {dimension_numbers = #tpu.dot_dimension_numbers<[1], [1], [0], [0], [0, 0, 1, 0], [], []>} : vector<160x8xf32>, vector<40x8xf32>, vector<160x40xf32> -> vector<160x40xf32>
    %133 = arith.addf %132, %112 : vector<160x40xf32>
    %cst_45 = arith.constant dense<0xFF800000> : vector<160xf32>
    %134 = vector.multi_reduction <maximumf>, %133, %cst_45 [1] : vector<160x40xf32> to vector<160xf32>
    %135 = vector.shape_cast %134 : vector<160xf32> to vector<160x1xf32>
    %136 = vector.broadcast %135 : vector<160x1xf32> to vector<160x40xf32>
    %137 = arith.subf %133, %136 : vector<160x40xf32>
    %138 = math.exp %137 : vector<160x40xf32>
    %cst_46 = arith.constant dense<0.000000e+00> : vector<160xf32>
    %139 = vector.multi_reduction <add>, %138, %cst_46 [1] : vector<160x40xf32> to vector<160xf32>
    %140 = vector.shape_cast %139 : vector<160xf32> to vector<160x1xf32>
    %141 = tpu.reciprocal %140 {approx = true} : vector<160x1xf32> -> vector<160x1xf32>
    %142 = vector.broadcast %141 : vector<160x1xf32> to vector<160x40xf32>
    %143 = arith.mulf %138, %142 : vector<160x40xf32>
    %cst_47 = arith.constant dense<0.000000e+00> : vector<160x8xf32>
    %144 = tpu.matmul %143, %131, %cst_47 {dimension_numbers = #tpu.dot_dimension_numbers<[1], [0], [0], [1], [0, 0, 1, 1], [], []>} : vector<160x40xf32>, vector<40x8xf32>, vector<160x8xf32> -> vector<160x8xf32>
    %145 = vector.extract_strided_slice %82 {offsets = [0, 16], sizes = [160, 8], strides = [1, 1]} : vector<160x32xf32> to vector<160x8xf32>
    %146 = vector.extract_strided_slice %84 {offsets = [0, 16], sizes = [40, 8], strides = [1, 1]} : vector<40x64xf32> to vector<40x8xf32>
    %147 = vector.extract_strided_slice %84 {offsets = [0, 48], sizes = [40, 8], strides = [1, 1]} : vector<40x64xf32> to vector<40x8xf32>
    %cst_48 = arith.constant dense<0.000000e+00> : vector<160x40xf32>
    %148 = tpu.matmul %145, %146, %cst_48 {dimension_numbers = #tpu.dot_dimension_numbers<[1], [1], [0], [0], [0, 0, 1, 0], [], []>} : vector<160x8xf32>, vector<40x8xf32>, vector<160x40xf32> -> vector<160x40xf32>
    %149 = arith.addf %148, %112 : vector<160x40xf32>
    %cst_49 = arith.constant dense<0xFF800000> : vector<160xf32>
    %150 = vector.multi_reduction <maximumf>, %149, %cst_49 [1] : vector<160x40xf32> to vector<160xf32>
    %151 = vector.shape_cast %150 : vector<160xf32> to vector<160x1xf32>
    %152 = vector.broadcast %151 : vector<160x1xf32> to vector<160x40xf32>
    %153 = arith.subf %149, %152 : vector<160x40xf32>
    %154 = math.exp %153 : vector<160x40xf32>
    %cst_50 = arith.constant dense<0.000000e+00> : vector<160xf32>
    %155 = vector.multi_reduction <add>, %154, %cst_50 [1] : vector<160x40xf32> to vector<160xf32>
    %156 = vector.shape_cast %155 : vector<160xf32> to vector<160x1xf32>
    %157 = tpu.reciprocal %156 {approx = true} : vector<160x1xf32> -> vector<160x1xf32>
    %158 = vector.broadcast %157 : vector<160x1xf32> to vector<160x40xf32>
    %159 = arith.mulf %154, %158 : vector<160x40xf32>
    %cst_51 = arith.constant dense<0.000000e+00> : vector<160x8xf32>
    %160 = tpu.matmul %159, %147, %cst_51 {dimension_numbers = #tpu.dot_dimension_numbers<[1], [0], [0], [1], [0, 0, 1, 1], [], []>} : vector<160x40xf32>, vector<40x8xf32>, vector<160x8xf32> -> vector<160x8xf32>
    %161 = vector.extract_strided_slice %82 {offsets = [0, 24], sizes = [160, 8], strides = [1, 1]} : vector<160x32xf32> to vector<160x8xf32>
    %162 = vector.extract_strided_slice %84 {offsets = [0, 24], sizes = [40, 8], strides = [1, 1]} : vector<40x64xf32> to vector<40x8xf32>
    %163 = vector.extract_strided_slice %84 {offsets = [0, 56], sizes = [40, 8], strides = [1, 1]} : vector<40x64xf32> to vector<40x8xf32>
    %cst_52 = arith.constant dense<0.000000e+00> : vector<160x40xf32>
    %164 = tpu.matmul %161, %162, %cst_52 {dimension_numbers = #tpu.dot_dimension_numbers<[1], [1], [0], [0], [0, 0, 1, 0], [], []>} : vector<160x8xf32>, vector<40x8xf32>, vector<160x40xf32> -> vector<160x40xf32>
    %165 = arith.addf %164, %112 : vector<160x40xf32>
    %cst_53 = arith.constant dense<0xFF800000> : vector<160xf32>
    %166 = vector.multi_reduction <maximumf>, %165, %cst_53 [1] : vector<160x40xf32> to vector<160xf32>
    %167 = vector.shape_cast %166 : vector<160xf32> to vector<160x1xf32>
    %168 = vector.broadcast %167 : vector<160x1xf32> to vector<160x40xf32>
    %169 = arith.subf %165, %168 : vector<160x40xf32>
    %170 = math.exp %169 : vector<160x40xf32>
    %cst_54 = arith.constant dense<0.000000e+00> : vector<160xf32>
    %171 = vector.multi_reduction <add>, %170, %cst_54 [1] : vector<160x40xf32> to vector<160xf32>
    %172 = vector.shape_cast %171 : vector<160xf32> to vector<160x1xf32>
    %173 = tpu.reciprocal %172 {approx = true} : vector<160x1xf32> -> vector<160x1xf32>
    %174 = vector.broadcast %173 : vector<160x1xf32> to vector<160x40xf32>
    %175 = arith.mulf %170, %174 : vector<160x40xf32>
    %cst_55 = arith.constant dense<0.000000e+00> : vector<160x8xf32>
    %176 = tpu.matmul %175, %163, %cst_55 {dimension_numbers = #tpu.dot_dimension_numbers<[1], [0], [0], [1], [0, 0, 1, 1], [], []>} : vector<160x40xf32>, vector<40x8xf32>, vector<160x8xf32> -> vector<160x8xf32>
    %177 = tpu.concatenate %128, %144, %160, %176 in 1 : vector<160x8xf32>, vector<160x8xf32>, vector<160x8xf32>, vector<160x8xf32> -> vector<160x32xf32>
    %c0_56 = arith.constant 0 : index
    %c0_57 = arith.constant 0 : index
    %178 = vector.load %arg5[%c0_56, %c0_57] : memref<32x32xf32, #tpu.memory_space<vmem>>, vector<32x32xf32>
    %cst_58 = arith.constant dense<0.000000e+00> : vector<160x32xf32>
    %179 = tpu.matmul %177, %178, %cst_58 {dimension_numbers = #tpu.dot_dimension_numbers<[1], [0], [0], [1], [0, 0, 1, 1], [], []>} : vector<160x32xf32>, vector<32x32xf32>, vector<160x32xf32> -> vector<160x32xf32>
    %180 = vector.broadcast %7 : vector<1x32xf32> to vector<160x32xf32>
    %181 = arith.addf %179, %180 : vector<160x32xf32>
    %182 = arith.addf %0, %181 : vector<160x32xf32>
    %cst_59 = arith.constant dense<0.000000e+00> : vector<160xf32>
    %183 = vector.multi_reduction <add>, %182, %cst_59 [1] : vector<160x32xf32> to vector<160xf32>
    %184 = vector.shape_cast %183 : vector<160xf32> to vector<160x1xf32>
    %cst_60 = arith.constant 3.200000e+01 : f32
    %185 = vector.broadcast %cst_60 : f32 to vector<160x1xf32>
    %186 = arith.divf %184, %185 : vector<160x1xf32>
    %187 = vector.broadcast %186 : vector<160x1xf32> to vector<160x32xf32>
    %188 = arith.subf %182, %187 : vector<160x32xf32>
    %189 = arith.mulf %188, %188 : vector<160x32xf32>
    %cst_61 = arith.constant dense<0.000000e+00> : vector<160xf32>
    %190 = vector.multi_reduction <add>, %189, %cst_61 [1] : vector<160x32xf32> to vector<160xf32>
    %191 = vector.shape_cast %190 : vector<160xf32> to vector<160x1xf32>
    %cst_62 = arith.constant 3.200000e+01 : f32
    %192 = vector.broadcast %cst_62 : f32 to vector<160x1xf32>
    %193 = arith.divf %191, %192 : vector<160x1xf32>
    %194 = vector.broadcast %186 : vector<160x1xf32> to vector<160x32xf32>
    %195 = arith.subf %182, %194 : vector<160x32xf32>
    %cst_63 = arith.constant 9.99999974E-6 : f32
    %196 = vector.broadcast %cst_63 : f32 to vector<160x1xf32>
    %197 = arith.addf %193, %196 : vector<160x1xf32>
    %198 = math.rsqrt %197 : vector<160x1xf32>
    %199 = vector.broadcast %198 : vector<160x1xf32> to vector<160x32xf32>
    %200 = arith.mulf %195, %199 : vector<160x32xf32>
    %201 = vector.broadcast %8 : vector<1x32xf32> to vector<160x32xf32>
    %202 = arith.mulf %200, %201 : vector<160x32xf32>
    %203 = vector.broadcast %9 : vector<1x32xf32> to vector<160x32xf32>
    %204 = arith.addf %202, %203 : vector<160x32xf32>
    %c0_64 = arith.constant 0 : index
    %c0_65 = arith.constant 0 : index
    %205 = vector.load %arg6[%c0_64, %c0_65] : memref<32x128xf32, #tpu.memory_space<vmem>>, vector<32x128xf32>
    %cst_66 = arith.constant dense<0.000000e+00> : vector<160x128xf32>
    %206 = tpu.matmul %204, %205, %cst_66 {dimension_numbers = #tpu.dot_dimension_numbers<[1], [0], [0], [1], [0, 0, 1, 1], [], []>} : vector<160x32xf32>, vector<32x128xf32>, vector<160x128xf32> -> vector<160x128xf32>
    %207 = vector.broadcast %11 : vector<1x128xf32> to vector<160x128xf32>
    %208 = arith.addf %206, %207 : vector<160x128xf32>
    %cst_67 = arith.constant 5.000000e-01 : f32
    %209 = vector.broadcast %cst_67 : f32 to vector<160x128xf32>
    %210 = arith.mulf %209, %208 : vector<160x128xf32>
    %cst_68 = arith.constant 4.471500e-02 : f32
    %211 = vector.broadcast %cst_68 : f32 to vector<160x128xf32>
    %212 = arith.mulf %211, %208 : vector<160x128xf32>
    %213 = arith.mulf %212, %208 : vector<160x128xf32>
    %214 = arith.mulf %213, %208 : vector<160x128xf32>
    %215 = arith.addf %208, %214 : vector<160x128xf32>
    %cst_69 = arith.constant 0.797884583 : f32
    %216 = vector.broadcast %cst_69 : f32 to vector<160x128xf32>
    %217 = arith.mulf %216, %215 : vector<160x128xf32>
    %218 = math.tanh %217 : vector<160x128xf32>
    %cst_70 = arith.constant 1.000000e+00 : f32
    %219 = vector.broadcast %cst_70 : f32 to vector<160x128xf32>
    %220 = arith.addf %219, %218 : vector<160x128xf32>
    %221 = arith.mulf %210, %220 : vector<160x128xf32>
    %c0_71 = arith.constant 0 : index
    %c0_72 = arith.constant 0 : index
    %222 = vector.load %arg7[%c0_71, %c0_72] : memref<128x32xf32, #tpu.memory_space<vmem>>, vector<128x32xf32>
    %cst_73 = arith.constant dense<0.000000e+00> : vector<160x32xf32>
    %223 = tpu.matmul %221, %222, %cst_73 {dimension_numbers = #tpu.dot_dimension_numbers<[1], [0], [0], [1], [0, 0, 1, 1], [], []>} : vector<160x128xf32>, vector<128x32xf32>, vector<160x32xf32> -> vector<160x32xf32>
    %224 = arith.addf %182, %223 : vector<160x32xf32>
    %225 = vector.broadcast %10 : vector<1x32xf32> to vector<160x32xf32>
    %226 = arith.addf %224, %225 : vector<160x32xf32>
    %c0_74 = arith.constant 0 : index
    %c0_75 = arith.constant 0 : index
    %227 = vector.load %arg9[%c0_74, %c0_75] : memref<160x32xf32, #tpu.memory_space<vmem>>, vector<160x32xf32>
    tpu.vector_store %arg9[%c0_74, %c0_75], %226 {strides = array<i32>} : memref<160x32xf32, #tpu.memory_space<vmem>>, vector<160x32xf32>,
    return
  }
}

</mosaic_0001>

<llo_original>
// kernel: tpu_custom_call.1
$region0: #{tpu_custom_call.1}
  #allocation0 [shape = 'u32[]', space=smem, size = 0x4, offset = 0x4, fixed_abs, tag = 'smem constant byte address 0x4 - core index']
  #allocation1 [shape = 'u32[144,128]{1,0:T(1,128)}', space=vmem, size = 0x12000, scoped, tag = 'internal scratch']
  %s0 = inlined_call_operand.vmem [shape: f32[160,32], index: 0, kind: input, shape index: {}]
  %s1 = inlined_call_operand.vmem [shape: f32[4,40,160], index: 1, kind: input, shape index: {}]
  %s2 = inlined_call_operand.vmem [shape: f32[32,128], index: 2, kind: input, shape index: {}]
  %s3 = inlined_call_operand.vmem [shape: f32[32,32], index: 3, kind: input, shape index: {}]
  %s4 = inlined_call_operand.hbm [shape: f32[32,64], index: 4, kind: input, shape index: {}]
  %s5 = inlined_call_operand.hbm [shape: f32[32,32], index: 5, kind: input, shape index: {}]
  %s6 = inlined_call_operand.hbm [shape: f32[32,128], index: 6, kind: input, shape index: {}]
  %s7 = inlined_call_operand.vmem [shape: f32[128,32], index: 7, kind: input, shape index: {}]
  %s8 = inlined_call_operand.vmem [shape: f32[10,128], index: 8, kind: input, shape index: {}]
  %s9 = inlined_call_operand.vmem [shape: f32[160,32], index: 9, kind: output, shape index: {}]
  %s10 = sld [smem:[#allocation0]]
  $region58: #{tpu_custom_call.1} parent=0
    _
  %s12 = ssub.s32 1, %s10
  %s13 = scalar_select 0, %s12, %s10
  $region1: #{tpu_custom_call.1} parent=0
    #allocation2 [shape = 'u8[16384]{0}', space=vmem, size = 0x4000, scoped, tag = 'input window, operand 4, single buffered']
    #allocation3 [shape = 's32[1]{0}', space=sflag, size = 0x4, scoped, tag = 'scoped memory for tpu_custom_call.1']
    #allocation4 [shape = 'u8[16384]{0}', space=vmem, size = 0x4000, scoped, tag = 'input window, operand 5, single buffered']
    #allocation5 [shape = 's32[1]{0}', space=sflag, size = 0x4, scoped, tag = 'scoped memory for tpu_custom_call.1']
    #allocation6 [shape = 'u8[16384]{0}', space=vmem, size = 0x4000, scoped, tag = 'input window, operand 6, single buffered']
    %14 = vsyncpa [#allocation3], 0
    %15 = vsyncpa [#allocation5], 0
    // Predicated region
    $region2: #{tpu_custom_call.1} parent=1 // pred_check
      _
    $region3: #{tpu_custom_call.1} parent=1 // pred_check_branch
      %17 = sbr.rel (0) target = $region5
    $region4: #{tpu_custom_call.1} parent=1 // pred_region
      _
    $region5: #{tpu_custom_call.1} parent=1 // pred_fallthru
      _
    // Predicated region
    $region6: #{tpu_custom_call.1} parent=1 // pred_check
      _
    $region7: #{tpu_custom_call.1} parent=1 // pred_check_branch
      %19 = sbr.rel (0) target = $region9
    $region8: #{tpu_custom_call.1} parent=1 // pred_region
      _
    $region9: #{tpu_custom_call.1} parent=1 // pred_fallthru
      _
    // Predicated region
    $region10: #{tpu_custom_call.1} parent=1 // pred_check
      _
    $region11: #{tpu_custom_call.1} parent=1 // pred_check_branch
      %21 = sbr.rel (0) target = $region13
    $region12: #{tpu_custom_call.1} parent=1 // pred_region
      _
    $region13: #{tpu_custom_call.1} parent=1 // pred_fallthru
      _
    // Predicated region
    $region14: #{tpu_custom_call.1} parent=1 // pred_check
      _
    $region15: #{tpu_custom_call.1} parent=1 // pred_check_branch
      %23 = sbr.rel (0) target = $region17
    $region16: #{tpu_custom_call.1} parent=1 // pred_region
      _
    $region17: #{tpu_custom_call.1} parent=1 // pred_fallthru
      _
    // Predicated region
    $region18: #{tpu_custom_call.1} parent=1 // pred_check
      _
    $region19: #{tpu_custom_call.1} parent=1 // pred_check_branch
      %25 = sbr.rel (0) target = $region21
    $region20: #{tpu_custom_call.1} parent=1 // pred_region
      %s27 = ssub.s32 512, 512
      %28 = vsyncadd [#allocation3], %s27
      %s29 = sshll.u32 [#allocation2], 4
      %s30 = int_to_ptr.vmem [resolvable:$true] %s29
      %35 = dma.hbm_to_vmem [thread:$0]  %s4, 512, %s30, [#allocation3], 128, 128, 8
    $region21: #{tpu_custom_call.1} parent=1 // pred_fallthru
      _
    // Predicated region
    $region22: #{tpu_custom_call.1} parent=1 // pred_check
      _
    $region23: #{tpu_custom_call.1} parent=1 // pred_check_branch
      %37 = sbr.rel (0) target = $region25
    $region24: #{tpu_custom_call.1} parent=1 // pred_region
      %s39 = ssub.s32 512, 512
      %40 = vsyncadd [#allocation5], %s39
      %s41 = sshll.u32 [#allocation4], 4
      %s42 = int_to_ptr.vmem [resolvable:$true] %s41
      %47 = dma.hbm_to_vmem [thread:$0]  %s5, 512, %s42, [#allocation5], 128, 128, 8
    $region25: #{tpu_custom_call.1} parent=1 // pred_fallthru
      _
    // Predicated region
    $region26: #{tpu_custom_call.1} parent=1 // pred_check
      _
    $region27: #{tpu_custom_call.1} parent=1 // pred_check_branch
      %49 = sbr.rel (0) target = $region29
    $region28: #{tpu_custom_call.1} parent=1 // pred_region
      %s51 = ssub.s32 512, 512
      %52 = vsyncadd [#allocation5], %s51
      %s53 = sshll.u32 [#allocation6], 4
      %s54 = int_to_ptr.vmem [resolvable:$true] %s53
      %59 = dma.hbm_to_vmem [thread:$0]  %s6, 512, %s54, [#allocation5], 128, 128, 8
    $region29: #{tpu_custom_call.1} parent=1 // pred_fallthru
      _
    // Predicated region
    $region30: #{tpu_custom_call.1} parent=1 // pred_check
      _
    $region31: #{tpu_custom_call.1} parent=1 // pred_check_branch
      %61 = sbr.rel (0) target = $region33
    $region32: #{tpu_custom_call.1} parent=1 // pred_region
      _
    $region33: #{tpu_custom_call.1} parent=1 // pred_fallthru
      _
    // Predicated region
    $region34: #{tpu_custom_call.1} parent=1 // pred_check
      _
    $region35: #{tpu_custom_call.1} parent=1 // pred_check_branch
      %63 = sbr.rel (0) target = $region37
    $region36: #{tpu_custom_call.1} parent=1 // pred_region
      _
    $region37: #{tpu_custom_call.1} parent=1 // pred_fallthru
      _
    // Predicated region
    $region38: #{tpu_custom_call.1} parent=1 // pred_check
      _
    $region39: #{tpu_custom_call.1} parent=1 // pred_check_branch
      %65 = sbr.rel (0) target = $region41
    $region40: #{tpu_custom_call.1} parent=1 // pred_region
      %66 = dma.done [#allocation3], 512
    $region41: #{tpu_custom_call.1} parent=1 // pred_fallthru
      _
    // Predicated region
    $region42: #{tpu_custom_call.1} parent=1 // pred_check
      _
    $region43: #{tpu_custom_call.1} parent=1 // pred_check_branch
      %68 = sbr.rel (0) target = $region45
    $region44: #{tpu_custom_call.1} parent=1 // pred_region
      %69 = dma.done [#allocation5], 512
    $region45: #{tpu_custom_call.1} parent=1 // pred_fallthru
      _
    // Predicated region
    $region46: #{tpu_custom_call.1} parent=1 // pred_check
      _
    $region47: #{tpu_custom_call.1} parent=1 // pred_check_branch
      %71 = sbr.rel (0) target = $region49
    $region48: #{tpu_custom_call.1} parent=1 // pred_region
      %72 = dma.done [#allocation5], 512
    $region49: #{tpu_custom_call.1} parent=1 // pred_fallthru
      _
    %v73 = vld [vmem:[%s0] sm:$0xff]
    %v74 = vld [vmem:[%s0 + $0x8] sm:$0xff]
    %v75 = vld [vmem:[%s0 + $0x10] sm:$0xff]
    %v76 = vld [vmem:[%s0 + $0x18] sm:$0xff]
    %v77 = vld [vmem:[%s0 + $0x20] sm:$0xff]
    %v78 = vld [vmem:[%s0 + $0x28] sm:$0xff]
    %v79 = vld [vmem:[%s0 + $0x30] sm:$0xff]
    %v80 = vld [vmem:[%s0 + $0x38] sm:$0xff]
    %v81 = vld [vmem:[%s0 + $0x40] sm:$0xff]
    %v82 = vld [vmem:[%s0 + $0x48] sm:$0xff]
    %v83 = vld [vmem:[%s0 + $0x50] sm:$0xff]
    %v84 = vld [vmem:[%s0 + $0x58] sm:$0xff]
    %v85 = vld [vmem:[%s0 + $0x60] sm:$0xff]
    %v86 = vld [vmem:[%s0 + $0x68] sm:$0xff]
    %v87 = vld [vmem:[%s0 + $0x70] sm:$0xff]
    %v88 = vld [vmem:[%s0 + $0x78] sm:$0xff]
    %v89 = vld [vmem:[%s0 + $0x80] sm:$0xff]
    %v90 = vld [vmem:[%s0 + $0x88] sm:$0xff]
    %v91 = vld [vmem:[%s0 + $0x90] sm:$0xff]
    %v92 = vld [vmem:[%s0 + $0x98] sm:$0xff]
    %v93 = vld [vmem:[%s8] sm:$0xff]
    %v94 = vld [vmem:[%s8 + $0x8] sm:$0x3]
    %vm95 = vcmask 261120
    %v96 = vsel %vm95, %v73, 0.0
    %97 = vadd.xlane.f32.xlu0 %v96
    %v98 = vpop.xlane.xlu0 %97
    %v99 = vsel %vm95, %v74, 0.0
    %100 = vadd.xlane.f32.xlu0 %v99
    %v101 = vpop.xlane.xlu0 %100
    %v102 = vsel %vm95, %v75, 0.0
    %103 = vadd.xlane.f32.xlu0 %v102
    %v104 = vpop.xlane.xlu0 %103
    %v105 = vsel %vm95, %v76, 0.0
    %106 = vadd.xlane.f32.xlu0 %v105
    %v107 = vpop.xlane.xlu0 %106
    %v108 = vsel %vm95, %v77, 0.0
    %109 = vadd.xlane.f32.xlu0 %v108
    %v110 = vpop.xlane.xlu0 %109
    %v111 = vsel %vm95, %v78, 0.0
    %112 = vadd.xlane.f32.xlu0 %v111
    %v113 = vpop.xlane.xlu0 %112
    %v114 = vsel %vm95, %v79, 0.0
    %115 = vadd.xlane.f32.xlu0 %v114
    %v116 = vpop.xlane.xlu0 %115
    %v117 = vsel %vm95, %v80, 0.0
    %118 = vadd.xlane.f32.xlu0 %v117
    %v119 = vpop.xlane.xlu0 %118
    %v120 = vsel %vm95, %v81, 0.0
    %121 = vadd.xlane.f32.xlu0 %v120
    %v122 = vpop.xlane.xlu0 %121
    %v123 = vsel %vm95, %v82, 0.0
    %124 = vadd.xlane.f32.xlu0 %v123
    %v125 = vpop.xlane.xlu0 %124
    %v126 = vsel %vm95, %v83, 0.0
    %127 = vadd.xlane.f32.xlu0 %v126
    %v128 = vpop.xlane.xlu0 %127
    %v129 = vsel %vm95, %v84, 0.0
    %130 = vadd.xlane.f32.xlu0 %v129
    %v131 = vpop.xlane.xlu0 %130
    %v132 = vsel %vm95, %v85, 0.0
    %133 = vadd.xlane.f32.xlu0 %v132
    %v134 = vpop.xlane.xlu0 %133
    %v135 = vsel %vm95, %v86, 0.0
    %136 = vadd.xlane.f32.xlu0 %v135
    %v137 = vpop.xlane.xlu0 %136
    %v138 = vsel %vm95, %v87, 0.0
    %139 = vadd.xlane.f32.xlu0 %v138
    %v140 = vpop.xlane.xlu0 %139
    %v141 = vsel %vm95, %v88, 0.0
    %142 = vadd.xlane.f32.xlu0 %v141
    %v143 = vpop.xlane.xlu0 %142
    %v144 = vsel %vm95, %v89, 0.0
    %145 = vadd.xlane.f32.xlu0 %v144
    %v146 = vpop.xlane.xlu0 %145
    %v147 = vsel %vm95, %v90, 0.0
    %148 = vadd.xlane.f32.xlu0 %v147
    %v149 = vpop.xlane.xlu0 %148
    %v150 = vsel %vm95, %v91, 0.0
    %151 = vadd.xlane.f32.xlu0 %v150
    %v152 = vpop.xlane.xlu0 %151
    %v153 = vsel %vm95, %v92, 0.0
    %154 = vadd.xlane.f32.xlu0 %v153
    %v155 = vpop.xlane.xlu0 %154
    %v156 = vrcp.pop 32.0
    %v157 = vmul.f32 %v98, %v156
    %v158 = vmul.f32 %v101, %v156
    %v159 = vmul.f32 %v104, %v156
    %v160 = vmul.f32 %v107, %v156
    %v161 = vmul.f32 %v110, %v156
    %v162 = vmul.f32 %v113, %v156
    %v163 = vmul.f32 %v116, %v156
    %v164 = vmul.f32 %v119, %v156
    %v165 = vmul.f32 %v122, %v156
    %v166 = vmul.f32 %v125, %v156
    %v167 = vmul.f32 %v128, %v156
    %v168 = vmul.f32 %v131, %v156
    %v169 = vmul.f32 %v134, %v156
    %v170 = vmul.f32 %v137, %v156
    %v171 = vmul.f32 %v140, %v156
    %v172 = vmul.f32 %v143, %v156
    %v173 = vmul.f32 %v146, %v156
    %v174 = vmul.f32 %v149, %v156
    %v175 = vmul.f32 %v152, %v156
    %v176 = vmul.f32 %v155, %v156
    %v177 = vsub.f32 %v73, %v157
    %v178 = vsub.f32 %v74, %v158
    %v179 = vsub.f32 %v75, %v159
    %v180 = vsub.f32 %v76, %v160
    %v181 = vsub.f32 %v77, %v161
    %v182 = vsub.f32 %v78, %v162
    %v183 = vsub.f32 %v79, %v163
    %v184 = vsub.f32 %v80, %v164
    %v185 = vsub.f32 %v81, %v165
    %v186 = vsub.f32 %v82, %v166
    %v187 = vsub.f32 %v83, %v167
    %v188 = vsub.f32 %v84, %v168
    %v189 = vsub.f32 %v85, %v169
    %v190 = vsub.f32 %v86, %v170
    %v191 = vsub.f32 %v87, %v171
    %v192 = vsub.f32 %v88, %v172
    %v193 = vsub.f32 %v89, %v173
    %v194 = vsub.f32 %v90, %v174
    %v195 = vsub.f32 %v91, %v175
    %v196 = vsub.f32 %v92, %v176
    %v197 = vmul.f32 %v177, %v177
    %v198 = vmul.f32 %v178, %v178
    %v199 = vmul.f32 %v179, %v179
    %v200 = vmul.f32 %v180, %v180
    %v201 = vmul.f32 %v181, %v181
    %v202 = vmul.f32 %v182, %v182
    %v203 = vmul.f32 %v183, %v183
    %v204 = vmul.f32 %v184, %v184
    %v205 = vmul.f32 %v185, %v185
    %v206 = vmul.f32 %v186, %v186
    %v207 = vmul.f32 %v187, %v187
    %v208 = vmul.f32 %v188, %v188
    %v209 = vmul.f32 %v189, %v189
    %v210 = vmul.f32 %v190, %v190
    %v211 = vmul.f32 %v191, %v191
    %v212 = vmul.f32 %v192, %v192
    %v213 = vmul.f32 %v193, %v193
    %v214 = vmul.f32 %v194, %v194
    %v215 = vmul.f32 %v195, %v195
    %v216 = vmul.f32 %v196, %v196
    %v217 = vsel %vm95, %v197, 0.0
    %218 = vadd.xlane.f32.xlu0 %v217
    %v219 = vpop.xlane.xlu0 %218
    %v220 = vsel %vm95, %v198, 0.0
    %221 = vadd.xlane.f32.xlu0 %v220
    %v222 = vpop.xlane.xlu0 %221
    %v223 = vsel %vm95, %v199, 0.0
    %224 = vadd.xlane.f32.xlu0 %v223
    %v225 = vpop.xlane.xlu0 %224
    %v226 = vsel %vm95, %v200, 0.0
    %227 = vadd.xlane.f32.xlu0 %v226
    %v228 = vpop.xlane.xlu0 %227
    %v229 = vsel %vm95, %v201, 0.0
    %230 = vadd.xlane.f32.xlu0 %v229
    %v231 = vpop.xlane.xlu0 %230
    %v232 = vsel %vm95, %v202, 0.0
    %233 = vadd.xlane.f32.xlu0 %v232
    %v234 = vpop.xlane.xlu0 %233
    %v235 = vsel %vm95, %v203, 0.0
    %236 = vadd.xlane.f32.xlu0 %v235
    %v237 = vpop.xlane.xlu0 %236
    %v238 = vsel %vm95, %v204, 0.0
    %239 = vadd.xlane.f32.xlu0 %v238
    %v240 = vpop.xlane.xlu0 %239
    %v241 = vsel %vm95, %v205, 0.0
    %242 = vadd.xlane.f32.xlu0 %v241
    %v243 = vpop.xlane.xlu0 %242
    %v244 = vsel %vm95, %v206, 0.0
    %245 = vadd.xlane.f32.xlu0 %v244
    %v246 = vpop.xlane.xlu0 %245
    %v247 = vsel %vm95, %v207, 0.0
    %248 = vadd.xlane.f32.xlu0 %v247
    %v249 = vpop.xlane.xlu0 %248
    %v250 = vsel %vm95, %v208, 0.0
    %251 = vadd.xlane.f32.xlu0 %v250
    %v252 = vpop.xlane.xlu0 %251
    %v253 = vsel %vm95, %v209, 0.0
    %254 = vadd.xlane.f32.xlu0 %v253
    %v255 = vpop.xlane.xlu0 %254
    %v256 = vsel %vm95, %v210, 0.0
    %257 = vadd.xlane.f32.xlu0 %v256
    %v258 = vpop.xlane.xlu0 %257
    %v259 = vsel %vm95, %v211, 0.0
    %260 = vadd.xlane.f32.xlu0 %v259
    %v261 = vpop.xlane.xlu0 %260
    %v262 = vsel %vm95, %v212, 0.0
    %263 = vadd.xlane.f32.xlu0 %v262
    %v264 = vpop.xlane.xlu0 %263
    %v265 = vsel %vm95, %v213, 0.0
    %266 = vadd.xlane.f32.xlu0 %v265
    %v267 = vpop.xlane.xlu0 %266
    %v268 = vsel %vm95, %v214, 0.0
    %269 = vadd.xlane.f32.xlu0 %v268
    %v270 = vpop.xlane.xlu0 %269
    %v271 = vsel %vm95, %v215, 0.0
    %272 = vadd.xlane.f32.xlu0 %v271
    %v273 = vpop.xlane.xlu0 %272
    %v274 = vsel %vm95, %v216, 0.0
    %275 = vadd.xlane.f32.xlu0 %v274
    %v276 = vpop.xlane.xlu0 %275
    %v277 = vmul.f32 %v219, %v156
    %v278 = vmul.f32 %v222, %v156
    %v279 = vmul.f32 %v225, %v156
    %v280 = vmul.f32 %v228, %v156
    %v281 = vmul.f32 %v231, %v156
    %v282 = vmul.f32 %v234, %v156
    %v283 = vmul.f32 %v237, %v156
    %v284 = vmul.f32 %v240, %v156
    %v285 = vmul.f32 %v243, %v156
    %v286 = vmul.f32 %v246, %v156
    %v287 = vmul.f32 %v249, %v156
    %v288 = vmul.f32 %v252, %v156
    %v289 = vmul.f32 %v255, %v156
    %v290 = vmul.f32 %v258, %v156
    %v291 = vmul.f32 %v261, %v156
    %v292 = vmul.f32 %v264, %v156
    %v293 = vmul.f32 %v267, %v156
    %v294 = vmul.f32 %v270, %v156
    %v295 = vmul.f32 %v273, %v156
    %v296 = vmul.f32 %v276, %v156
    %v297 = vadd.f32 %v277, 1e-05
    %v298 = vadd.f32 %v278, 1e-05
    %v299 = vadd.f32 %v279, 1e-05
    %v300 = vadd.f32 %v280, 1e-05
    %v301 = vadd.f32 %v281, 1e-05
    %v302 = vadd.f32 %v282, 1e-05
    %v303 = vadd.f32 %v283, 1e-05
    %v304 = vadd.f32 %v284, 1e-05
    %v305 = vadd.f32 %v285, 1e-05
    %v306 = vadd.f32 %v286, 1e-05
    %v307 = vadd.f32 %v287, 1e-05
    %v308 = vadd.f32 %v288, 1e-05
    %v309 = vadd.f32 %v289, 1e-05
    %v310 = vadd.f32 %v290, 1e-05
    %v311 = vadd.f32 %v291, 1e-05
    %v312 = vadd.f32 %v292, 1e-05
    %v313 = vadd.f32 %v293, 1e-05
    %v314 = vadd.f32 %v294, 1e-05
    %v315 = vadd.f32 %v295, 1e-05
    %v316 = vadd.f32 %v296, 1e-05
    %v317 = vrsqrt.pop %v297
    %v318 = vrsqrt.pop %v298
    %v319 = vrsqrt.pop %v299
    %v320 = vrsqrt.pop %v300
    %v321 = vrsqrt.pop %v301
    %v322 = vrsqrt.pop %v302
    %v323 = vrsqrt.pop %v303
    %v324 = vrsqrt.pop %v304
    %v325 = vrsqrt.pop %v305
    %v326 = vrsqrt.pop %v306
    %v327 = vrsqrt.pop %v307
    %v328 = vrsqrt.pop %v308
    %v329 = vrsqrt.pop %v309
    %v330 = vrsqrt.pop %v310
    %v331 = vrsqrt.pop %v311
    %v332 = vrsqrt.pop %v312
    %v333 = vrsqrt.pop %v313
    %v334 = vrsqrt.pop %v314
    %v335 = vrsqrt.pop %v315
    %v336 = vrsqrt.pop %v316
    %v337 = vmul.f32 %v177, %v317
    %v338 = vmul.f32 %v178, %v318
    %v339 = vmul.f32 %v179, %v319
    %v340 = vmul.f32 %v180, %v320
    %v341 = vmul.f32 %v181, %v321
    %v342 = vmul.f32 %v182, %v322
    %v343 = vmul.f32 %v183, %v323
    %v344 = vmul.f32 %v184, %v324
    %v345 = vmul.f32 %v185, %v325
    %v346 = vmul.f32 %v186, %v326
    %v347 = vmul.f32 %v187, %v327
    %v348 = vmul.f32 %v188, %v328
    %v349 = vmul.f32 %v189, %v329
    %v350 = vmul.f32 %v190, %v330
    %v351 = vmul.f32 %v191, %v331
    %v352 = vmul.f32 %v192, %v332
    %v353 = vmul.f32 %v193, %v333
    %v354 = vmul.f32 %v194, %v334
    %v355 = vmul.f32 %v195, %v335
    %v356 = vmul.f32 %v196, %v336
    %v357 = vlaneseq
    %v358 = vshrl.u32 %v357, 7
    %v359 = vsub.s32 0, %v358
    %v360 = vrot.slane %v93, %v359
    %v361 = vmul.f32 %v337, %v360
    %v362 = vmul.f32 %v338, %v360
    %v363 = vmul.f32 %v339, %v360
    %v364 = vmul.f32 %v340, %v360
    %v365 = vmul.f32 %v341, %v360
    %v366 = vmul.f32 %v342, %v360
    %v367 = vmul.f32 %v343, %v360
    %v368 = vmul.f32 %v344, %v360
    %v369 = vmul.f32 %v345, %v360
    %v370 = vmul.f32 %v346, %v360
    %v371 = vmul.f32 %v347, %v360
    %v372 = vmul.f32 %v348, %v360
    %v373 = vmul.f32 %v349, %v360
    %v374 = vmul.f32 %v350, %v360
    %v375 = vmul.f32 %v351, %v360
    %v376 = vmul.f32 %v352, %v360
    %v377 = vmul.f32 %v353, %v360
    %v378 = vmul.f32 %v354, %v360
    %v379 = vmul.f32 %v355, %v360
    %v380 = vmul.f32 %v356, %v360
    %v381 = vlaneseq
    %v382 = vshrl.u32 %v381, 7
    %v383 = vsub.s32 1, %v382
    %v384 = vrot.slane %v93, %v383
    %v385 = vadd.f32 %v361, %v384
    %v386 = vadd.f32 %v362, %v384
    %v387 = vadd.f32 %v363, %v384
    %v388 = vadd.f32 %v364, %v384
    %v389 = vadd.f32 %v365, %v384
    %v390 = vadd.f32 %v366, %v384
    %v391 = vadd.f32 %v367, %v384
    %v392 = vadd.f32 %v368, %v384
    %v393 = vadd.f32 %v369, %v384
    %v394 = vadd.f32 %v370, %v384
    %v395 = vadd.f32 %v371, %v384
    %v396 = vadd.f32 %v372, %v384
    %v397 = vadd.f32 %v373, %v384
    %v398 = vadd.f32 %v374, %v384
    %v399 = vadd.f32 %v375, %v384
    %v400 = vadd.f32 %v376, %v384
    %v401 = vadd.f32 %v377, %v384
    %v402 = vadd.f32 %v378, %v384
    %v403 = vadd.f32 %v379, %v384
    %v404 = vadd.f32 %v380, %v384
    %v405 = vld [vmem:[%s2] sm:$0xff]
    %v406 = vld [vmem:[%s2 + $0x8] sm:$0xff]
    %v407 = vld [vmem:[%s2 + $0x10] sm:$0xff]
    %v408 = vld [vmem:[%s2 + $0x18] sm:$0xff]
    %v410 = vsel %vm95, %v385, 0
    %v413 = vsel %vm95, %v386, 0
    %v416 = vsel %vm95, %v387, 0
    %v419 = vsel %vm95, %v388, 0
    %v422 = vsel %vm95, %v389, 0
    %v425 = vsel %vm95, %v390, 0
    %v428 = vsel %vm95, %v391, 0
    %v431 = vsel %vm95, %v392, 0
    %v434 = vsel %vm95, %v393, 0
    %v437 = vsel %vm95, %v394, 0
    %v440 = vsel %vm95, %v395, 0
    %v443 = vsel %vm95, %v396, 0
    %v446 = vsel %vm95, %v397, 0
    %v449 = vsel %vm95, %v398, 0
    %v452 = vsel %vm95, %v399, 0
    %v455 = vsel %vm95, %v400, 0
    %v458 = vsel %vm95, %v401, 0
    %v461 = vsel %vm95, %v402, 0
    %v464 = vsel %vm95, %v403, 0
    %v467 = vsel %vm95, %v404, 0
    %469 = vmatprep.subr.mxu0 0.0
    %470 = vmatpush1.msra.mxu0 %v405
    %471 = vmatprep.subr.mxu0 0.0
    %472 = vmatpush1.msra.mxu0 %v406
    %473 = vmatprep.subr.mxu0 0.0
    %474 = vmatpush1.msra.mxu0 %v407
    %475 = vmatprep.subr.mxu0 0.0
    %476 = vmatpush1.msra.mxu0 %v408
    %477 = vmatprep.subr.mxu0 0.0
    %478 = vmatpush1.msra.mxu0 0.0
    %479 = vmatprep.subr.mxu0 0.0
    %480 = vmatpush1.msra.mxu0 0.0
    %481 = vmatprep.subr.mxu0 0.0
    %482 = vmatpush1.msra.mxu0 0.0
    %483 = vmatprep.subr.mxu0 0.0
    %484 = vmatpush1.msra.mxu0 0.0
    %485 = vmatprep.subr.mxu0 0.0
    %486 = vmatpush1.msra.mxu0 0.0
    %487 = vmatprep.subr.mxu0 0.0
    %488 = vmatpush1.msra.mxu0 0.0
    %489 = vmatprep.subr.mxu0 0.0
    %490 = vmatpush1.msra.mxu0 0.0
    %491 = vmatprep.subr.mxu0 0.0
    %492 = vmatpush1.msra.mxu0 0.0
    %493 = vmatprep.subr.mxu0 0.0
    %494 = vmatpush1.msra.mxu0 0.0
    %495 = vmatprep.subr.mxu0 0.0
    %496 = vmatpush1.msra.mxu0 0.0
    %497 = vmatprep.subr.mxu0 0.0
    %498 = vmatpush1.msra.mxu0 0.0
    %499 = vmatprep.subr.mxu0 0.0
    %500 = vmatpush1.msra.mxu0 0.0
    %501 = vmatprep.subr.mxu0 0.0
    %502 = vmatpush1.msra.mxu0 0.0
    %503 = vmatprep.subr.mxu0 0.0
    %504 = vmatpush1.msra.mxu0 0.0
    %505 = vmatprep.subr.mxu0 0.0
    %506 = vmatpush1.msra.mxu0 0.0
    %507 = vmatprep.subr.mxu0 0.0
    %508 = vmatpush1.msra.mxu0 0.0
    %509 = vmatprep.subr.mxu0 0.0
    %510 = vmatpush1.msra.mxu0 0.0
    %511 = vmatprep.subr.mxu0 0.0
    %512 = vmatpush1.msra.mxu0 0.0
    %513 = vmatprep.subr.mxu0 0.0
    %514 = vmatpush1.msra.mxu0 0.0
    %515 = vmatprep.subr.mxu0 0.0
    %516 = vmatpush1.msra.mxu0 0.0
    %517 = vmatprep.subr.mxu0 0.0
    %518 = vmatpush1.msra.mxu0 0.0
    %519 = vmatprep.subr.mxu0 0.0
    %520 = vmatpush1.msra.mxu0 0.0
    %521 = vmatprep.subr.mxu0 0.0
    %522 = vmatpush1.msra.mxu0 0.0
    %523 = vmatprep.subr.mxu0 0.0
    %524 = vmatpush1.msra.mxu0 0.0
    %525 = vmatprep.subr.mxu0 0.0
    %526 = vmatpush1.msra.mxu0 0.0
    %527 = vmatprep.subr.mxu0 0.0
    %528 = vmatpush1.msra.mxu0 0.0
    %529 = vmatprep.subr.mxu0 0.0
    %530 = vmatpush1.msra.mxu0 0.0
    %531 = vmatprep.subr.mxu0 0.0
    %532 = vmatpush1.msra.mxu0 0.0
    %533 = vmatprep.mubr.f32.mxu0 0.0
    %534 = vmatmul.mubr.f32.gmra.mrb[0].mxu0 %v410
    %v535 = vpop.f32.mrb[0].mxu0
    %v536 = vadd.f32 0.0, %v535
    %v537 = vpop.f32.mrb[0].mxu0
    %538 = vmatprep.mubr.f32.mxu0 0.0
    %539 = vmatmul.mubr.f32.gmra.mrb[0].mxu0 %v413
    %v540 = vpop.f32.mrb[0].mxu0
    %v541 = vadd.f32 0.0, %v540
    %v542 = vpop.f32.mrb[0].mxu0
    %543 = vmatprep.mubr.f32.mxu0 0.0
    %544 = vmatmul.mubr.f32.gmra.mrb[0].mxu0 %v416
    %v545 = vpop.f32.mrb[0].mxu0
    %v546 = vadd.f32 0.0, %v545
    %v547 = vpop.f32.mrb[0].mxu0
    %548 = vmatprep.mubr.f32.mxu0 0.0
    %549 = vmatmul.mubr.f32.gmra.mrb[0].mxu0 %v419
    %v550 = vpop.f32.mrb[0].mxu0
    %v551 = vadd.f32 0.0, %v550
    %v552 = vpop.f32.mrb[0].mxu0
    %553 = vmatprep.mubr.f32.mxu0 0.0
    %554 = vmatmul.mubr.f32.gmra.mrb[0].mxu0 %v422
    %v555 = vpop.f32.mrb[0].mxu0
    %v556 = vadd.f32 0.0, %v555
    %v557 = vpop.f32.mrb[0].mxu0
    %558 = vmatprep.mubr.f32.mxu0 0.0
    %559 = vmatmul.mubr.f32.gmra.mrb[0].mxu0 %v425
    %v560 = vpop.f32.mrb[0].mxu0
    %v561 = vadd.f32 0.0, %v560
    %v562 = vpop.f32.mrb[0].mxu0
    %563 = vmatprep.mubr.f32.mxu0 0.0
    %564 = vmatmul.mubr.f32.gmra.mrb[0].mxu0 %v428
    %v565 = vpop.f32.mrb[0].mxu0
    %v566 = vadd.f32 0.0, %v565
    %v567 = vpop.f32.mrb[0].mxu0
    %568 = vmatprep.mubr.f32.mxu0 0.0
    %569 = vmatmul.mubr.f32.gmra.mrb[0].mxu0 %v431
    %v570 = vpop.f32.mrb[0].mxu0
    %v571 = vadd.f32 0.0, %v570
    %v572 = vpop.f32.mrb[0].mxu0
    %573 = vmatprep.mubr.f32.mxu0 0.0
    %574 = vmatmul.mubr.f32.gmra.mrb[0].mxu0 %v434
    %v575 = vpop.f32.mrb[0].mxu0
    %v576 = vadd.f32 0.0, %v575
    %v577 = vpop.f32.mrb[0].mxu0
    %578 = vmatprep.mubr.f32.mxu0 0.0
    %579 = vmatmul.mubr.f32.gmra.mrb[0].mxu0 %v437
    %v580 = vpop.f32.mrb[0].mxu0
    %v581 = vadd.f32 0.0, %v580
    %v582 = vpop.f32.mrb[0].mxu0
    %583 = vmatprep.mubr.f32.mxu0 0.0
    %584 = vmatmul.mubr.f32.gmra.mrb[0].mxu0 %v440
    %v585 = vpop.f32.mrb[0].mxu0
    %v586 = vadd.f32 0.0, %v585
    %v587 = vpop.f32.mrb[0].mxu0
    %588 = vmatprep.mubr.f32.mxu0 0.0
    %589 = vmatmul.mubr.f32.gmra.mrb[0].mxu0 %v443
    %v590 = vpop.f32.mrb[0].mxu0
    %v591 = vadd.f32 0.0, %v590
    %v592 = vpop.f32.mrb[0].mxu0
    %593 = vmatprep.mubr.f32.mxu0 0.0
    %594 = vmatmul.mubr.f32.gmra.mrb[0].mxu0 %v446
    %v595 = vpop.f32.mrb[0].mxu0
    %v596 = vadd.f32 0.0, %v595
    %v597 = vpop.f32.mrb[0].mxu0
    %598 = vmatprep.mubr.f32.mxu0 0.0
    %599 = vmatmul.mubr.f32.gmra.mrb[0].mxu0 %v449
    %v600 = vpop.f32.mrb[0].mxu0
    %v601 = vadd.f32 0.0, %v600
    %v602 = vpop.f32.mrb[0].mxu0
    %603 = vmatprep.mubr.f32.mxu0 0.0
    %604 = vmatmul.mubr.f32.gmra.mrb[0].mxu0 %v452
    %v605 = vpop.f32.mrb[0].mxu0
    %v606 = vadd.f32 0.0, %v605
    %v607 = vpop.f32.mrb[0].mxu0
    %608 = vmatprep.mubr.f32.mxu0 0.0
    %609 = vmatmul.mubr.f32.gmra.mrb[0].mxu0 %v455
    %v610 = vpop.f32.mrb[0].mxu0
    %v611 = vadd.f32 0.0, %v610
    %v612 = vpop.f32.mrb[0].mxu0
    %613 = vmatprep.mubr.f32.mxu0 0.0
    %614 = vmatmul.mubr.f32.gmra.mrb[0].mxu0 %v458
    %v615 = vpop.f32.mrb[0].mxu0
    %v616 = vadd.f32 0.0, %v615
    %v617 = vpop.f32.mrb[0].mxu0
    %618 = vmatprep.mubr.f32.mxu0 0.0
    %619 = vmatmul.mubr.f32.gmra.mrb[0].mxu0 %v461
    %v620 = vpop.f32.mrb[0].mxu0
    %v621 = vadd.f32 0.0, %v620
    %v622 = vpop.f32.mrb[0].mxu0
    %623 = vmatprep.mubr.f32.mxu0 0.0
    %624 = vmatmul.mubr.f32.gmra.mrb[0].mxu0 %v464
    %v625 = vpop.f32.mrb[0].mxu0
    %v626 = vadd.f32 0.0, %v625
    %v627 = vpop.f32.mrb[0].mxu0
    %628 = vmatprep.mubr.f32.mxu0 0.0
    %629 = vmatmul.mubr.f32.gmra.mrb[0].mxu0 %v467
    %v630 = vpop.f32.mrb[0].mxu0
    %v631 = vadd.f32 0.0, %v630
    %v632 = vpop.f32.mrb[0].mxu0
    %633 = vdwg.mxu0
    %v634 = vlaneseq
    %v635 = vshrl.u32 %v634, 7
    %v636 = vsub.s32 2, %v635
    %v637 = vrot.slane %v93, %v636
    %v638 = vadd.f32 %v637, 0.0
    %v639 = vld [vmem:[%s1] sm:$0xff]
    %v640 = vld [vmem:[%s1 + $0x8] sm:$0xff]
    %v641 = vld [vmem:[%s1 + $0x10] sm:$0xff]
    %v642 = vld [vmem:[%s1 + $0x18] sm:$0xff]
    %v643 = vld [vmem:[%s1 + $0x20] sm:$0xff]
    %v644 = vld [vmem:[%s1 + $0x28] sm:$0xff]
    %v645 = vld [vmem:[%s1 + $0x30] sm:$0xff]
    %v646 = vld [vmem:[%s1 + $0x38] sm:$0xff]
    %v647 = vld [vmem:[%s1 + $0x40] sm:$0xff]
    %v648 = vld [vmem:[%s1 + $0x48] sm:$0xff]
    %v650 = vsel %vm95, %v640, 0
    %v653 = vsel %vm95, %v642, 0
    %v656 = vsel %vm95, %v644, 0
    %v659 = vsel %vm95, %v646, 0
    %v662 = vsel %vm95, %v648, 0
    %664 = vmatprep.subr.mxu0 0.0
    %665 = vmatpush1.msra.mxu0 %v536
    %666 = vmatprep.subr.mxu0 0.0
    %667 = vmatpush1.msra.mxu0 %v541
    %668 = vmatprep.subr.mxu0 0.0
    %669 = vmatpush1.msra.mxu0 %v546
    %670 = vmatprep.subr.mxu0 0.0
    %671 = vmatpush1.msra.mxu0 %v551
    %672 = vmatprep.subr.mxu0 0.0
    %673 = vmatpush1.msra.mxu0 %v556
    %674 = vmatprep.subr.mxu0 0.0
    %675 = vmatpush1.msra.mxu0 %v561
    %676 = vmatprep.subr.mxu0 0.0
    %677 = vmatpush1.msra.mxu0 %v566
    %678 = vmatprep.subr.mxu0 0.0
    %679 = vmatpush1.msra.mxu0 %v571
    %680 = vmatprep.subr.mxu0 0.0
    %681 = vmatpush1.msra.mxu0 %v576
    %682 = vmatprep.subr.mxu0 0.0
    %683 = vmatpush1.msra.mxu0 %v581
    %684 = vmatprep.subr.mxu0 0.0
    %685 = vmatpush1.msra.mxu0 %v586
    %686 = vmatprep.subr.mxu0 0.0
    %687 = vmatpush1.msra.mxu0 %v591
    %688 = vmatprep.subr.mxu0 0.0
    %689 = vmatpush1.msra.mxu0 %v596
    %690 = vmatprep.subr.mxu0 0.0
    %691 = vmatpush1.msra.mxu0 %v601
    %692 = vmatprep.subr.mxu0 0.0
    %693 = vmatpush1.msra.mxu0 %v606
    %694 = vmatprep.subr.mxu0 0.0
    %695 = vmatpush1.msra.mxu0 %v611
    %696 = vmatprep.subr.mxu0 0.0
    %697 = vmatpush1.msra.mxu0 %v616
    %698 = vmatprep.subr.mxu0 0.0
    %699 = vmatpush1.msra.mxu0 %v621
    %700 = vmatprep.subr.mxu0 0.0
    %701 = vmatpush1.msra.mxu0 %v626
    %702 = vmatprep.subr.mxu0 0.0
    %703 = vmatpush1.msra.mxu0 %v631
    %704 = vmatprep.subr.mxu0 0.0
    %705 = vmatpush1.msra.mxu0 0.0
    %706 = vmatprep.subr.mxu0 0.0
    %707 = vmatpush1.msra.mxu0 0.0
    %708 = vmatprep.subr.mxu0 0.0
    %709 = vmatpush1.msra.mxu0 0.0
    %710 = vmatprep.subr.mxu0 0.0
    %711 = vmatpush1.msra.mxu0 0.0
    %712 = vmatprep.subr.mxu0 0.0
    %713 = vmatpush1.msra.mxu0 0.0
    %714 = vmatprep.subr.mxu0 0.0
    %715 = vmatpush1.msra.mxu0 0.0
    %716 = vmatprep.subr.mxu0 0.0
    %717 = vmatpush1.msra.mxu0 0.0
    %718 = vmatprep.subr.mxu0 0.0
    %719 = vmatpush1.msra.mxu0 0.0
    %720 = vmatprep.subr.mxu0 0.0
    %721 = vmatpush1.msra.mxu0 0.0
    %722 = vmatprep.subr.mxu0 0.0
    %723 = vmatpush1.msra.mxu0 0.0
    %724 = vmatprep.subr.mxu0 0.0
    %725 = vmatpush1.msra.mxu0 0.0
    %726 = vmatprep.subr.mxu0 0.0
    %727 = vmatpush1.msra.mxu0 0.0
    %728 = vmatprep.mubr.f32.mxu0 %v650
    %729 = vmatmul.mubr.f32.gmra.mrb[0].mxu0 %v639
    %v730 = vpop.f32.mrb[0].mxu0
    %v731 = vadd.f32 0.0, %v730
    %v732 = vpop.f32.mrb[0].mxu0
    %733 = vmatprep.mubr.f32.mxu0 %v653
    %734 = vmatmul.mubr.f32.gmra.mrb[0].mxu0 %v641
    %v735 = vpop.f32.mrb[0].mxu0
    %v736 = vadd.f32 0.0, %v735
    %v737 = vpop.f32.mrb[0].mxu0
    %738 = vmatprep.mubr.f32.mxu0 %v656
    %739 = vmatmul.mubr.f32.gmra.mrb[0].mxu0 %v643
    %v740 = vpop.f32.mrb[0].mxu0
    %v741 = vadd.f32 0.0, %v740
    %v742 = vpop.f32.mrb[0].mxu0
    %743 = vmatprep.mubr.f32.mxu0 %v659
    %744 = vmatmul.mubr.f32.gmra.mrb[0].mxu0 %v645
    %v745 = vpop.f32.mrb[0].mxu0
    %v746 = vadd.f32 0.0, %v745
    %v747 = vpop.f32.mrb[0].mxu0
    %748 = vmatprep.mubr.f32.mxu0 %v662
    %749 = vmatmul.mubr.f32.gmra.mrb[0].mxu0 %v647
    %v750 = vpop.f32.mrb[0].mxu0
    %v751 = vadd.f32 0.0, %v750
    %v752 = vpop.f32.mrb[0].mxu0
    %753 = vdwg.mxu0
    %v754 = vadd.f32 %v638, %v731
    %v755 = vadd.f32 %v638, %v736
    %v756 = vadd.f32 %v638, %v741
    %v757 = vadd.f32 %v638, %v746
    %v758 = vadd.f32 %v638, %v751
    %s759 = scalar_lea.vmem %s1, 80
    %v760 = vld [vmem:[%s759] sm:$0xff]
    %v761 = vld [vmem:[%s759 + $0x8] sm:$0xff]
    %v762 = vld [vmem:[%s759 + $0x10] sm:$0xff]
    %v763 = vld [vmem:[%s759 + $0x18] sm:$0xff]
    %v764 = vld [vmem:[%s759 + $0x20] sm:$0xff]
    %v765 = vld [vmem:[%s759 + $0x28] sm:$0xff]
    %v766 = vld [vmem:[%s759 + $0x30] sm:$0xff]
    %v767 = vld [vmem:[%s759 + $0x38] sm:$0xff]
    %v768 = vld [vmem:[%s759 + $0x40] sm:$0xff]
    %v769 = vld [vmem:[%s759 + $0x48] sm:$0xff]
    %790 = vrot.lane.b32.xlu0 %v536, 96
    %v791 = vpop.permute.xlu0 %790
    %792 = vrot.lane.b32.xlu0 %v541, 96
    %v793 = vpop.permute.xlu0 %792
    %794 = vrot.lane.b32.xlu0 %v546, 96
    %v795 = vpop.permute.xlu0 %794
    %796 = vrot.lane.b32.xlu0 %v551, 96
    %v797 = vpop.permute.xlu0 %796
    %798 = vrot.lane.b32.xlu0 %v556, 96
    %v799 = vpop.permute.xlu0 %798
    %800 = vrot.lane.b32.xlu0 %v561, 96
    %v801 = vpop.permute.xlu0 %800
    %802 = vrot.lane.b32.xlu0 %v566, 96
    %v803 = vpop.permute.xlu0 %802
    %804 = vrot.lane.b32.xlu0 %v571, 96
    %v805 = vpop.permute.xlu0 %804
    %806 = vrot.lane.b32.xlu0 %v576, 96
    %v807 = vpop.permute.xlu0 %806
    %808 = vrot.lane.b32.xlu0 %v581, 96
    %v809 = vpop.permute.xlu0 %808
    %810 = vrot.lane.b32.xlu0 %v586, 96
    %v811 = vpop.permute.xlu0 %810
    %812 = vrot.lane.b32.xlu0 %v591, 96
    %v813 = vpop.permute.xlu0 %812
    %814 = vrot.lane.b32.xlu0 %v596, 96
    %v815 = vpop.permute.xlu0 %814
    %816 = vrot.lane.b32.xlu0 %v601, 96
    %v817 = vpop.permute.xlu0 %816
    %818 = vrot.lane.b32.xlu0 %v606, 96
    %v819 = vpop.permute.xlu0 %818
    %820 = vrot.lane.b32.xlu0 %v611, 96
    %v821 = vpop.permute.xlu0 %820
    %822 = vrot.lane.b32.xlu0 %v616, 96
    %v823 = vpop.permute.xlu0 %822
    %824 = vrot.lane.b32.xlu0 %v621, 96
    %v825 = vpop.permute.xlu0 %824
    %826 = vrot.lane.b32.xlu0 %v626, 96
    %v827 = vpop.permute.xlu0 %826
    %828 = vrot.lane.b32.xlu0 %v631, 96
    %v829 = vpop.permute.xlu0 %828
    %v851 = vsel %vm95, %v761, 0
    %v854 = vsel %vm95, %v763, 0
    %v857 = vsel %vm95, %v765, 0
    %v860 = vsel %vm95, %v767, 0
    %v863 = vsel %vm95, %v769, 0
    %865 = vmatprep.subr.mxu0 0.0
    %866 = vmatpush1.msra.mxu0 %v791
    %867 = vmatprep.subr.mxu0 0.0
    %868 = vmatpush1.msra.mxu0 %v793
    %869 = vmatprep.subr.mxu0 0.0
    %870 = vmatpush1.msra.mxu0 %v795
    %871 = vmatprep.subr.mxu0 0.0
    %872 = vmatpush1.msra.mxu0 %v797
    %873 = vmatprep.subr.mxu0 0.0
    %874 = vmatpush1.msra.mxu0 %v799
    %875 = vmatprep.subr.mxu0 0.0
    %876 = vmatpush1.msra.mxu0 %v801
    %877 = vmatprep.subr.mxu0 0.0
    %878 = vmatpush1.msra.mxu0 %v803
    %879 = vmatprep.subr.mxu0 0.0
    %880 = vmatpush1.msra.mxu0 %v805
    %881 = vmatprep.subr.mxu0 0.0
    %882 = vmatpush1.msra.mxu0 %v807
    %883 = vmatprep.subr.mxu0 0.0
    %884 = vmatpush1.msra.mxu0 %v809
    %885 = vmatprep.subr.mxu0 0.0
    %886 = vmatpush1.msra.mxu0 %v811
    %887 = vmatprep.subr.mxu0 0.0
    %888 = vmatpush1.msra.mxu0 %v813
    %889 = vmatprep.subr.mxu0 0.0
    %890 = vmatpush1.msra.mxu0 %v815
    %891 = vmatprep.subr.mxu0 0.0
    %892 = vmatpush1.msra.mxu0 %v817
    %893 = vmatprep.subr.mxu0 0.0
    %894 = vmatpush1.msra.mxu0 %v819
    %895 = vmatprep.subr.mxu0 0.0
    %896 = vmatpush1.msra.mxu0 %v821
    %897 = vmatprep.subr.mxu0 0.0
    %898 = vmatpush1.msra.mxu0 %v823
    %899 = vmatprep.subr.mxu0 0.0
    %900 = vmatpush1.msra.mxu0 %v825
    %901 = vmatprep.subr.mxu0 0.0
    %902 = vmatpush1.msra.mxu0 %v827
    %903 = vmatprep.subr.mxu0 0.0
    %904 = vmatpush1.msra.mxu0 %v829
    %905 = vmatprep.subr.mxu0 0.0
    %906 = vmatpush1.msra.mxu0 0.0
    %907 = vmatprep.subr.mxu0 0.0
    %908 = vmatpush1.msra.mxu0 0.0
    %909 = vmatprep.subr.mxu0 0.0
    %910 = vmatpush1.msra.mxu0 0.0
    %911 = vmatprep.subr.mxu0 0.0
    %912 = vmatpush1.msra.mxu0 0.0
    %913 = vmatprep.subr.mxu0 0.0
    %914 = vmatpush1.msra.mxu0 0.0
    %915 = vmatprep.subr.mxu0 0.0
    %916 = vmatpush1.msra.mxu0 0.0
    %917 = vmatprep.subr.mxu0 0.0
    %918 = vmatpush1.msra.mxu0 0.0
    %919 = vmatprep.subr.mxu0 0.0
    %920 = vmatpush1.msra.mxu0 0.0
    %921 = vmatprep.subr.mxu0 0.0
    %922 = vmatpush1.msra.mxu0 0.0
    %923 = vmatprep.subr.mxu0 0.0
    %924 = vmatpush1.msra.mxu0 0.0
    %925 = vmatprep.subr.mxu0 0.0
    %926 = vmatpush1.msra.mxu0 0.0
    %927 = vmatprep.subr.mxu0 0.0
    %928 = vmatpush1.msra.mxu0 0.0
    %929 = vmatprep.mubr.f32.mxu0 %v851
    %930 = vmatmul.mubr.f32.gmra.mrb[0].mxu0 %v760
    %v931 = vpop.f32.mrb[0].mxu0
    %v932 = vadd.f32 0.0, %v931
    %v933 = vpop.f32.mrb[0].mxu0
    %934 = vmatprep.mubr.f32.mxu0 %v854
    %935 = vmatmul.mubr.f32.gmra.mrb[0].mxu0 %v762
    %v936 = vpop.f32.mrb[0].mxu0
    %v937 = vadd.f32 0.0, %v936
    %v938 = vpop.f32.mrb[0].mxu0
    %939 = vmatprep.mubr.f32.mxu0 %v857
    %940 = vmatmul.mubr.f32.gmra.mrb[0].mxu0 %v764
    %v941 = vpop.f32.mrb[0].mxu0
    %v942 = vadd.f32 0.0, %v941
    %v943 = vpop.f32.mrb[0].mxu0
    %944 = vmatprep.mubr.f32.mxu0 %v860
    %945 = vmatmul.mubr.f32.gmra.mrb[0].mxu0 %v766
    %v946 = vpop.f32.mrb[0].mxu0
    %v947 = vadd.f32 0.0, %v946
    %v948 = vpop.f32.mrb[0].mxu0
    %949 = vmatprep.mubr.f32.mxu0 %v863
    %950 = vmatmul.mubr.f32.gmra.mrb[0].mxu0 %v768
    %v951 = vpop.f32.mrb[0].mxu0
    %v952 = vadd.f32 0.0, %v951
    %v953 = vpop.f32.mrb[0].mxu0
    %954 = vdwg.mxu0
    %v955 = vadd.f32 %v754, %v932
    %v956 = vadd.f32 %v755, %v937
    %v957 = vadd.f32 %v756, %v942
    %v958 = vadd.f32 %v757, %v947
    %v959 = vadd.f32 %v758, %v952
    %s960 = scalar_lea.vmem %s1, 160
    %v961 = vld [vmem:[%s960] sm:$0xff]
    %v962 = vld [vmem:[%s960 + $0x8] sm:$0xff]
    %v963 = vld [vmem:[%s960 + $0x10] sm:$0xff]
    %v964 = vld [vmem:[%s960 + $0x18] sm:$0xff]
    %v965 = vld [vmem:[%s960 + $0x20] sm:$0xff]
    %v966 = vld [vmem:[%s960 + $0x28] sm:$0xff]
    %v967 = vld [vmem:[%s960 + $0x30] sm:$0xff]
    %v968 = vld [vmem:[%s960 + $0x38] sm:$0xff]
    %v969 = vld [vmem:[%s960 + $0x40] sm:$0xff]
    %v970 = vld [vmem:[%s960 + $0x48] sm:$0xff]
    %971 = vrot.lane.b32.xlu0 %v536, 64
    %v972 = vpop.permute.xlu0 %971
    %973 = vrot.lane.b32.xlu0 %v541, 64
    %v974 = vpop.permute.xlu0 %973
    %975 = vrot.lane.b32.xlu0 %v546, 64
    %v976 = vpop.permute.xlu0 %975
    %977 = vrot.lane.b32.xlu0 %v551, 64
    %v978 = vpop.permute.xlu0 %977
    %979 = vrot.lane.b32.xlu0 %v556, 64
    %v980 = vpop.permute.xlu0 %979
    %981 = vrot.lane.b32.xlu0 %v561, 64
    %v982 = vpop.permute.xlu0 %981
    %983 = vrot.lane.b32.xlu0 %v566, 64
    %v984 = vpop.permute.xlu0 %983
    %985 = vrot.lane.b32.xlu0 %v571, 64
    %v986 = vpop.permute.xlu0 %985
    %987 = vrot.lane.b32.xlu0 %v576, 64
    %v988 = vpop.permute.xlu0 %987
    %989 = vrot.lane.b32.xlu0 %v581, 64
    %v990 = vpop.permute.xlu0 %989
    %991 = vrot.lane.b32.xlu0 %v586, 64
    %v992 = vpop.permute.xlu0 %991
    %993 = vrot.lane.b32.xlu0 %v591, 64
    %v994 = vpop.permute.xlu0 %993
    %995 = vrot.lane.b32.xlu0 %v596, 64
    %v996 = vpop.permute.xlu0 %995
    %997 = vrot.lane.b32.xlu0 %v601, 64
    %v998 = vpop.permute.xlu0 %997
    %999 = vrot.lane.b32.xlu0 %v606, 64
    %v1000 = vpop.permute.xlu0 %999
    %1001 = vrot.lane.b32.xlu0 %v611, 64
    %v1002 = vpop.permute.xlu0 %1001
    %1003 = vrot.lane.b32.xlu0 %v616, 64
    %v1004 = vpop.permute.xlu0 %1003
    %1005 = vrot.lane.b32.xlu0 %v621, 64
    %v1006 = vpop.permute.xlu0 %1005
    %1007 = vrot.lane.b32.xlu0 %v626, 64
    %v1008 = vpop.permute.xlu0 %1007
    %1009 = vrot.lane.b32.xlu0 %v631, 64
    %v1010 = vpop.permute.xlu0 %1009
    %v1032 = vsel %vm95, %v962, 0
    %v1035 = vsel %vm95, %v964, 0
    %v1038 = vsel %vm95, %v966, 0
    %v1041 = vsel %vm95, %v968, 0
    %v1044 = vsel %vm95, %v970, 0
    %1046 = vmatprep.subr.mxu0 0.0
    %1047 = vmatpush1.msra.mxu0 %v972
    %1048 = vmatprep.subr.mxu0 0.0
    %1049 = vmatpush1.msra.mxu0 %v974
    %1050 = vmatprep.subr.mxu0 0.0
    %1051 = vmatpush1.msra.mxu0 %v976
    %1052 = vmatprep.subr.mxu0 0.0
    %1053 = vmatpush1.msra.mxu0 %v978
    %1054 = vmatprep.subr.mxu0 0.0
    %1055 = vmatpush1.msra.mxu0 %v980
    %1056 = vmatprep.subr.mxu0 0.0
    %1057 = vmatpush1.msra.mxu0 %v982
    %1058 = vmatprep.subr.mxu0 0.0
    %1059 = vmatpush1.msra.mxu0 %v984
    %1060 = vmatprep.subr.mxu0 0.0
    %1061 = vmatpush1.msra.mxu0 %v986
    %1062 = vmatprep.subr.mxu0 0.0
    %1063 = vmatpush1.msra.mxu0 %v988
    %1064 = vmatprep.subr.mxu0 0.0
    %1065 = vmatpush1.msra.mxu0 %v990
    %1066 = vmatprep.subr.mxu0 0.0
    %1067 = vmatpush1.msra.mxu0 %v992
    %1068 = vmatprep.subr.mxu0 0.0
    %1069 = vmatpush1.msra.mxu0 %v994
    %1070 = vmatprep.subr.mxu0 0.0
    %1071 = vmatpush1.msra.mxu0 %v996
    %1072 = vmatprep.subr.mxu0 0.0
    %1073 = vmatpush1.msra.mxu0 %v998
    %1074 = vmatprep.subr.mxu0 0.0
    %1075 = vmatpush1.msra.mxu0 %v1000
    %1076 = vmatprep.subr.mxu0 0.0
    %1077 = vmatpush1.msra.mxu0 %v1002
    %1078 = vmatprep.subr.mxu0 0.0
    %1079 = vmatpush1.msra.mxu0 %v1004
    %1080 = vmatprep.subr.mxu0 0.0
    %1081 = vmatpush1.msra.mxu0 %v1006
    %1082 = vmatprep.subr.mxu0 0.0
    %1083 = vmatpush1.msra.mxu0 %v1008
    %1084 = vmatprep.subr.mxu0 0.0
    %1085 = vmatpush1.msra.mxu0 %v1010
    %1086 = vmatprep.subr.mxu0 0.0
    %1087 = vmatpush1.msra.mxu0 0.0
    %1088 = vmatprep.subr.mxu0 0.0
    %1089 = vmatpush1.msra.mxu0 0.0
    %1090 = vmatprep.subr.mxu0 0.0
    %1091 = vmatpush1.msra.mxu0 0.0
    %1092 = vmatprep.subr.mxu0 0.0
    %1093 = vmatpush1.msra.mxu0 0.0
    %1094 = vmatprep.subr.mxu0 0.0
    %1095 = vmatpush1.msra.mxu0 0.0
    %1096 = vmatprep.subr.mxu0 0.0
    %1097 = vmatpush1.msra.mxu0 0.0
    %1098 = vmatprep.subr.mxu0 0.0
    %1099 = vmatpush1.msra.mxu0 0.0
    %1100 = vmatprep.subr.mxu0 0.0
    %1101 = vmatpush1.msra.mxu0 0.0
    %1102 = vmatprep.subr.mxu0 0.0
    %1103 = vmatpush1.msra.mxu0 0.0
    %1104 = vmatprep.subr.mxu0 0.0
    %1105 = vmatpush1.msra.mxu0 0.0
    %1106 = vmatprep.subr.mxu0 0.0
    %1107 = vmatpush1.msra.mxu0 0.0
    %1108 = vmatprep.subr.mxu0 0.0
    %1109 = vmatpush1.msra.mxu0 0.0
    %1110 = vmatprep.mubr.f32.mxu0 %v1032
    %1111 = vmatmul.mubr.f32.gmra.mrb[0].mxu0 %v961
    %v1112 = vpop.f32.mrb[0].mxu0
    %v1113 = vadd.f32 0.0, %v1112
    %v1114 = vpop.f32.mrb[0].mxu0
    %1115 = vmatprep.mubr.f32.mxu0 %v1035
    %1116 = vmatmul.mubr.f32.gmra.mrb[0].mxu0 %v963
    %v1117 = vpop.f32.mrb[0].mxu0
    %v1118 = vadd.f32 0.0, %v1117
    %v1119 = vpop.f32.mrb[0].mxu0
    %1120 = vmatprep.mubr.f32.mxu0 %v1038
    %1121 = vmatmul.mubr.f32.gmra.mrb[0].mxu0 %v965
    %v1122 = vpop.f32.mrb[0].mxu0
    %v1123 = vadd.f32 0.0, %v1122
    %v1124 = vpop.f32.mrb[0].mxu0
    %1125 = vmatprep.mubr.f32.mxu0 %v1041
    %1126 = vmatmul.mubr.f32.gmra.mrb[0].mxu0 %v967
    %v1127 = vpop.f32.mrb[0].mxu0
    %v1128 = vadd.f32 0.0, %v1127
    %v1129 = vpop.f32.mrb[0].mxu0
    %1130 = vmatprep.mubr.f32.mxu0 %v1044
    %1131 = vmatmul.mubr.f32.gmra.mrb[0].mxu0 %v969
    %v1132 = vpop.f32.mrb[0].mxu0
    %v1133 = vadd.f32 0.0, %v1132
    %v1134 = vpop.f32.mrb[0].mxu0
    %1135 = vdwg.mxu0
    %v1136 = vadd.f32 %v955, %v1113
    %v1137 = vadd.f32 %v956, %v1118
    %v1138 = vadd.f32 %v957, %v1123
    %v1139 = vadd.f32 %v958, %v1128
    %v1140 = vadd.f32 %v959, %v1133
    %s1141 = scalar_lea.vmem %s1, 240
    %v1142 = vld [vmem:[%s1141] sm:$0xff]
    %v1143 = vld [vmem:[%s1141 + $0x8] sm:$0xff]
    %v1144 = vld [vmem:[%s1141 + $0x10] sm:$0xff]
    %v1145 = vld [vmem:[%s1141 + $0x18] sm:$0xff]
    %v1146 = vld [vmem:[%s1141 + $0x20] sm:$0xff]
    %v1147 = vld [vmem:[%s1141 + $0x28] sm:$0xff]
    %v1148 = vld [vmem:[%s1141 + $0x30] sm:$0xff]
    %v1149 = vld [vmem:[%s1141 + $0x38] sm:$0xff]
    %v1150 = vld [vmem:[%s1141 + $0x40] sm:$0xff]
    %v1151 = vld [vmem:[%s1141 + $0x48] sm:$0xff]
    %1152 = vrot.lane.b32.xlu0 %v536, 32
    %v1153 = vpop.permute.xlu0 %1152
    %1154 = vrot.lane.b32.xlu0 %v541, 32
    %v1155 = vpop.permute.xlu0 %1154
    %1156 = vrot.lane.b32.xlu0 %v546, 32
    %v1157 = vpop.permute.xlu0 %1156
    %1158 = vrot.lane.b32.xlu0 %v551, 32
    %v1159 = vpop.permute.xlu0 %1158
    %1160 = vrot.lane.b32.xlu0 %v556, 32
    %v1161 = vpop.permute.xlu0 %1160
    %1162 = vrot.lane.b32.xlu0 %v561, 32
    %v1163 = vpop.permute.xlu0 %1162
    %1164 = vrot.lane.b32.xlu0 %v566, 32
    %v1165 = vpop.permute.xlu0 %1164
    %1166 = vrot.lane.b32.xlu0 %v571, 32
    %v1167 = vpop.permute.xlu0 %1166
    %1168 = vrot.lane.b32.xlu0 %v576, 32
    %v1169 = vpop.permute.xlu0 %1168
    %1170 = vrot.lane.b32.xlu0 %v581, 32
    %v1171 = vpop.permute.xlu0 %1170
    %1172 = vrot.lane.b32.xlu0 %v586, 32
    %v1173 = vpop.permute.xlu0 %1172
    %1174 = vrot.lane.b32.xlu0 %v591, 32
    %v1175 = vpop.permute.xlu0 %1174
    %1176 = vrot.lane.b32.xlu0 %v596, 32
    %v1177 = vpop.permute.xlu0 %1176
    %1178 = vrot.lane.b32.xlu0 %v601, 32
    %v1179 = vpop.permute.xlu0 %1178
    %1180 = vrot.lane.b32.xlu0 %v606, 32
    %v1181 = vpop.permute.xlu0 %1180
    %1182 = vrot.lane.b32.xlu0 %v611, 32
    %v1183 = vpop.permute.xlu0 %1182
    %1184 = vrot.lane.b32.xlu0 %v616, 32
    %v1185 = vpop.permute.xlu0 %1184
    %1186 = vrot.lane.b32.xlu0 %v621, 32
    %v1187 = vpop.permute.xlu0 %1186
    %1188 = vrot.lane.b32.xlu0 %v626, 32
    %v1189 = vpop.permute.xlu0 %1188
    %1190 = vrot.lane.b32.xlu0 %v631, 32
    %v1191 = vpop.permute.xlu0 %1190
    %v1213 = vsel %vm95, %v1143, 0
    %v1216 = vsel %vm95, %v1145, 0
    %v1219 = vsel %vm95, %v1147, 0
    %v1222 = vsel %vm95, %v1149, 0
    %v1225 = vsel %vm95, %v1151, 0
    %1227 = vmatprep.subr.mxu0 0.0
    %1228 = vmatpush1.msra.mxu0 %v1153
    %1229 = vmatprep.subr.mxu0 0.0
    %1230 = vmatpush1.msra.mxu0 %v1155
    %1231 = vmatprep.subr.mxu0 0.0
    %1232 = vmatpush1.msra.mxu0 %v1157
    %1233 = vmatprep.subr.mxu0 0.0
    %1234 = vmatpush1.msra.mxu0 %v1159
    %1235 = vmatprep.subr.mxu0 0.0
    %1236 = vmatpush1.msra.mxu0 %v1161
    %1237 = vmatprep.subr.mxu0 0.0
    %1238 = vmatpush1.msra.mxu0 %v1163
    %1239 = vmatprep.subr.mxu0 0.0
    %1240 = vmatpush1.msra.mxu0 %v1165
    %1241 = vmatprep.subr.mxu0 0.0
    %1242 = vmatpush1.msra.mxu0 %v1167
    %1243 = vmatprep.subr.mxu0 0.0
    %1244 = vmatpush1.msra.mxu0 %v1169
    %1245 = vmatprep.subr.mxu0 0.0
    %1246 = vmatpush1.msra.mxu0 %v1171
    %1247 = vmatprep.subr.mxu0 0.0
    %1248 = vmatpush1.msra.mxu0 %v1173
    %1249 = vmatprep.subr.mxu0 0.0
    %1250 = vmatpush1.msra.mxu0 %v1175
    %1251 = vmatprep.subr.mxu0 0.0
    %1252 = vmatpush1.msra.mxu0 %v1177
    %1253 = vmatprep.subr.mxu0 0.0
    %1254 = vmatpush1.msra.mxu0 %v1179
    %1255 = vmatprep.subr.mxu0 0.0
    %1256 = vmatpush1.msra.mxu0 %v1181
    %1257 = vmatprep.subr.mxu0 0.0
    %1258 = vmatpush1.msra.mxu0 %v1183
    %1259 = vmatprep.subr.mxu0 0.0
    %1260 = vmatpush1.msra.mxu0 %v1185
    %1261 = vmatprep.subr.mxu0 0.0
    %1262 = vmatpush1.msra.mxu0 %v1187
    %1263 = vmatprep.subr.mxu0 0.0
    %1264 = vmatpush1.msra.mxu0 %v1189
    %1265 = vmatprep.subr.mxu0 0.0
    %1266 = vmatpush1.msra.mxu0 %v1191
    %1267 = vmatprep.subr.mxu0 0.0
    %1268 = vmatpush1.msra.mxu0 0.0
    %1269 = vmatprep.subr.mxu0 0.0
    %1270 = vmatpush1.msra.mxu0 0.0
    %1271 = vmatprep.subr.mxu0 0.0
    %1272 = vmatpush1.msra.mxu0 0.0
    %1273 = vmatprep.subr.mxu0 0.0
    %1274 = vmatpush1.msra.mxu0 0.0
    %1275 = vmatprep.subr.mxu0 0.0
    %1276 = vmatpush1.msra.mxu0 0.0
    %1277 = vmatprep.subr.mxu0 0.0
    %1278 = vmatpush1.msra.mxu0 0.0
    %1279 = vmatprep.subr.mxu0 0.0
    %1280 = vmatpush1.msra.mxu0 0.0
    %1281 = vmatprep.subr.mxu0 0.0
    %1282 = vmatpush1.msra.mxu0 0.0
    %1283 = vmatprep.subr.mxu0 0.0
    %1284 = vmatpush1.msra.mxu0 0.0
    %1285 = vmatprep.subr.mxu0 0.0
    %1286 = vmatpush1.msra.mxu0 0.0
    %1287 = vmatprep.subr.mxu0 0.0
    %1288 = vmatpush1.msra.mxu0 0.0
    %1289 = vmatprep.subr.mxu0 0.0
    %1290 = vmatpush1.msra.mxu0 0.0
    %1291 = vmatprep.mubr.f32.mxu0 %v1213
    %1292 = vmatmul.mubr.f32.gmra.mrb[0].mxu0 %v1142
    %v1293 = vpop.f32.mrb[0].mxu0
    %v1294 = vadd.f32 0.0, %v1293
    %v1295 = vpop.f32.mrb[0].mxu0
    %1296 = vmatprep.mubr.f32.mxu0 %v1216
    %1297 = vmatmul.mubr.f32.gmra.mrb[0].mxu0 %v1144
    %v1298 = vpop.f32.mrb[0].mxu0
    %v1299 = vadd.f32 0.0, %v1298
    %v1300 = vpop.f32.mrb[0].mxu0
    %1301 = vmatprep.mubr.f32.mxu0 %v1219
    %1302 = vmatmul.mubr.f32.gmra.mrb[0].mxu0 %v1146
    %v1303 = vpop.f32.mrb[0].mxu0
    %v1304 = vadd.f32 0.0, %v1303
    %v1305 = vpop.f32.mrb[0].mxu0
    %1306 = vmatprep.mubr.f32.mxu0 %v1222
    %1307 = vmatmul.mubr.f32.gmra.mrb[0].mxu0 %v1148
    %v1308 = vpop.f32.mrb[0].mxu0
    %v1309 = vadd.f32 0.0, %v1308
    %v1310 = vpop.f32.mrb[0].mxu0
    %1311 = vmatprep.mubr.f32.mxu0 %v1225
    %1312 = vmatmul.mubr.f32.gmra.mrb[0].mxu0 %v1150
    %v1313 = vpop.f32.mrb[0].mxu0
    %v1314 = vadd.f32 0.0, %v1313
    %v1315 = vpop.f32.mrb[0].mxu0
    %1316 = vdwg.mxu0
    %v1317 = vadd.f32 %v1136, %v1294
    %v1318 = vadd.f32 %v1137, %v1299
    %v1319 = vadd.f32 %v1138, %v1304
    %v1320 = vadd.f32 %v1139, %v1309
    %v1321 = vadd.f32 %v1140, %v1314
    %v1322 = vsel %vm95, %v1317, 0.0
    %1323 = vadd.xlane.f32.xlu0 %v1322
    %v1324 = vpop.xlane.xlu0 %1323
    %v1325 = vsel %vm95, %v1318, 0.0
    %1326 = vadd.xlane.f32.xlu0 %v1325
    %v1327 = vpop.xlane.xlu0 %1326
    %v1328 = vsel %vm95, %v1319, 0.0
    %1329 = vadd.xlane.f32.xlu0 %v1328
    %v1330 = vpop.xlane.xlu0 %1329
    %v1331 = vsel %vm95, %v1320, 0.0
    %1332 = vadd.xlane.f32.xlu0 %v1331
    %v1333 = vpop.xlane.xlu0 %1332
    %v1334 = vsel %vm95, %v1321, 0.0
    %1335 = vadd.xlane.f32.xlu0 %v1334
    %v1336 = vpop.xlane.xlu0 %1335
    %v1337 = vmul.f32 %v1324, %v156
    %v1338 = vmul.f32 %v1327, %v156
    %v1339 = vmul.f32 %v1330, %v156
    %v1340 = vmul.f32 %v1333, %v156
    %v1341 = vmul.f32 %v1336, %v156
    %v1342 = vsub.f32 %v1317, %v1337
    %v1343 = vsub.f32 %v1318, %v1338
    %v1344 = vsub.f32 %v1319, %v1339
    %v1345 = vsub.f32 %v1320, %v1340
    %v1346 = vsub.f32 %v1321, %v1341
    %v1347 = vmul.f32 %v1342, %v1342
    %v1348 = vmul.f32 %v1343, %v1343
    %v1349 = vmul.f32 %v1344, %v1344
    %v1350 = vmul.f32 %v1345, %v1345
    %v1351 = vmul.f32 %v1346, %v1346
    %v1352 = vsel %vm95, %v1347, 0.0
    %1353 = vadd.xlane.f32.xlu0 %v1352
    %v1354 = vpop.xlane.xlu0 %1353
    %v1355 = vsel %vm95, %v1348, 0.0
    %1356 = vadd.xlane.f32.xlu0 %v1355
    %v1357 = vpop.xlane.xlu0 %1356
    %v1358 = vsel %vm95, %v1349, 0.0
    %1359 = vadd.xlane.f32.xlu0 %v1358
    %v1360 = vpop.xlane.xlu0 %1359
    %v1361 = vsel %vm95, %v1350, 0.0
    %1362 = vadd.xlane.f32.xlu0 %v1361
    %v1363 = vpop.xlane.xlu0 %1362
    %v1364 = vsel %vm95, %v1351, 0.0
    %1365 = vadd.xlane.f32.xlu0 %v1364
    %v1366 = vpop.xlane.xlu0 %1365
    %v1367 = vmul.f32 %v1354, %v156
    %v1368 = vmul.f32 %v1357, %v156
    %v1369 = vmul.f32 %v1360, %v156
    %v1370 = vmul.f32 %v1363, %v156
    %v1371 = vmul.f32 %v1366, %v156
    %v1372 = vadd.f32 %v1367, 1e-05
    %v1373 = vadd.f32 %v1368, 1e-05
    %v1374 = vadd.f32 %v1369, 1e-05
    %v1375 = vadd.f32 %v1370, 1e-05
    %v1376 = vadd.f32 %v1371, 1e-05
    %v1377 = vrsqrt.pop %v1372
    %v1378 = vrsqrt.pop %v1373
    %v1379 = vrsqrt.pop %v1374
    %v1380 = vrsqrt.pop %v1375
    %v1381 = vrsqrt.pop %v1376
    %v1382 = vmul.f32 %v1342, %v1377
    %v1383 = vmul.f32 %v1343, %v1378
    %v1384 = vmul.f32 %v1344, %v1379
    %v1385 = vmul.f32 %v1345, %v1380
    %v1386 = vmul.f32 %v1346, %v1381
    %v1387 = vlaneseq
    %v1388 = vshrl.u32 %v1387, 7
    %v1389 = vsub.s32 3, %v1388
    %v1390 = vrot.slane %v93, %v1389
    %v1391 = vmul.f32 %v1382, %v1390
    %v1392 = vmul.f32 %v1383, %v1390
    %v1393 = vmul.f32 %v1384, %v1390
    %v1394 = vmul.f32 %v1385, %v1390
    %v1395 = vmul.f32 %v1386, %v1390
    %v1396 = vlaneseq
    %v1397 = vshrl.u32 %v1396, 7
    %v1398 = vsub.s32 4, %v1397
    %v1399 = vrot.slane %v93, %v1398
    %v1400 = vadd.f32 %v1391, %v1399
    %v1401 = vadd.f32 %v1392, %v1399
    %v1402 = vadd.f32 %v1393, %v1399
    %v1403 = vadd.f32 %v1394, %v1399
    %v1404 = vadd.f32 %v1395, %v1399
    %v1405 = vld [vmem:[%s3] sm:$0xff]
    %v1406 = vld [vmem:[%s3 + $0x8] sm:$0xff]
    %v1407 = vld [vmem:[%s3 + $0x10] sm:$0xff]
    %v1408 = vld [vmem:[%s3 + $0x18] sm:$0xff]
    %1409 = vmatprep.subr.mxu0 0.0
    %1410 = vmatpush1.msra.mxu0 %v1405
    %1411 = vmatprep.subr.mxu0 0.0
    %1412 = vmatpush1.msra.mxu0 %v1406
    %1413 = vmatprep.subr.mxu0 0.0
    %1414 = vmatpush1.msra.mxu0 %v1407
    %1415 = vmatprep.subr.mxu0 0.0
    %1416 = vmatpush1.msra.mxu0 %v1408
    %1417 = vmatprep.subr.mxu0 0.0
    %1418 = vmatpush1.msra.mxu0 0.0
    %1419 = vmatprep.subr.mxu0 0.0
    %1420 = vmatpush1.msra.mxu0 0.0
    %1421 = vmatprep.subr.mxu0 0.0
    %1422 = vmatpush1.msra.mxu0 0.0
    %1423 = vmatprep.subr.mxu0 0.0
    %1424 = vmatpush1.msra.mxu0 0.0
    %1425 = vmatprep.subr.mxu0 0.0
    %1426 = vmatpush1.msra.mxu0 0.0
    %1427 = vmatprep.subr.mxu0 0.0
    %1428 = vmatpush1.msra.mxu0 0.0
    %1429 = vmatprep.subr.mxu0 0.0
    %1430 = vmatpush1.msra.mxu0 0.0
    %1431 = vmatprep.subr.mxu0 0.0
    %1432 = vmatpush1.msra.mxu0 0.0
    %1433 = vmatprep.subr.mxu0 0.0
    %1434 = vmatpush1.msra.mxu0 0.0
    %1435 = vmatprep.subr.mxu0 0.0
    %1436 = vmatpush1.msra.mxu0 0.0
    %1437 = vmatprep.subr.mxu0 0.0
    %1438 = vmatpush1.msra.mxu0 0.0
    %1439 = vmatprep.subr.mxu0 0.0
    %1440 = vmatpush1.msra.mxu0 0.0
    %1441 = vmatprep.subr.mxu0 0.0
    %1442 = vmatpush1.msra.mxu0 0.0
    %1443 = vmatprep.subr.mxu0 0.0
    %1444 = vmatpush1.msra.mxu0 0.0
    %1445 = vmatprep.subr.mxu0 0.0
    %1446 = vmatpush1.msra.mxu0 0.0
    %1447 = vmatprep.subr.mxu0 0.0
    %1448 = vmatpush1.msra.mxu0 0.0
    %1449 = vmatprep.subr.mxu0 0.0
    %1450 = vmatpush1.msra.mxu0 0.0
    %1451 = vmatprep.subr.mxu0 0.0
    %1452 = vmatpush1.msra.mxu0 0.0
    %1453 = vmatprep.subr.mxu0 0.0
    %1454 = vmatpush1.msra.mxu0 0.0
    %1455 = vmatprep.subr.mxu0 0.0
    %1456 = vmatpush1.msra.mxu0 0.0
    %1457 = vmatprep.subr.mxu0 0.0
    %1458 = vmatpush1.msra.mxu0 0.0
    %1459 = vmatprep.subr.mxu0 0.0
    %1460 = vmatpush1.msra.mxu0 0.0
    %1461 = vmatprep.subr.mxu0 0.0
    %1462 = vmatpush1.msra.mxu0 0.0
    %1463 = vmatprep.subr.mxu0 0.0
    %1464 = vmatpush1.msra.mxu0 0.0
    %1465 = vmatprep.subr.mxu0 0.0
    %1466 = vmatpush1.msra.mxu0 0.0
    %1467 = vmatprep.subr.mxu0 0.0
    %1468 = vmatpush1.msra.mxu0 0.0
    %1469 = vmatprep.subr.mxu0 0.0
    %1470 = vmatpush1.msra.mxu0 0.0
    %1471 = vmatprep.subr.mxu0 0.0
    %1472 = vmatpush1.msra.mxu0 0.0
    %1473 = vmatprep.mubr.f32.mxu0 0.0
    %1474 = vmatmul.mubr.f32.gmra.mrb[0].mxu0 %v410
    %v1475 = vpop.f32.mrb[0].mxu0
    %v1476 = vadd.f32 0.0, %v1475
    %v1477 = vpop.f32.mrb[0].mxu0
    %1478 = vmatprep.mubr.f32.mxu0 0.0
    %1479 = vmatmul.mubr.f32.gmra.mrb[0].mxu0 %v413
    %v1480 = vpop.f32.mrb[0].mxu0
    %v1481 = vadd.f32 0.0, %v1480
    %v1482 = vpop.f32.mrb[0].mxu0
    %1483 = vmatprep.mubr.f32.mxu0 0.0
    %1484 = vmatmul.mubr.f32.gmra.mrb[0].mxu0 %v416
    %v1485 = vpop.f32.mrb[0].mxu0
    %v1486 = vadd.f32 0.0, %v1485
    %v1487 = vpop.f32.mrb[0].mxu0
    %1488 = vmatprep.mubr.f32.mxu0 0.0
    %1489 = vmatmul.mubr.f32.gmra.mrb[0].mxu0 %v419
    %v1490 = vpop.f32.mrb[0].mxu0
    %v1491 = vadd.f32 0.0, %v1490
    %v1492 = vpop.f32.mrb[0].mxu0
    %1493 = vmatprep.mubr.f32.mxu0 0.0
    %1494 = vmatmul.mubr.f32.gmra.mrb[0].mxu0 %v422
    %v1495 = vpop.f32.mrb[0].mxu0
    %v1496 = vadd.f32 0.0, %v1495
    %v1497 = vpop.f32.mrb[0].mxu0
    %1498 = vmatprep.mubr.f32.mxu0 0.0
    %1499 = vmatmul.mubr.f32.gmra.mrb[0].mxu0 %v425
    %v1500 = vpop.f32.mrb[0].mxu0
    %v1501 = vadd.f32 0.0, %v1500
    %v1502 = vpop.f32.mrb[0].mxu0
    %1503 = vmatprep.mubr.f32.mxu0 0.0
    %1504 = vmatmul.mubr.f32.gmra.mrb[0].mxu0 %v428
    %v1505 = vpop.f32.mrb[0].mxu0
    %v1506 = vadd.f32 0.0, %v1505
    %v1507 = vpop.f32.mrb[0].mxu0
    %1508 = vmatprep.mubr.f32.mxu0 0.0
    %1509 = vmatmul.mubr.f32.gmra.mrb[0].mxu0 %v431
    %v1510 = vpop.f32.mrb[0].mxu0
    %v1511 = vadd.f32 0.0, %v1510
    %v1512 = vpop.f32.mrb[0].mxu0
    %1513 = vmatprep.mubr.f32.mxu0 0.0
    %1514 = vmatmul.mubr.f32.gmra.mrb[0].mxu0 %v434
    %v1515 = vpop.f32.mrb[0].mxu0
    %v1516 = vadd.f32 0.0, %v1515
    %v1517 = vpop.f32.mrb[0].mxu0
    %1518 = vmatprep.mubr.f32.mxu0 0.0
    %1519 = vmatmul.mubr.f32.gmra.mrb[0].mxu0 %v437
    %v1520 = vpop.f32.mrb[0].mxu0
    %v1521 = vadd.f32 0.0, %v1520
    %v1522 = vpop.f32.mrb[0].mxu0
    %1523 = vmatprep.mubr.f32.mxu0 0.0
    %1524 = vmatmul.mubr.f32.gmra.mrb[0].mxu0 %v440
    %v1525 = vpop.f32.mrb[0].mxu0
    %v1526 = vadd.f32 0.0, %v1525
    %v1527 = vpop.f32.mrb[0].mxu0
    %1528 = vmatprep.mubr.f32.mxu0 0.0
    %1529 = vmatmul.mubr.f32.gmra.mrb[0].mxu0 %v443
    %v1530 = vpop.f32.mrb[0].mxu0
    %v1531 = vadd.f32 0.0, %v1530
    %v1532 = vpop.f32.mrb[0].mxu0
    %1533 = vmatprep.mubr.f32.mxu0 0.0
    %1534 = vmatmul.mubr.f32.gmra.mrb[0].mxu0 %v446
    %v1535 = vpop.f32.mrb[0].mxu0
    %v1536 = vadd.f32 0.0, %v1535
    %v1537 = vpop.f32.mrb[0].mxu0
    %1538 = vmatprep.mubr.f32.mxu0 0.0
    %1539 = vmatmul.mubr.f32.gmra.mrb[0].mxu0 %v449
    %v1540 = vpop.f32.mrb[0].mxu0
    %v1541 = vadd.f32 0.0, %v1540
    %v1542 = vpop.f32.mrb[0].mxu0
    %1543 = vmatprep.mubr.f32.mxu0 0.0
    %1544 = vmatmul.mubr.f32.gmra.mrb[0].mxu0 %v452
    %v1545 = vpop.f32.mrb[0].mxu0
    %v1546 = vadd.f32 0.0, %v1545
    %v1547 = vpop.f32.mrb[0].mxu0
    %1548 = vmatprep.mubr.f32.mxu0 0.0
    %1549 = vmatmul.mubr.f32.gmra.mrb[0].mxu0 %v455
    %v1550 = vpop.f32.mrb[0].mxu0
    %v1551 = vadd.f32 0.0, %v1550
    %v1552 = vpop.f32.mrb[0].mxu0
    %1553 = vmatprep.mubr.f32.mxu0 0.0
    %1554 = vmatmul.mubr.f32.gmra.mrb[0].mxu0 %v458
    %v1555 = vpop.f32.mrb[0].mxu0
    %v1556 = vadd.f32 0.0, %v1555
    %v1557 = vpop.f32.mrb[0].mxu0
    %1558 = vmatprep.mubr.f32.mxu0 0.0
    %1559 = vmatmul.mubr.f32.gmra.mrb[0].mxu0 %v461
    %v1560 = vpop.f32.mrb[0].mxu0
    %v1561 = vadd.f32 0.0, %v1560
    %v1562 = vpop.f32.mrb[0].mxu0
    %1563 = vmatprep.mubr.f32.mxu0 0.0
    %1564 = vmatmul.mubr.f32.gmra.mrb[0].mxu0 %v464
    %v1565 = vpop.f32.mrb[0].mxu0
    %v1566 = vadd.f32 0.0, %v1565
    %v1567 = vpop.f32.mrb[0].mxu0
    %1568 = vmatprep.mubr.f32.mxu0 0.0
    %1569 = vmatmul.mubr.f32.gmra.mrb[0].mxu0 %v467
    %v1570 = vpop.f32.mrb[0].mxu0
    %v1571 = vadd.f32 0.0, %v1570
    %v1572 = vpop.f32.mrb[0].mxu0
    %1573 = vdwg.mxu0
    %v1574 = vld [vmem:[#allocation2] sm:$0xff]
    %v1575 = vld [vmem:[#allocation2 + $0x8] sm:$0xff]
    %v1576 = vld [vmem:[#allocation2 + $0x10] sm:$0xff]
    %v1577 = vld [vmem:[#allocation2 + $0x18] sm:$0xff]
    %v1579 = vsel %vm95, %v1400, 0
    %v1582 = vsel %vm95, %v1401, 0
    %v1585 = vsel %vm95, %v1402, 0
    %v1588 = vsel %vm95, %v1403, 0
    %v1591 = vsel %vm95, %v1404, 0
    %1593 = vmatprep.subr.mxu0 0.0
    %1594 = vmatpush1.msra.mxu0 %v1574
    %1595 = vmatprep.subr.mxu0 0.0
    %1596 = vmatpush1.msra.mxu0 %v1575
    %1597 = vmatprep.subr.mxu0 0.0
    %1598 = vmatpush1.msra.mxu0 %v1576
    %1599 = vmatprep.subr.mxu0 0.0
    %1600 = vmatpush1.msra.mxu0 %v1577
    %1601 = vmatprep.subr.mxu0 0.0
    %1602 = vmatpush1.msra.mxu0 0.0
    %1603 = vmatprep.subr.mxu0 0.0
    %1604 = vmatpush1.msra.mxu0 0.0
    %1605 = vmatprep.subr.mxu0 0.0
    %1606 = vmatpush1.msra.mxu0 0.0
    %1607 = vmatprep.subr.mxu0 0.0
    %1608 = vmatpush1.msra.mxu0 0.0
    %1609 = vmatprep.subr.mxu0 0.0
    %1610 = vmatpush1.msra.mxu0 0.0
    %1611 = vmatprep.subr.mxu0 0.0
    %1612 = vmatpush1.msra.mxu0 0.0
    %1613 = vmatprep.subr.mxu0 0.0
    %1614 = vmatpush1.msra.mxu0 0.0
    %1615 = vmatprep.subr.mxu0 0.0
    %1616 = vmatpush1.msra.mxu0 0.0
    %1617 = vmatprep.subr.mxu0 0.0
    %1618 = vmatpush1.msra.mxu0 0.0
    %1619 = vmatprep.subr.mxu0 0.0
    %1620 = vmatpush1.msra.mxu0 0.0
    %1621 = vmatprep.subr.mxu0 0.0
    %1622 = vmatpush1.msra.mxu0 0.0
    %1623 = vmatprep.subr.mxu0 0.0
    %1624 = vmatpush1.msra.mxu0 0.0
    %1625 = vmatprep.subr.mxu0 0.0
    %1626 = vmatpush1.msra.mxu0 0.0
    %1627 = vmatprep.subr.mxu0 0.0
    %1628 = vmatpush1.msra.mxu0 0.0
    %1629 = vmatprep.subr.mxu0 0.0
    %1630 = vmatpush1.msra.mxu0 0.0
    %1631 = vmatprep.subr.mxu0 0.0
    %1632 = vmatpush1.msra.mxu0 0.0
    %1633 = vmatprep.subr.mxu0 0.0
    %1634 = vmatpush1.msra.mxu0 0.0
    %1635 = vmatprep.subr.mxu0 0.0
    %1636 = vmatpush1.msra.mxu0 0.0
    %1637 = vmatprep.subr.mxu0 0.0
    %1638 = vmatpush1.msra.mxu0 0.0
    %1639 = vmatprep.subr.mxu0 0.0
    %1640 = vmatpush1.msra.mxu0 0.0
    %1641 = vmatprep.subr.mxu0 0.0
    %1642 = vmatpush1.msra.mxu0 0.0
    %1643 = vmatprep.subr.mxu0 0.0
    %1644 = vmatpush1.msra.mxu0 0.0
    %1645 = vmatprep.subr.mxu0 0.0
    %1646 = vmatpush1.msra.mxu0 0.0
    %1647 = vmatprep.subr.mxu0 0.0
    %1648 = vmatpush1.msra.mxu0 0.0
    %1649 = vmatprep.subr.mxu0 0.0
    %1650 = vmatpush1.msra.mxu0 0.0
    %1651 = vmatprep.subr.mxu0 0.0
    %1652 = vmatpush1.msra.mxu0 0.0
    %1653 = vmatprep.subr.mxu0 0.0
    %1654 = vmatpush1.msra.mxu0 0.0
    %1655 = vmatprep.subr.mxu0 0.0
    %1656 = vmatpush1.msra.mxu0 0.0
    %1657 = vmatprep.mubr.f32.mxu0 0.0
    %1658 = vmatmul.mubr.f32.gmra.mrb[0].mxu0 %v1579
    %v1659 = vpop.f32.mrb[0].mxu0
    %v1660 = vadd.f32 0.0, %v1659
    %v1661 = vpop.f32.mrb[0].mxu0
    %1662 = vmatprep.mubr.f32.mxu0 0.0
    %1663 = vmatmul.mubr.f32.gmra.mrb[0].mxu0 %v1582
    %v1664 = vpop.f32.mrb[0].mxu0
    %v1665 = vadd.f32 0.0, %v1664
    %v1666 = vpop.f32.mrb[0].mxu0
    %1667 = vmatprep.mubr.f32.mxu0 0.0
    %1668 = vmatmul.mubr.f32.gmra.mrb[0].mxu0 %v1585
    %v1669 = vpop.f32.mrb[0].mxu0
    %v1670 = vadd.f32 0.0, %v1669
    %v1671 = vpop.f32.mrb[0].mxu0
    %1672 = vmatprep.mubr.f32.mxu0 0.0
    %1673 = vmatmul.mubr.f32.gmra.mrb[0].mxu0 %v1588
    %v1674 = vpop.f32.mrb[0].mxu0
    %v1675 = vadd.f32 0.0, %v1674
    %v1676 = vpop.f32.mrb[0].mxu0
    %1677 = vmatprep.mubr.f32.mxu0 0.0
    %1678 = vmatmul.mubr.f32.gmra.mrb[0].mxu0 %v1591
    %v1679 = vpop.f32.mrb[0].mxu0
    %v1680 = vadd.f32 0.0, %v1679
    %v1681 = vpop.f32.mrb[0].mxu0
    %1682 = vdwg.mxu0
    %v1683 = vlaneseq
    %v1684 = vshrl.u32 %v1683, 7
    %v1685 = vadd.s32 %v1684, 8
    %v1686 = vadd.s32 %v1684, 16
    %v1687 = vadd.s32 %v1684, 24
    %v1688 = vadd.s32 %v1684, 32
    %v1689 = vadd.s32 %v1684, 40
    %v1690 = vadd.s32 %v1684, 48
    %v1691 = vadd.s32 %v1684, 56
    %v1692 = vadd.s32 %v1684, 64
    %v1693 = vadd.s32 %v1684, 72
    %v1694 = vadd.s32 %v1684, 80
    %v1695 = vadd.s32 %v1684, 88
    %v1696 = vadd.s32 %v1684, 96
    %v1697 = vadd.s32 %v1684, 104
    %v1698 = vadd.s32 %v1684, 112
    %v1699 = vadd.s32 %v1684, 120
    %v1700 = vadd.s32 %v1684, 128
    %v1701 = vadd.s32 %v1684, 136
    %v1702 = vadd.s32 %v1684, 144
    %v1703 = vadd.s32 %v1684, 152
    %v1704 = vlaneseq
    %v1705 = vand.u32 %v1704, 127
    %vm1706 = vcmp.ge.s32.totalorder %v1684, 0
    %vm1707 = vcmp.ge.s32.totalorder %v1685, 0
    %vm1708 = vcmp.ge.s32.totalorder %v1686, 0
    %vm1709 = vcmp.ge.s32.totalorder %v1687, 0
    %vm1710 = vcmp.ge.s32.totalorder %v1688, 0
    %vm1711 = vcmp.ge.s32.totalorder %v1689, 0
    %vm1712 = vcmp.ge.s32.totalorder %v1690, 0
    %vm1713 = vcmp.ge.s32.totalorder %v1691, 0
    %vm1714 = vcmp.ge.s32.totalorder %v1692, 0
    %vm1715 = vcmp.ge.s32.totalorder %v1693, 0
    %vm1716 = vcmp.ge.s32.totalorder %v1694, 0
    %vm1717 = vcmp.ge.s32.totalorder %v1695, 0
    %vm1718 = vcmp.ge.s32.totalorder %v1696, 0
    %vm1719 = vcmp.ge.s32.totalorder %v1697, 0
    %vm1720 = vcmp.ge.s32.totalorder %v1698, 0
    %vm1721 = vcmp.ge.s32.totalorder %v1699, 0
    %vm1722 = vcmp.ge.s32.totalorder %v1700, 0
    %vm1723 = vcmp.ge.s32.totalorder %v1701, 0
    %vm1724 = vcmp.ge.s32.totalorder %v1702, 0
    %vm1725 = vcmp.ge.s32.totalorder %v1703, 0
    %vm1726 = vcmp.lt.s32.totalorder %v1684, 80
    %vm1727 = vcmp.lt.s32.totalorder %v1685, 80
    %vm1728 = vcmp.lt.s32.totalorder %v1686, 80
    %vm1729 = vcmp.lt.s32.totalorder %v1687, 80
    %vm1730 = vcmp.lt.s32.totalorder %v1688, 80
    %vm1731 = vcmp.lt.s32.totalorder %v1689, 80
    %vm1732 = vcmp.lt.s32.totalorder %v1690, 80
    %vm1733 = vcmp.lt.s32.totalorder %v1691, 80
    %vm1734 = vcmp.lt.s32.totalorder %v1692, 80
    %vm1735 = vcmp.lt.s32.totalorder %v1693, 80
    %vm1736 = vcmp.lt.s32.totalorder %v1694, 80
    %vm1737 = vcmp.lt.s32.totalorder %v1695, 80
    %vm1738 = vcmp.lt.s32.totalorder %v1696, 80
    %vm1739 = vcmp.lt.s32.totalorder %v1697, 80
    %vm1740 = vcmp.lt.s32.totalorder %v1698, 80
    %vm1741 = vcmp.lt.s32.totalorder %v1699, 80
    %vm1742 = vcmp.lt.s32.totalorder %v1700, 80
    %vm1743 = vcmp.lt.s32.totalorder %v1701, 80
    %vm1744 = vcmp.lt.s32.totalorder %v1702, 80
    %vm1745 = vcmp.lt.s32.totalorder %v1703, 80
    %vm1746 = vmand %vm1706, %vm1726
    %vm1747 = vmand %vm1707, %vm1727
    %vm1748 = vmand %vm1708, %vm1728
    %vm1749 = vmand %vm1709, %vm1729
    %vm1750 = vmand %vm1710, %vm1730
    %vm1751 = vmand %vm1711, %vm1731
    %vm1752 = vmand %vm1712, %vm1732
    %vm1753 = vmand %vm1713, %vm1733
    %vm1754 = vmand %vm1714, %vm1734
    %vm1755 = vmand %vm1715, %vm1735
    %vm1756 = vmand %vm1716, %vm1736
    %vm1757 = vmand %vm1717, %vm1737
    %vm1758 = vmand %vm1718, %vm1738
    %vm1759 = vmand %vm1719, %vm1739
    %vm1760 = vmand %vm1720, %vm1740
    %vm1761 = vmand %vm1721, %vm1741
    %vm1762 = vmand %vm1722, %vm1742
    %vm1763 = vmand %vm1723, %vm1743
    %vm1764 = vmand %vm1724, %vm1744
    %vm1765 = vmand %vm1725, %vm1745
    %vm1766 = vcmp.ge.s32.totalorder %v1705, 0
    %vm1767 = vmand %vm1746, %vm1766
    %vm1768 = vmand %vm1747, %vm1766
    %vm1769 = vmand %vm1748, %vm1766
    %vm1770 = vmand %vm1749, %vm1766
    %vm1771 = vmand %vm1750, %vm1766
    %vm1772 = vmand %vm1751, %vm1766
    %vm1773 = vmand %vm1752, %vm1766
    %vm1774 = vmand %vm1753, %vm1766
    %vm1775 = vmand %vm1754, %vm1766
    %vm1776 = vmand %vm1755, %vm1766
    %vm1777 = vmand %vm1756, %vm1766
    %vm1778 = vmand %vm1757, %vm1766
    %vm1779 = vmand %vm1758, %vm1766
    %vm1780 = vmand %vm1759, %vm1766
    %vm1781 = vmand %vm1760, %vm1766
    %vm1782 = vmand %vm1761, %vm1766
    %vm1783 = vmand %vm1762, %vm1766
    %vm1784 = vmand %vm1763, %vm1766
    %vm1785 = vmand %vm1764, %vm1766
    %vm1786 = vmand %vm1765, %vm1766
    %vm1787 = vcmp.lt.s32.totalorder %v1705, 20
    %vm1788 = vmand %vm1767, %vm1787
    %vm1789 = vmand %vm1768, %vm1787
    %vm1790 = vmand %vm1769, %vm1787
    %vm1791 = vmand %vm1770, %vm1787
    %vm1792 = vmand %vm1771, %vm1787
    %vm1793 = vmand %vm1772, %vm1787
    %vm1794 = vmand %vm1773, %vm1787
    %vm1795 = vmand %vm1774, %vm1787
    %vm1796 = vmand %vm1775, %vm1787
    %vm1797 = vmand %vm1776, %vm1787
    %vm1798 = vmand %vm1777, %vm1787
    %vm1799 = vmand %vm1778, %vm1787
    %vm1800 = vmand %vm1779, %vm1787
    %vm1801 = vmand %vm1780, %vm1787
    %vm1802 = vmand %vm1781, %vm1787
    %vm1803 = vmand %vm1782, %vm1787
    %vm1804 = vmand %vm1783, %vm1787
    %vm1805 = vmand %vm1784, %vm1787
    %vm1806 = vmand %vm1785, %vm1787
    %vm1807 = vmand %vm1786, %vm1787
    %vm1808 = vcmp.ge.s32.totalorder %v1684, 80
    %vm1809 = vcmp.ge.s32.totalorder %v1685, 80
    %vm1810 = vcmp.ge.s32.totalorder %v1686, 80
    %vm1811 = vcmp.ge.s32.totalorder %v1687, 80
    %vm1812 = vcmp.ge.s32.totalorder %v1688, 80
    %vm1813 = vcmp.ge.s32.totalorder %v1689, 80
    %vm1814 = vcmp.ge.s32.totalorder %v1690, 80
    %vm1815 = vcmp.ge.s32.totalorder %v1691, 80
    %vm1816 = vcmp.ge.s32.totalorder %v1692, 80
    %vm1817 = vcmp.ge.s32.totalorder %v1693, 80
    %vm1818 = vcmp.ge.s32.totalorder %v1694, 80
    %vm1819 = vcmp.ge.s32.totalorder %v1695, 80
    %vm1820 = vcmp.ge.s32.totalorder %v1696, 80
    %vm1821 = vcmp.ge.s32.totalorder %v1697, 80
    %vm1822 = vcmp.ge.s32.totalorder %v1698, 80
    %vm1823 = vcmp.ge.s32.totalorder %v1699, 80
    %vm1824 = vcmp.ge.s32.totalorder %v1700, 80
    %vm1825 = vcmp.ge.s32.totalorder %v1701, 80
    %vm1826 = vcmp.ge.s32.totalorder %v1702, 80
    %vm1827 = vcmp.ge.s32.totalorder %v1703, 80
    %vm1828 = vcmp.lt.s32.totalorder %v1684, 160
    %vm1829 = vcmp.lt.s32.totalorder %v1685, 160
    %vm1830 = vcmp.lt.s32.totalorder %v1686, 160
    %vm1831 = vcmp.lt.s32.totalorder %v1687, 160
    %vm1832 = vcmp.lt.s32.totalorder %v1688, 160
    %vm1833 = vcmp.lt.s32.totalorder %v1689, 160
    %vm1834 = vcmp.lt.s32.totalorder %v1690, 160
    %vm1835 = vcmp.lt.s32.totalorder %v1691, 160
    %vm1836 = vcmp.lt.s32.totalorder %v1692, 160
    %vm1837 = vcmp.lt.s32.totalorder %v1693, 160
    %vm1838 = vcmp.lt.s32.totalorder %v1694, 160
    %vm1839 = vcmp.lt.s32.totalorder %v1695, 160
    %vm1840 = vcmp.lt.s32.totalorder %v1696, 160
    %vm1841 = vcmp.lt.s32.totalorder %v1697, 160
    %vm1842 = vcmp.lt.s32.totalorder %v1698, 160
    %vm1843 = vcmp.lt.s32.totalorder %v1699, 160
    %vm1844 = vcmp.lt.s32.totalorder %v1700, 160
    %vm1845 = vcmp.lt.s32.totalorder %v1701, 160
    %vm1846 = vcmp.lt.s32.totalorder %v1702, 160
    %vm1847 = vcmp.lt.s32.totalorder %v1703, 160
    %vm1848 = vmand %vm1808, %vm1828
    %vm1849 = vmand %vm1809, %vm1829
    %vm1850 = vmand %vm1810, %vm1830
    %vm1851 = vmand %vm1811, %vm1831
    %vm1852 = vmand %vm1812, %vm1832
    %vm1853 = vmand %vm1813, %vm1833
    %vm1854 = vmand %vm1814, %vm1834
    %vm1855 = vmand %vm1815, %vm1835
    %vm1856 = vmand %vm1816, %vm1836
    %vm1857 = vmand %vm1817, %vm1837
    %vm1858 = vmand %vm1818, %vm1838
    %vm1859 = vmand %vm1819, %vm1839
    %vm1860 = vmand %vm1820, %vm1840
    %vm1861 = vmand %vm1821, %vm1841
    %vm1862 = vmand %vm1822, %vm1842
    %vm1863 = vmand %vm1823, %vm1843
    %vm1864 = vmand %vm1824, %vm1844
    %vm1865 = vmand %vm1825, %vm1845
    %vm1866 = vmand %vm1826, %vm1846
    %vm1867 = vmand %vm1827, %vm1847
    %vm1868 = vcmp.ge.s32.totalorder %v1705, 20
    %vm1869 = vmand %vm1848, %vm1868
    %vm1870 = vmand %vm1849, %vm1868
    %vm1871 = vmand %vm1850, %vm1868
    %vm1872 = vmand %vm1851, %vm1868
    %vm1873 = vmand %vm1852, %vm1868
    %vm1874 = vmand %vm1853, %vm1868
    %vm1875 = vmand %vm1854, %vm1868
    %vm1876 = vmand %vm1855, %vm1868
    %vm1877 = vmand %vm1856, %vm1868
    %vm1878 = vmand %vm1857, %vm1868
    %vm1879 = vmand %vm1858, %vm1868
    %vm1880 = vmand %vm1859, %vm1868
    %vm1881 = vmand %vm1860, %vm1868
    %vm1882 = vmand %vm1861, %vm1868
    %vm1883 = vmand %vm1862, %vm1868
    %vm1884 = vmand %vm1863, %vm1868
    %vm1885 = vmand %vm1864, %vm1868
    %vm1886 = vmand %vm1865, %vm1868
    %vm1887 = vmand %vm1866, %vm1868
    %vm1888 = vmand %vm1867, %vm1868
    %vm1889 = vcmp.lt.s32.totalorder %v1705, 40
    %vm1890 = vmand %vm1869, %vm1889
    %vm1891 = vmand %vm1870, %vm1889
    %vm1892 = vmand %vm1871, %vm1889
    %vm1893 = vmand %vm1872, %vm1889
    %vm1894 = vmand %vm1873, %vm1889
    %vm1895 = vmand %vm1874, %vm1889
    %vm1896 = vmand %vm1875, %vm1889
    %vm1897 = vmand %vm1876, %vm1889
    %vm1898 = vmand %vm1877, %vm1889
    %vm1899 = vmand %vm1878, %vm1889
    %vm1900 = vmand %vm1879, %vm1889
    %vm1901 = vmand %vm1880, %vm1889
    %vm1902 = vmand %vm1881, %vm1889
    %vm1903 = vmand %vm1882, %vm1889
    %vm1904 = vmand %vm1883, %vm1889
    %vm1905 = vmand %vm1884, %vm1889
    %vm1906 = vmand %vm1885, %vm1889
    %vm1907 = vmand %vm1886, %vm1889
    %vm1908 = vmand %vm1887, %vm1889
    %vm1909 = vmand %vm1888, %vm1889
    %vm1910 = vmor %vm1788, %vm1890
    %vm1911 = vmor %vm1789, %vm1891
    %vm1912 = vmor %vm1790, %vm1892
    %vm1913 = vmor %vm1791, %vm1893
    %vm1914 = vmor %vm1792, %vm1894
    %vm1915 = vmor %vm1793, %vm1895
    %vm1916 = vmor %vm1794, %vm1896
    %vm1917 = vmor %vm1795, %vm1897
    %vm1918 = vmor %vm1796, %vm1898
    %vm1919 = vmor %vm1797, %vm1899
    %vm1920 = vmor %vm1798, %vm1900
    %vm1921 = vmor %vm1799, %vm1901
    %vm1922 = vmor %vm1800, %vm1902
    %vm1923 = vmor %vm1801, %vm1903
    %vm1924 = vmor %vm1802, %vm1904
    %vm1925 = vmor %vm1803, %vm1905
    %vm1926 = vmor %vm1804, %vm1906
    %vm1927 = vmor %vm1805, %vm1907
    %vm1928 = vmor %vm1806, %vm1908
    %vm1929 = vmor %vm1807, %vm1909
    %v1930 = vsel %vm1910, 0.0, -1e+30
    %v1931 = vsel %vm1911, 0.0, -1e+30
    %v1932 = vsel %vm1912, 0.0, -1e+30
    %v1933 = vsel %vm1913, 0.0, -1e+30
    %v1934 = vsel %vm1914, 0.0, -1e+30
    %v1935 = vsel %vm1915, 0.0, -1e+30
    %v1936 = vsel %vm1916, 0.0, -1e+30
    %v1937 = vsel %vm1917, 0.0, -1e+30
    %v1938 = vsel %vm1918, 0.0, -1e+30
    %v1939 = vsel %vm1919, 0.0, -1e+30
    %v1940 = vsel %vm1920, 0.0, -1e+30
    %v1941 = vsel %vm1921, 0.0, -1e+30
    %v1942 = vsel %vm1922, 0.0, -1e+30
    %v1943 = vsel %vm1923, 0.0, -1e+30
    %v1944 = vsel %vm1924, 0.0, -1e+30
    %v1945 = vsel %vm1925, 0.0, -1e+30
    %v1946 = vsel %vm1926, 0.0, -1e+30
    %v1947 = vsel %vm1927, 0.0, -1e+30
    %v1948 = vsel %vm1928, 0.0, -1e+30
    %v1949 = vsel %vm1929, 0.0, -1e+30
    %vm1950 = vcmask 64512
    %v1952 = vsel %vm1950, %v1476, 0
    %v1955 = vsel %vm1950, %v1481, 0
    %v1958 = vsel %vm1950, %v1486, 0
    %v1961 = vsel %vm1950, %v1491, 0
    %v1964 = vsel %vm1950, %v1496, 0
    %v1967 = vsel %vm1950, %v1501, 0
    %v1970 = vsel %vm1950, %v1506, 0
    %v1973 = vsel %vm1950, %v1511, 0
    %v1976 = vsel %vm1950, %v1516, 0
    %v1979 = vsel %vm1950, %v1521, 0
    %v1982 = vsel %vm1950, %v1526, 0
    %v1985 = vsel %vm1950, %v1531, 0
    %v1988 = vsel %vm1950, %v1536, 0
    %v1991 = vsel %vm1950, %v1541, 0
    %v1994 = vsel %vm1950, %v1546, 0
    %v1997 = vsel %vm1950, %v1551, 0
    %v2000 = vsel %vm1950, %v1556, 0
    %v2003 = vsel %vm1950, %v1561, 0
    %v2006 = vsel %vm1950, %v1566, 0
    %v2009 = vsel %vm1950, %v1571, 0
    %v2012 = vsel %vm1950, %v1660, 0
    %v2015 = vsel %vm1950, %v1665, 0
    %v2018 = vsel %vm1950, %v1670, 0
    %v2021 = vsel %vm1950, %v1675, 0
    %v2024 = vsel %vm1950, %v1680, 0
    %2026 = vmatprep.subr.mxu0 0.0
    %2027 = vmatpush1.xpose.msra.mxu0 %v2012
    %2028 = vmatprep.subr.mxu0 0.0
    %2029 = vmatpush1.xpose.msra.mxu0 %v2015
    %2030 = vmatprep.subr.mxu0 0.0
    %2031 = vmatpush1.xpose.msra.mxu0 %v2018
    %2032 = vmatprep.subr.mxu0 0.0
    %2033 = vmatpush1.xpose.msra.mxu0 %v2021
    %2034 = vmatprep.subr.mxu0 0.0
    %2035 = vmatpush1.xpose.msra.mxu0 %v2024
    %2036 = vmatprep.subr.mxu0 0.0
    %2037 = vmatpush1.xpose.msra.mxu0 0.0
    %2038 = vmatprep.subr.mxu0 0.0
    %2039 = vmatpush1.xpose.msra.mxu0 0.0
    %2040 = vmatprep.subr.mxu0 0.0
    %2041 = vmatpush1.xpose.msra.mxu0 0.0
    %2042 = vmatprep.subr.mxu0 0.0
    %2043 = vmatpush1.xpose.msra.mxu0 0.0
    %2044 = vmatprep.subr.mxu0 0.0
    %2045 = vmatpush1.xpose.msra.mxu0 0.0
    %2046 = vmatprep.subr.mxu0 0.0
    %2047 = vmatpush1.xpose.msra.mxu0 0.0
    %2048 = vmatprep.subr.mxu0 0.0
    %2049 = vmatpush1.xpose.msra.mxu0 0.0
    %2050 = vmatprep.subr.mxu0 0.0
    %2051 = vmatpush1.xpose.msra.mxu0 0.0
    %2052 = vmatprep.subr.mxu0 0.0
    %2053 = vmatpush1.xpose.msra.mxu0 0.0
    %2054 = vmatprep.subr.mxu0 0.0
    %2055 = vmatpush1.xpose.msra.mxu0 0.0
    %2056 = vmatprep.subr.mxu0 0.0
    %2057 = vmatpush1.xpose.msra.mxu0 0.0
    %2058 = vmatprep.subr.mxu0 0.0
    %2059 = vmatpush1.xpose.msra.mxu0 0.0
    %2060 = vmatprep.subr.mxu0 0.0
    %2061 = vmatpush1.xpose.msra.mxu0 0.0
    %2062 = vmatprep.subr.mxu0 0.0
    %2063 = vmatpush1.xpose.msra.mxu0 0.0
    %2064 = vmatprep.subr.mxu0 0.0
    %2065 = vmatpush1.xpose.msra.mxu0 0.0
    %2066 = vmatprep.subr.mxu0 0.0
    %2067 = vmatpush1.xpose.msra.mxu0 0.0
    %2068 = vmatprep.subr.mxu0 0.0
    %2069 = vmatpush1.xpose.msra.mxu0 0.0
    %2070 = vmatprep.subr.mxu0 0.0
    %2071 = vmatpush1.xpose.msra.mxu0 0.0
    %2072 = vmatprep.subr.mxu0 0.0
    %2073 = vmatpush1.xpose.msra.mxu0 0.0
    %2074 = vmatprep.subr.mxu0 0.0
    %2075 = vmatpush1.xpose.msra.mxu0 0.0
    %2076 = vmatprep.subr.mxu0 0.0
    %2077 = vmatpush1.xpose.msra.mxu0 0.0
    %2078 = vmatprep.subr.mxu0 0.0
    %2079 = vmatpush1.xpose.msra.mxu0 0.0
    %2080 = vmatprep.subr.mxu0 0.0
    %2081 = vmatpush1.xpose.msra.mxu0 0.0
    %2082 = vmatprep.subr.mxu0 0.0
    %2083 = vmatpush1.xpose.msra.mxu0 0.0
    %2084 = vmatprep.subr.mxu0 0.0
    %2085 = vmatpush1.xpose.msra.mxu0 0.0
    %2086 = vmatprep.subr.mxu0 0.0
    %2087 = vmatpush1.xpose.msra.mxu0 0.0
    %2088 = vmatprep.subr.mxu0 0.0
    %2089 = vmatpush1.xpose.msra.mxu0 0.0
    %2090 = vmatprep.mubr.f32.mxu0 0.0
    %2091 = vmatmul.mubr.f32.gmra.mrb[0].mxu0 %v1952
    %v2092 = vpop.f32.mrb[0].mxu0
    %v2093 = vadd.f32 %v1930, %v2092
    %v2094 = vpop.f32.mrb[0].mxu0
    %2095 = vmatprep.mubr.f32.mxu0 0.0
    %2096 = vmatmul.mubr.f32.gmra.mrb[0].mxu0 %v1955
    %v2097 = vpop.f32.mrb[0].mxu0
    %v2098 = vadd.f32 %v1931, %v2097
    %v2099 = vpop.f32.mrb[0].mxu0
    %2100 = vmatprep.mubr.f32.mxu0 0.0
    %2101 = vmatmul.mubr.f32.gmra.mrb[0].mxu0 %v1958
    %v2102 = vpop.f32.mrb[0].mxu0
    %v2103 = vadd.f32 %v1932, %v2102
    %v2104 = vpop.f32.mrb[0].mxu0
    %2105 = vmatprep.mubr.f32.mxu0 0.0
    %2106 = vmatmul.mubr.f32.gmra.mrb[0].mxu0 %v1961
    %v2107 = vpop.f32.mrb[0].mxu0
    %v2108 = vadd.f32 %v1933, %v2107
    %v2109 = vpop.f32.mrb[0].mxu0
    %2110 = vmatprep.mubr.f32.mxu0 0.0
    %2111 = vmatmul.mubr.f32.gmra.mrb[0].mxu0 %v1964
    %v2112 = vpop.f32.mrb[0].mxu0
    %v2113 = vadd.f32 %v1934, %v2112
    %v2114 = vpop.f32.mrb[0].mxu0
    %2115 = vmatprep.mubr.f32.mxu0 0.0
    %2116 = vmatmul.mubr.f32.gmra.mrb[0].mxu0 %v1967
    %v2117 = vpop.f32.mrb[0].mxu0
    %v2118 = vadd.f32 %v1935, %v2117
    %v2119 = vpop.f32.mrb[0].mxu0
    %2120 = vmatprep.mubr.f32.mxu0 0.0
    %2121 = vmatmul.mubr.f32.gmra.mrb[0].mxu0 %v1970
    %v2122 = vpop.f32.mrb[0].mxu0
    %v2123 = vadd.f32 %v1936, %v2122
    %v2124 = vpop.f32.mrb[0].mxu0
    %2125 = vmatprep.mubr.f32.mxu0 0.0
    %2126 = vmatmul.mubr.f32.gmra.mrb[0].mxu0 %v1973
    %v2127 = vpop.f32.mrb[0].mxu0
    %v2128 = vadd.f32 %v1937, %v2127
    %v2129 = vpop.f32.mrb[0].mxu0
    %2130 = vmatprep.mubr.f32.mxu0 0.0
    %2131 = vmatmul.mubr.f32.gmra.mrb[0].mxu0 %v1976
    %v2132 = vpop.f32.mrb[0].mxu0
    %v2133 = vadd.f32 %v1938, %v2132
    %v2134 = vpop.f32.mrb[0].mxu0
    %2135 = vmatprep.mubr.f32.mxu0 0.0
    %2136 = vmatmul.mubr.f32.gmra.mrb[0].mxu0 %v1979
    %v2137 = vpop.f32.mrb[0].mxu0
    %v2138 = vadd.f32 %v1939, %v2137
    %v2139 = vpop.f32.mrb[0].mxu0
    %2140 = vmatprep.mubr.f32.mxu0 0.0
    %2141 = vmatmul.mubr.f32.gmra.mrb[0].mxu0 %v1982
    %v2142 = vpop.f32.mrb[0].mxu0
    %v2143 = vadd.f32 %v1940, %v2142
    %v2144 = vpop.f32.mrb[0].mxu0
    %2145 = vmatprep.mubr.f32.mxu0 0.0
    %2146 = vmatmul.mubr.f32.gmra.mrb[0].mxu0 %v1985
    %v2147 = vpop.f32.mrb[0].mxu0
    %v2148 = vadd.f32 %v1941, %v2147
    %v2149 = vpop.f32.mrb[0].mxu0
    %2150 = vmatprep.mubr.f32.mxu0 0.0
    %2151 = vmatmul.mubr.f32.gmra.mrb[0].mxu0 %v1988
    %v2152 = vpop.f32.mrb[0].mxu0
    %v2153 = vadd.f32 %v1942, %v2152
    %v2154 = vpop.f32.mrb[0].mxu0
    %2155 = vmatprep.mubr.f32.mxu0 0.0
    %2156 = vmatmul.mubr.f32.gmra.mrb[0].mxu0 %v1991
    %v2157 = vpop.f32.mrb[0].mxu0
    %v2158 = vadd.f32 %v1943, %v2157
    %v2159 = vpop.f32.mrb[0].mxu0
    %2160 = vmatprep.mubr.f32.mxu0 0.0
    %2161 = vmatmul.mubr.f32.gmra.mrb[0].mxu0 %v1994
    %v2162 = vpop.f32.mrb[0].mxu0
    %v2163 = vadd.f32 %v1944, %v2162
    %v2164 = vpop.f32.mrb[0].mxu0
    %2165 = vmatprep.mubr.f32.mxu0 0.0
    %2166 = vmatmul.mubr.f32.gmra.mrb[0].mxu0 %v1997
    %v2167 = vpop.f32.mrb[0].mxu0
    %v2168 = vadd.f32 %v1945, %v2167
    %v2169 = vpop.f32.mrb[0].mxu0
    %2170 = vmatprep.mubr.f32.mxu0 0.0
    %2171 = vmatmul.mubr.f32.gmra.mrb[0].mxu0 %v2000
    %v2172 = vpop.f32.mrb[0].mxu0
    %v2173 = vadd.f32 %v1946, %v2172
    %v2174 = vpop.f32.mrb[0].mxu0
    %2175 = vmatprep.mubr.f32.mxu0 0.0
    %2176 = vmatmul.mubr.f32.gmra.mrb[0].mxu0 %v2003
    %v2177 = vpop.f32.mrb[0].mxu0
    %v2178 = vadd.f32 %v1947, %v2177
    %v2179 = vpop.f32.mrb[0].mxu0
    %2180 = vmatprep.mubr.f32.mxu0 0.0
    %2181 = vmatmul.mubr.f32.gmra.mrb[0].mxu0 %v2006
    %v2182 = vpop.f32.mrb[0].mxu0
    %v2183 = vadd.f32 %v1948, %v2182
    %v2184 = vpop.f32.mrb[0].mxu0
    %2185 = vmatprep.mubr.f32.mxu0 0.0
    %2186 = vmatmul.mubr.f32.gmra.mrb[0].mxu0 %v2009
    %v2187 = vpop.f32.mrb[0].mxu0
    %v2188 = vadd.f32 %v1949, %v2187
    %v2189 = vpop.f32.mrb[0].mxu0
    %2190 = vdwg.mxu0
    %vm2191 = vcmask 326656
    %v2192 = vsel %vm2191, %v2093, -inf
    %2193 = vmax.xlane.f32.xlu0 %v2192
    %v2194 = vpop.xlane.xlu0 %2193
    %v2195 = vsel %vm2191, %v2098, -inf
    %2196 = vmax.xlane.f32.xlu0 %v2195
    %v2197 = vpop.xlane.xlu0 %2196
    %v2198 = vsel %vm2191, %v2103, -inf
    %2199 = vmax.xlane.f32.xlu0 %v2198
    %v2200 = vpop.xlane.xlu0 %2199
    %v2201 = vsel %vm2191, %v2108, -inf
    %2202 = vmax.xlane.f32.xlu0 %v2201
    %v2203 = vpop.xlane.xlu0 %2202
    %v2204 = vsel %vm2191, %v2113, -inf
    %2205 = vmax.xlane.f32.xlu0 %v2204
    %v2206 = vpop.xlane.xlu0 %2205
    %v2207 = vsel %vm2191, %v2118, -inf
    %2208 = vmax.xlane.f32.xlu0 %v2207
    %v2209 = vpop.xlane.xlu0 %2208
    %v2210 = vsel %vm2191, %v2123, -inf
    %2211 = vmax.xlane.f32.xlu0 %v2210
    %v2212 = vpop.xlane.xlu0 %2211
    %v2213 = vsel %vm2191, %v2128, -inf
    %2214 = vmax.xlane.f32.xlu0 %v2213
    %v2215 = vpop.xlane.xlu0 %2214
    %v2216 = vsel %vm2191, %v2133, -inf
    %2217 = vmax.xlane.f32.xlu0 %v2216
    %v2218 = vpop.xlane.xlu0 %2217
    %v2219 = vsel %vm2191, %v2138, -inf
    %2220 = vmax.xlane.f32.xlu0 %v2219
    %v2221 = vpop.xlane.xlu0 %2220
    %v2222 = vsel %vm2191, %v2143, -inf
    %2223 = vmax.xlane.f32.xlu0 %v2222
    %v2224 = vpop.xlane.xlu0 %2223
    %v2225 = vsel %vm2191, %v2148, -inf
    %2226 = vmax.xlane.f32.xlu0 %v2225
    %v2227 = vpop.xlane.xlu0 %2226
    %v2228 = vsel %vm2191, %v2153, -inf
    %2229 = vmax.xlane.f32.xlu0 %v2228
    %v2230 = vpop.xlane.xlu0 %2229
    %v2231 = vsel %vm2191, %v2158, -inf
    %2232 = vmax.xlane.f32.xlu0 %v2231
    %v2233 = vpop.xlane.xlu0 %2232
    %v2234 = vsel %vm2191, %v2163, -inf
    %2235 = vmax.xlane.f32.xlu0 %v2234
    %v2236 = vpop.xlane.xlu0 %2235
    %v2237 = vsel %vm2191, %v2168, -inf
    %2238 = vmax.xlane.f32.xlu0 %v2237
    %v2239 = vpop.xlane.xlu0 %2238
    %v2240 = vsel %vm2191, %v2173, -inf
    %2241 = vmax.xlane.f32.xlu0 %v2240
    %v2242 = vpop.xlane.xlu0 %2241
    %v2243 = vsel %vm2191, %v2178, -inf
    %2244 = vmax.xlane.f32.xlu0 %v2243
    %v2245 = vpop.xlane.xlu0 %2244
    %v2246 = vsel %vm2191, %v2183, -inf
    %2247 = vmax.xlane.f32.xlu0 %v2246
    %v2248 = vpop.xlane.xlu0 %2247
    %v2249 = vsel %vm2191, %v2188, -inf
    %2250 = vmax.xlane.f32.xlu0 %v2249
    %v2251 = vpop.xlane.xlu0 %2250
    %v2252 = vsub.f32 %v2093, %v2194
    %v2253 = vsub.f32 %v2098, %v2197
    %v2254 = vsub.f32 %v2103, %v2200
    %v2255 = vsub.f32 %v2108, %v2203
    %v2256 = vsub.f32 %v2113, %v2206
    %v2257 = vsub.f32 %v2118, %v2209
    %v2258 = vsub.f32 %v2123, %v2212
    %v2259 = vsub.f32 %v2128, %v2215
    %v2260 = vsub.f32 %v2133, %v2218
    %v2261 = vsub.f32 %v2138, %v2221
    %v2262 = vsub.f32 %v2143, %v2224
    %v2263 = vsub.f32 %v2148, %v2227
    %v2264 = vsub.f32 %v2153, %v2230
    %v2265 = vsub.f32 %v2158, %v2233
    %v2266 = vsub.f32 %v2163, %v2236
    %v2267 = vsub.f32 %v2168, %v2239
    %v2268 = vsub.f32 %v2173, %v2242
    %v2269 = vsub.f32 %v2178, %v2245
    %v2270 = vsub.f32 %v2183, %v2248
    %v2271 = vsub.f32 %v2188, %v2251
    %v2272 = vmul.f32 %v2252, 1.442695
    %v2273 = vpow.pop %v2272
    %v2274 = vmul.f32 %v2253, 1.442695
    %v2275 = vpow.pop %v2274
    %v2276 = vmul.f32 %v2254, 1.442695
    %v2277 = vpow.pop %v2276
    %v2278 = vmul.f32 %v2255, 1.442695
    %v2279 = vpow.pop %v2278
    %v2280 = vmul.f32 %v2256, 1.442695
    %v2281 = vpow.pop %v2280
    %v2282 = vmul.f32 %v2257, 1.442695
    %v2283 = vpow.pop %v2282
    %v2284 = vmul.f32 %v2258, 1.442695
    %v2285 = vpow.pop %v2284
    %v2286 = vmul.f32 %v2259, 1.442695
    %v2287 = vpow.pop %v2286
    %v2288 = vmul.f32 %v2260, 1.442695
    %v2289 = vpow.pop %v2288
    %v2290 = vmul.f32 %v2261, 1.442695
    %v2291 = vpow.pop %v2290
    %v2292 = vmul.f32 %v2262, 1.442695
    %v2293 = vpow.pop %v2292
    %v2294 = vmul.f32 %v2263, 1.442695
    %v2295 = vpow.pop %v2294
    %v2296 = vmul.f32 %v2264, 1.442695
    %v2297 = vpow.pop %v2296
    %v2298 = vmul.f32 %v2265, 1.442695
    %v2299 = vpow.pop %v2298
    %v2300 = vmul.f32 %v2266, 1.442695
    %v2301 = vpow.pop %v2300
    %v2302 = vmul.f32 %v2267, 1.442695
    %v2303 = vpow.pop %v2302
    %v2304 = vmul.f32 %v2268, 1.442695
    %v2305 = vpow.pop %v2304
    %v2306 = vmul.f32 %v2269, 1.442695
    %v2307 = vpow.pop %v2306
    %v2308 = vmul.f32 %v2270, 1.442695
    %v2309 = vpow.pop %v2308
    %v2310 = vmul.f32 %v2271, 1.442695
    %v2311 = vpow.pop %v2310
    %v2312 = vsel %vm2191, %v2273, 0.0
    %2313 = vadd.xlane.f32.xlu0 %v2312
    %v2314 = vpop.xlane.xlu0 %2313
    %v2315 = vsel %vm2191, %v2275, 0.0
    %2316 = vadd.xlane.f32.xlu0 %v2315
    %v2317 = vpop.xlane.xlu0 %2316
    %v2318 = vsel %vm2191, %v2277, 0.0
    %2319 = vadd.xlane.f32.xlu0 %v2318
    %v2320 = vpop.xlane.xlu0 %2319
    %v2321 = vsel %vm2191, %v2279, 0.0
    %2322 = vadd.xlane.f32.xlu0 %v2321
    %v2323 = vpop.xlane.xlu0 %2322
    %v2324 = vsel %vm2191, %v2281, 0.0
    %2325 = vadd.xlane.f32.xlu0 %v2324
    %v2326 = vpop.xlane.xlu0 %2325
    %v2327 = vsel %vm2191, %v2283, 0.0
    %2328 = vadd.xlane.f32.xlu0 %v2327
    %v2329 = vpop.xlane.xlu0 %2328
    %v2330 = vsel %vm2191, %v2285, 0.0
    %2331 = vadd.xlane.f32.xlu0 %v2330
    %v2332 = vpop.xlane.xlu0 %2331
    %v2333 = vsel %vm2191, %v2287, 0.0
    %2334 = vadd.xlane.f32.xlu0 %v2333
    %v2335 = vpop.xlane.xlu0 %2334
    %v2336 = vsel %vm2191, %v2289, 0.0
    %2337 = vadd.xlane.f32.xlu0 %v2336
    %v2338 = vpop.xlane.xlu0 %2337
    %v2339 = vsel %vm2191, %v2291, 0.0
    %2340 = vadd.xlane.f32.xlu0 %v2339
    %v2341 = vpop.xlane.xlu0 %2340
    %v2342 = vsel %vm2191, %v2293, 0.0
    %2343 = vadd.xlane.f32.xlu0 %v2342
    %v2344 = vpop.xlane.xlu0 %2343
    %v2345 = vsel %vm2191, %v2295, 0.0
    %2346 = vadd.xlane.f32.xlu0 %v2345
    %v2347 = vpop.xlane.xlu0 %2346
    %v2348 = vsel %vm2191, %v2297, 0.0
    %2349 = vadd.xlane.f32.xlu0 %v2348
    %v2350 = vpop.xlane.xlu0 %2349
    %v2351 = vsel %vm2191, %v2299, 0.0
    %2352 = vadd.xlane.f32.xlu0 %v2351
    %v2353 = vpop.xlane.xlu0 %2352
    %v2354 = vsel %vm2191, %v2301, 0.0
    %2355 = vadd.xlane.f32.xlu0 %v2354
    %v2356 = vpop.xlane.xlu0 %2355
    %v2357 = vsel %vm2191, %v2303, 0.0
    %2358 = vadd.xlane.f32.xlu0 %v2357
    %v2359 = vpop.xlane.xlu0 %2358
    %v2360 = vsel %vm2191, %v2305, 0.0
    %2361 = vadd.xlane.f32.xlu0 %v2360
    %v2362 = vpop.xlane.xlu0 %2361
    %v2363 = vsel %vm2191, %v2307, 0.0
    %2364 = vadd.xlane.f32.xlu0 %v2363
    %v2365 = vpop.xlane.xlu0 %2364
    %v2366 = vsel %vm2191, %v2309, 0.0
    %2367 = vadd.xlane.f32.xlu0 %v2366
    %v2368 = vpop.xlane.xlu0 %2367
    %v2369 = vsel %vm2191, %v2311, 0.0
    %2370 = vadd.xlane.f32.xlu0 %v2369
    %v2371 = vpop.xlane.xlu0 %2370
    %v2372 = vrcp.pop %v2314
    %v2373 = vrcp.pop %v2317
    %v2374 = vrcp.pop %v2320
    %v2375 = vrcp.pop %v2323
    %v2376 = vrcp.pop %v2326
    %v2377 = vrcp.pop %v2329
    %v2378 = vrcp.pop %v2332
    %v2379 = vrcp.pop %v2335
    %v2380 = vrcp.pop %v2338
    %v2381 = vrcp.pop %v2341
    %v2382 = vrcp.pop %v2344
    %v2383 = vrcp.pop %v2347
    %v2384 = vrcp.pop %v2350
    %v2385 = vrcp.pop %v2353
    %v2386 = vrcp.pop %v2356
    %v2387 = vrcp.pop %v2359
    %v2388 = vrcp.pop %v2362
    %v2389 = vrcp.pop %v2365
    %v2390 = vrcp.pop %v2368
    %v2391 = vrcp.pop %v2371
    %v2392 = vmul.f32 %v2273, %v2372
    %v2393 = vmul.f32 %v2275, %v2373
    %v2394 = vmul.f32 %v2277, %v2374
    %v2395 = vmul.f32 %v2279, %v2375
    %v2396 = vmul.f32 %v2281, %v2376
    %v2397 = vmul.f32 %v2283, %v2377
    %v2398 = vmul.f32 %v2285, %v2378
    %v2399 = vmul.f32 %v2287, %v2379
    %v2400 = vmul.f32 %v2289, %v2380
    %v2401 = vmul.f32 %v2291, %v2381
    %v2402 = vmul.f32 %v2293, %v2382
    %v2403 = vmul.f32 %v2295, %v2383
    %v2404 = vmul.f32 %v2297, %v2384
    %v2405 = vmul.f32 %v2299, %v2385
    %v2406 = vmul.f32 %v2301, %v2386
    %v2407 = vmul.f32 %v2303, %v2387
    %v2408 = vmul.f32 %v2305, %v2388
    %v2409 = vmul.f32 %v2307, %v2389
    %v2410 = vmul.f32 %v2309, %v2390
    %v2411 = vmul.f32 %v2311, %v2391
    %2412 = vrot.lane.b32.xlu0 %v1660, 96
    %v2413 = vpop.permute.xlu0 %2412
    %2414 = vrot.lane.b32.xlu0 %v1665, 96
    %v2415 = vpop.permute.xlu0 %2414
    %2416 = vrot.lane.b32.xlu0 %v1670, 96
    %v2417 = vpop.permute.xlu0 %2416
    %2418 = vrot.lane.b32.xlu0 %v1675, 96
    %v2419 = vpop.permute.xlu0 %2418
    %2420 = vrot.lane.b32.xlu0 %v1680, 96
    %v2421 = vpop.permute.xlu0 %2420
    %v2428 = vsel %vm2191, %v2392, 0
    %v2431 = vsel %vm2191, %v2393, 0
    %v2434 = vsel %vm2191, %v2394, 0
    %v2437 = vsel %vm2191, %v2395, 0
    %v2440 = vsel %vm2191, %v2396, 0
    %v2443 = vsel %vm2191, %v2397, 0
    %v2446 = vsel %vm2191, %v2398, 0
    %v2449 = vsel %vm2191, %v2399, 0
    %v2452 = vsel %vm2191, %v2400, 0
    %v2455 = vsel %vm2191, %v2401, 0
    %v2458 = vsel %vm2191, %v2402, 0
    %v2461 = vsel %vm2191, %v2403, 0
    %v2464 = vsel %vm2191, %v2404, 0
    %v2467 = vsel %vm2191, %v2405, 0
    %v2470 = vsel %vm2191, %v2406, 0
    %v2473 = vsel %vm2191, %v2407, 0
    %v2476 = vsel %vm2191, %v2408, 0
    %v2479 = vsel %vm2191, %v2409, 0
    %v2482 = vsel %vm2191, %v2410, 0
    %v2485 = vsel %vm2191, %v2411, 0
    %2487 = vmatprep.subr.mxu0 0.0
    %2488 = vmatpush1.msra.mxu0 %v2413
    %2489 = vmatprep.subr.mxu0 0.0
    %2490 = vmatpush1.msra.mxu0 %v2415
    %2491 = vmatprep.subr.mxu0 0.0
    %2492 = vmatpush1.msra.mxu0 %v2417
    %2493 = vmatprep.subr.mxu0 0.0
    %2494 = vmatpush1.msra.mxu0 %v2419
    %2495 = vmatprep.subr.mxu0 0.0
    %2496 = vmatpush1.msra.mxu0 %v2421
    %2497 = vmatprep.subr.mxu0 0.0
    %2498 = vmatpush1.msra.mxu0 0.0
    %2499 = vmatprep.subr.mxu0 0.0
    %2500 = vmatpush1.msra.mxu0 0.0
    %2501 = vmatprep.subr.mxu0 0.0
    %2502 = vmatpush1.msra.mxu0 0.0
    %2503 = vmatprep.subr.mxu0 0.0
    %2504 = vmatpush1.msra.mxu0 0.0
    %2505 = vmatprep.subr.mxu0 0.0
    %2506 = vmatpush1.msra.mxu0 0.0
    %2507 = vmatprep.subr.mxu0 0.0
    %2508 = vmatpush1.msra.mxu0 0.0
    %2509 = vmatprep.subr.mxu0 0.0
    %2510 = vmatpush1.msra.mxu0 0.0
    %2511 = vmatprep.subr.mxu0 0.0
    %2512 = vmatpush1.msra.mxu0 0.0
    %2513 = vmatprep.subr.mxu0 0.0
    %2514 = vmatpush1.msra.mxu0 0.0
    %2515 = vmatprep.subr.mxu0 0.0
    %2516 = vmatpush1.msra.mxu0 0.0
    %2517 = vmatprep.subr.mxu0 0.0
    %2518 = vmatpush1.msra.mxu0 0.0
    %2519 = vmatprep.subr.mxu0 0.0
    %2520 = vmatpush1.msra.mxu0 0.0
    %2521 = vmatprep.subr.mxu0 0.0
    %2522 = vmatpush1.msra.mxu0 0.0
    %2523 = vmatprep.subr.mxu0 0.0
    %2524 = vmatpush1.msra.mxu0 0.0
    %2525 = vmatprep.subr.mxu0 0.0
    %2526 = vmatpush1.msra.mxu0 0.0
    %2527 = vmatprep.subr.mxu0 0.0
    %2528 = vmatpush1.msra.mxu0 0.0
    %2529 = vmatprep.subr.mxu0 0.0
    %2530 = vmatpush1.msra.mxu0 0.0
    %2531 = vmatprep.subr.mxu0 0.0
    %2532 = vmatpush1.msra.mxu0 0.0
    %2533 = vmatprep.subr.mxu0 0.0
    %2534 = vmatpush1.msra.mxu0 0.0
    %2535 = vmatprep.subr.mxu0 0.0
    %2536 = vmatpush1.msra.mxu0 0.0
    %2537 = vmatprep.subr.mxu0 0.0
    %2538 = vmatpush1.msra.mxu0 0.0
    %2539 = vmatprep.subr.mxu0 0.0
    %2540 = vmatpush1.msra.mxu0 0.0
    %2541 = vmatprep.subr.mxu0 0.0
    %2542 = vmatpush1.msra.mxu0 0.0
    %2543 = vmatprep.subr.mxu0 0.0
    %2544 = vmatpush1.msra.mxu0 0.0
    %2545 = vmatprep.subr.mxu0 0.0
    %2546 = vmatpush1.msra.mxu0 0.0
    %2547 = vmatprep.subr.mxu0 0.0
    %2548 = vmatpush1.msra.mxu0 0.0
    %2549 = vmatprep.subr.mxu0 0.0
    %2550 = vmatpush1.msra.mxu0 0.0
    %2551 = vmatprep.mubr.f32.mxu0 0.0
    %2552 = vmatmul.mubr.f32.gmra.mrb[0].mxu0 %v2428
    %v2553 = vpop.f32.mrb[0].mxu0
    %v2554 = vadd.f32 0.0, %v2553
    %v2555 = vpop.f32.mrb[0].mxu0
    %2556 = vmatprep.mubr.f32.mxu0 0.0
    %2557 = vmatmul.mubr.f32.gmra.mrb[0].mxu0 %v2431
    %v2558 = vpop.f32.mrb[0].mxu0
    %v2559 = vadd.f32 0.0, %v2558
    %v2560 = vpop.f32.mrb[0].mxu0
    %2561 = vmatprep.mubr.f32.mxu0 0.0
    %2562 = vmatmul.mubr.f32.gmra.mrb[0].mxu0 %v2434
    %v2563 = vpop.f32.mrb[0].mxu0
    %v2564 = vadd.f32 0.0, %v2563
    %v2565 = vpop.f32.mrb[0].mxu0
    %2566 = vmatprep.mubr.f32.mxu0 0.0
    %2567 = vmatmul.mubr.f32.gmra.mrb[0].mxu0 %v2437
    %v2568 = vpop.f32.mrb[0].mxu0
    %v2569 = vadd.f32 0.0, %v2568
    %v2570 = vpop.f32.mrb[0].mxu0
    %2571 = vmatprep.mubr.f32.mxu0 0.0
    %2572 = vmatmul.mubr.f32.gmra.mrb[0].mxu0 %v2440
    %v2573 = vpop.f32.mrb[0].mxu0
    %v2574 = vadd.f32 0.0, %v2573
    %v2575 = vpop.f32.mrb[0].mxu0
    %2576 = vmatprep.mubr.f32.mxu0 0.0
    %2577 = vmatmul.mubr.f32.gmra.mrb[0].mxu0 %v2443
    %v2578 = vpop.f32.mrb[0].mxu0
    %v2579 = vadd.f32 0.0, %v2578
    %v2580 = vpop.f32.mrb[0].mxu0
    %2581 = vmatprep.mubr.f32.mxu0 0.0
    %2582 = vmatmul.mubr.f32.gmra.mrb[0].mxu0 %v2446
    %v2583 = vpop.f32.mrb[0].mxu0
    %v2584 = vadd.f32 0.0, %v2583
    %v2585 = vpop.f32.mrb[0].mxu0
    %2586 = vmatprep.mubr.f32.mxu0 0.0
    %2587 = vmatmul.mubr.f32.gmra.mrb[0].mxu0 %v2449
    %v2588 = vpop.f32.mrb[0].mxu0
    %v2589 = vadd.f32 0.0, %v2588
    %v2590 = vpop.f32.mrb[0].mxu0
    %2591 = vmatprep.mubr.f32.mxu0 0.0
    %2592 = vmatmul.mubr.f32.gmra.mrb[0].mxu0 %v2452
    %v2593 = vpop.f32.mrb[0].mxu0
    %v2594 = vadd.f32 0.0, %v2593
    %v2595 = vpop.f32.mrb[0].mxu0
    %2596 = vmatprep.mubr.f32.mxu0 0.0
    %2597 = vmatmul.mubr.f32.gmra.mrb[0].mxu0 %v2455
    %v2598 = vpop.f32.mrb[0].mxu0
    %v2599 = vadd.f32 0.0, %v2598
    %v2600 = vpop.f32.mrb[0].mxu0
    %2601 = vmatprep.mubr.f32.mxu0 0.0
    %2602 = vmatmul.mubr.f32.gmra.mrb[0].mxu0 %v2458
    %v2603 = vpop.f32.mrb[0].mxu0
    %v2604 = vadd.f32 0.0, %v2603
    %v2605 = vpop.f32.mrb[0].mxu0
    %2606 = vmatprep.mubr.f32.mxu0 0.0
    %2607 = vmatmul.mubr.f32.gmra.mrb[0].mxu0 %v2461
    %v2608 = vpop.f32.mrb[0].mxu0
    %v2609 = vadd.f32 0.0, %v2608
    %v2610 = vpop.f32.mrb[0].mxu0
    %2611 = vmatprep.mubr.f32.mxu0 0.0
    %2612 = vmatmul.mubr.f32.gmra.mrb[0].mxu0 %v2464
    %v2613 = vpop.f32.mrb[0].mxu0
    %v2614 = vadd.f32 0.0, %v2613
    %v2615 = vpop.f32.mrb[0].mxu0
    %2616 = vmatprep.mubr.f32.mxu0 0.0
    %2617 = vmatmul.mubr.f32.gmra.mrb[0].mxu0 %v2467
    %v2618 = vpop.f32.mrb[0].mxu0
    %v2619 = vadd.f32 0.0, %v2618
    %v2620 = vpop.f32.mrb[0].mxu0
    %2621 = vmatprep.mubr.f32.mxu0 0.0
    %2622 = vmatmul.mubr.f32.gmra.mrb[0].mxu0 %v2470
    %v2623 = vpop.f32.mrb[0].mxu0
    %v2624 = vadd.f32 0.0, %v2623
    %v2625 = vpop.f32.mrb[0].mxu0
    %2626 = vmatprep.mubr.f32.mxu0 0.0
    %2627 = vmatmul.mubr.f32.gmra.mrb[0].mxu0 %v2473
    %v2628 = vpop.f32.mrb[0].mxu0
    %v2629 = vadd.f32 0.0, %v2628
    %v2630 = vpop.f32.mrb[0].mxu0
    %2631 = vmatprep.mubr.f32.mxu0 0.0
    %2632 = vmatmul.mubr.f32.gmra.mrb[0].mxu0 %v2476
    %v2633 = vpop.f32.mrb[0].mxu0
    %v2634 = vadd.f32 0.0, %v2633
    %v2635 = vpop.f32.mrb[0].mxu0
    %2636 = vmatprep.mubr.f32.mxu0 0.0
    %2637 = vmatmul.mubr.f32.gmra.mrb[0].mxu0 %v2479
    %v2638 = vpop.f32.mrb[0].mxu0
    %v2639 = vadd.f32 0.0, %v2638
    %v2640 = vpop.f32.mrb[0].mxu0
    %2641 = vmatprep.mubr.f32.mxu0 0.0
    %2642 = vmatmul.mubr.f32.gmra.mrb[0].mxu0 %v2482
    %v2643 = vpop.f32.mrb[0].mxu0
    %v2644 = vadd.f32 0.0, %v2643
    %v2645 = vpop.f32.mrb[0].mxu0
    %2646 = vmatprep.mubr.f32.mxu0 0.0
    %2647 = vmatmul.mubr.f32.gmra.mrb[0].mxu0 %v2485
    %v2648 = vpop.f32.mrb[0].mxu0
    %v2649 = vadd.f32 0.0, %v2648
    %v2650 = vpop.f32.mrb[0].mxu0
    %2651 = vdwg.mxu0
    %2652 = vrot.lane.b32.xlu0 %v1476, 120
    %v2653 = vpop.permute.xlu0 %2652
    %2654 = vrot.lane.b32.xlu0 %v1481, 120
    %v2655 = vpop.permute.xlu0 %2654
    %2656 = vrot.lane.b32.xlu0 %v1486, 120
    %v2657 = vpop.permute.xlu0 %2656
    %2658 = vrot.lane.b32.xlu0 %v1491, 120
    %v2659 = vpop.permute.xlu0 %2658
    %2660 = vrot.lane.b32.xlu0 %v1496, 120
    %v2661 = vpop.permute.xlu0 %2660
    %2662 = vrot.lane.b32.xlu0 %v1501, 120
    %v2663 = vpop.permute.xlu0 %2662
    %2664 = vrot.lane.b32.xlu0 %v1506, 120
    %v2665 = vpop.permute.xlu0 %2664
    %2666 = vrot.lane.b32.xlu0 %v1511, 120
    %v2667 = vpop.permute.xlu0 %2666
    %2668 = vrot.lane.b32.xlu0 %v1516, 120
    %v2669 = vpop.permute.xlu0 %2668
    %2670 = vrot.lane.b32.xlu0 %v1521, 120
    %v2671 = vpop.permute.xlu0 %2670
    %2672 = vrot.lane.b32.xlu0 %v1526, 120
    %v2673 = vpop.permute.xlu0 %2672
    %2674 = vrot.lane.b32.xlu0 %v1531, 120
    %v2675 = vpop.permute.xlu0 %2674
    %2676 = vrot.lane.b32.xlu0 %v1536, 120
    %v2677 = vpop.permute.xlu0 %2676
    %2678 = vrot.lane.b32.xlu0 %v1541, 120
    %v2679 = vpop.permute.xlu0 %2678
    %2680 = vrot.lane.b32.xlu0 %v1546, 120
    %v2681 = vpop.permute.xlu0 %2680
    %2682 = vrot.lane.b32.xlu0 %v1551, 120
    %v2683 = vpop.permute.xlu0 %2682
    %2684 = vrot.lane.b32.xlu0 %v1556, 120
    %v2685 = vpop.permute.xlu0 %2684
    %2686 = vrot.lane.b32.xlu0 %v1561, 120
    %v2687 = vpop.permute.xlu0 %2686
    %2688 = vrot.lane.b32.xlu0 %v1566, 120
    %v2689 = vpop.permute.xlu0 %2688
    %2690 = vrot.lane.b32.xlu0 %v1571, 120
    %v2691 = vpop.permute.xlu0 %2690
    %2692 = vrot.lane.b32.xlu0 %v1660, 120
    %v2693 = vpop.permute.xlu0 %2692
    %2694 = vrot.lane.b32.xlu0 %v1665, 120
    %v2695 = vpop.permute.xlu0 %2694
    %2696 = vrot.lane.b32.xlu0 %v1670, 120
    %v2697 = vpop.permute.xlu0 %2696
    %2698 = vrot.lane.b32.xlu0 %v1675, 120
    %v2699 = vpop.permute.xlu0 %2698
    %2700 = vrot.lane.b32.xlu0 %v1680, 120
    %v2701 = vpop.permute.xlu0 %2700
    %v2702 = vsel %vm1950, %v2653, 0
    %v2704 = vsel %vm1950, %v2655, 0
    %v2706 = vsel %vm1950, %v2657, 0
    %v2708 = vsel %vm1950, %v2659, 0
    %v2710 = vsel %vm1950, %v2661, 0
    %v2712 = vsel %vm1950, %v2663, 0
    %v2714 = vsel %vm1950, %v2665, 0
    %v2716 = vsel %vm1950, %v2667, 0
    %v2718 = vsel %vm1950, %v2669, 0
    %v2720 = vsel %vm1950, %v2671, 0
    %v2722 = vsel %vm1950, %v2673, 0
    %v2724 = vsel %vm1950, %v2675, 0
    %v2726 = vsel %vm1950, %v2677, 0
    %v2728 = vsel %vm1950, %v2679, 0
    %v2730 = vsel %vm1950, %v2681, 0
    %v2732 = vsel %vm1950, %v2683, 0
    %v2734 = vsel %vm1950, %v2685, 0
    %v2736 = vsel %vm1950, %v2687, 0
    %v2738 = vsel %vm1950, %v2689, 0
    %v2740 = vsel %vm1950, %v2691, 0
    %v2742 = vsel %vm1950, %v2693, 0
    %v2744 = vsel %vm1950, %v2695, 0
    %v2746 = vsel %vm1950, %v2697, 0
    %v2748 = vsel %vm1950, %v2699, 0
    %v2750 = vsel %vm1950, %v2701, 0
    %2752 = vmatprep.subr.mxu0 0.0
    %2753 = vmatpush1.xpose.msra.mxu0 %v2742
    %2754 = vmatprep.subr.mxu0 0.0
    %2755 = vmatpush1.xpose.msra.mxu0 %v2744
    %2756 = vmatprep.subr.mxu0 0.0
    %2757 = vmatpush1.xpose.msra.mxu0 %v2746
    %2758 = vmatprep.subr.mxu0 0.0
    %2759 = vmatpush1.xpose.msra.mxu0 %v2748
    %2760 = vmatprep.subr.mxu0 0.0
    %2761 = vmatpush1.xpose.msra.mxu0 %v2750
    %2762 = vmatprep.subr.mxu0 0.0
    %2763 = vmatpush1.xpose.msra.mxu0 0.0
    %2764 = vmatprep.subr.mxu0 0.0
    %2765 = vmatpush1.xpose.msra.mxu0 0.0
    %2766 = vmatprep.subr.mxu0 0.0
    %2767 = vmatpush1.xpose.msra.mxu0 0.0
    %2768 = vmatprep.subr.mxu0 0.0
    %2769 = vmatpush1.xpose.msra.mxu0 0.0
    %2770 = vmatprep.subr.mxu0 0.0
    %2771 = vmatpush1.xpose.msra.mxu0 0.0
    %2772 = vmatprep.subr.mxu0 0.0
    %2773 = vmatpush1.xpose.msra.mxu0 0.0
    %2774 = vmatprep.subr.mxu0 0.0
    %2775 = vmatpush1.xpose.msra.mxu0 0.0
    %2776 = vmatprep.subr.mxu0 0.0
    %2777 = vmatpush1.xpose.msra.mxu0 0.0
    %2778 = vmatprep.subr.mxu0 0.0
    %2779 = vmatpush1.xpose.msra.mxu0 0.0
    %2780 = vmatprep.subr.mxu0 0.0
    %2781 = vmatpush1.xpose.msra.mxu0 0.0
    %2782 = vmatprep.subr.mxu0 0.0
    %2783 = vmatpush1.xpose.msra.mxu0 0.0
    %2784 = vmatprep.subr.mxu0 0.0
    %2785 = vmatpush1.xpose.msra.mxu0 0.0
    %2786 = vmatprep.subr.mxu0 0.0
    %2787 = vmatpush1.xpose.msra.mxu0 0.0
    %2788 = vmatprep.subr.mxu0 0.0
    %2789 = vmatpush1.xpose.msra.mxu0 0.0
    %2790 = vmatprep.subr.mxu0 0.0
    %2791 = vmatpush1.xpose.msra.mxu0 0.0
    %2792 = vmatprep.subr.mxu0 0.0
    %2793 = vmatpush1.xpose.msra.mxu0 0.0
    %2794 = vmatprep.subr.mxu0 0.0
    %2795 = vmatpush1.xpose.msra.mxu0 0.0
    %2796 = vmatprep.subr.mxu0 0.0
    %2797 = vmatpush1.xpose.msra.mxu0 0.0
    %2798 = vmatprep.subr.mxu0 0.0
    %2799 = vmatpush1.xpose.msra.mxu0 0.0
    %2800 = vmatprep.subr.mxu0 0.0
    %2801 = vmatpush1.xpose.msra.mxu0 0.0
    %2802 = vmatprep.subr.mxu0 0.0
    %2803 = vmatpush1.xpose.msra.mxu0 0.0
    %2804 = vmatprep.subr.mxu0 0.0
    %2805 = vmatpush1.xpose.msra.mxu0 0.0
    %2806 = vmatprep.subr.mxu0 0.0
    %2807 = vmatpush1.xpose.msra.mxu0 0.0
    %2808 = vmatprep.subr.mxu0 0.0
    %2809 = vmatpush1.xpose.msra.mxu0 0.0
    %2810 = vmatprep.subr.mxu0 0.0
    %2811 = vmatpush1.xpose.msra.mxu0 0.0
    %2812 = vmatprep.subr.mxu0 0.0
    %2813 = vmatpush1.xpose.msra.mxu0 0.0
    %2814 = vmatprep.subr.mxu0 0.0
    %2815 = vmatpush1.xpose.msra.mxu0 0.0
    %2816 = vmatprep.mubr.f32.mxu0 0.0
    %2817 = vmatmul.mubr.f32.gmra.mrb[0].mxu0 %v2702
    %v2818 = vpop.f32.mrb[0].mxu0
    %v2819 = vadd.f32 %v1930, %v2818
    %v2820 = vpop.f32.mrb[0].mxu0
    %2821 = vmatprep.mubr.f32.mxu0 0.0
    %2822 = vmatmul.mubr.f32.gmra.mrb[0].mxu0 %v2704
    %v2823 = vpop.f32.mrb[0].mxu0
    %v2824 = vadd.f32 %v1931, %v2823
    %v2825 = vpop.f32.mrb[0].mxu0
    %2826 = vmatprep.mubr.f32.mxu0 0.0
    %2827 = vmatmul.mubr.f32.gmra.mrb[0].mxu0 %v2706
    %v2828 = vpop.f32.mrb[0].mxu0
    %v2829 = vadd.f32 %v1932, %v2828
    %v2830 = vpop.f32.mrb[0].mxu0
    %2831 = vmatprep.mubr.f32.mxu0 0.0
    %2832 = vmatmul.mubr.f32.gmra.mrb[0].mxu0 %v2708
    %v2833 = vpop.f32.mrb[0].mxu0
    %v2834 = vadd.f32 %v1933, %v2833
    %v2835 = vpop.f32.mrb[0].mxu0
    %2836 = vmatprep.mubr.f32.mxu0 0.0
    %2837 = vmatmul.mubr.f32.gmra.mrb[0].mxu0 %v2710
    %v2838 = vpop.f32.mrb[0].mxu0
    %v2839 = vadd.f32 %v1934, %v2838
    %v2840 = vpop.f32.mrb[0].mxu0
    %2841 = vmatprep.mubr.f32.mxu0 0.0
    %2842 = vmatmul.mubr.f32.gmra.mrb[0].mxu0 %v2712
    %v2843 = vpop.f32.mrb[0].mxu0
    %v2844 = vadd.f32 %v1935, %v2843
    %v2845 = vpop.f32.mrb[0].mxu0
    %2846 = vmatprep.mubr.f32.mxu0 0.0
    %2847 = vmatmul.mubr.f32.gmra.mrb[0].mxu0 %v2714
    %v2848 = vpop.f32.mrb[0].mxu0
    %v2849 = vadd.f32 %v1936, %v2848
    %v2850 = vpop.f32.mrb[0].mxu0
    %2851 = vmatprep.mubr.f32.mxu0 0.0
    %2852 = vmatmul.mubr.f32.gmra.mrb[0].mxu0 %v2716
    %v2853 = vpop.f32.mrb[0].mxu0
    %v2854 = vadd.f32 %v1937, %v2853
    %v2855 = vpop.f32.mrb[0].mxu0
    %2856 = vmatprep.mubr.f32.mxu0 0.0
    %2857 = vmatmul.mubr.f32.gmra.mrb[0].mxu0 %v2718
    %v2858 = vpop.f32.mrb[0].mxu0
    %v2859 = vadd.f32 %v1938, %v2858
    %v2860 = vpop.f32.mrb[0].mxu0
    %2861 = vmatprep.mubr.f32.mxu0 0.0
    %2862 = vmatmul.mubr.f32.gmra.mrb[0].mxu0 %v2720
    %v2863 = vpop.f32.mrb[0].mxu0
    %v2864 = vadd.f32 %v1939, %v2863
    %v2865 = vpop.f32.mrb[0].mxu0
    %2866 = vmatprep.mubr.f32.mxu0 0.0
    %2867 = vmatmul.mubr.f32.gmra.mrb[0].mxu0 %v2722
    %v2868 = vpop.f32.mrb[0].mxu0
    %v2869 = vadd.f32 %v1940, %v2868
    %v2870 = vpop.f32.mrb[0].mxu0
    %2871 = vmatprep.mubr.f32.mxu0 0.0
    %2872 = vmatmul.mubr.f32.gmra.mrb[0].mxu0 %v2724
    %v2873 = vpop.f32.mrb[0].mxu0
    %v2874 = vadd.f32 %v1941, %v2873
    %v2875 = vpop.f32.mrb[0].mxu0
    %2876 = vmatprep.mubr.f32.mxu0 0.0
    %2877 = vmatmul.mubr.f32.gmra.mrb[0].mxu0 %v2726
    %v2878 = vpop.f32.mrb[0].mxu0
    %v2879 = vadd.f32 %v1942, %v2878
    %v2880 = vpop.f32.mrb[0].mxu0
    %2881 = vmatprep.mubr.f32.mxu0 0.0
    %2882 = vmatmul.mubr.f32.gmra.mrb[0].mxu0 %v2728
    %v2883 = vpop.f32.mrb[0].mxu0
    %v2884 = vadd.f32 %v1943, %v2883
    %v2885 = vpop.f32.mrb[0].mxu0
    %2886 = vmatprep.mubr.f32.mxu0 0.0
    %2887 = vmatmul.mubr.f32.gmra.mrb[0].mxu0 %v2730
    %v2888 = vpop.f32.mrb[0].mxu0
    %v2889 = vadd.f32 %v1944, %v2888
    %v2890 = vpop.f32.mrb[0].mxu0
    %2891 = vmatprep.mubr.f32.mxu0 0.0
    %2892 = vmatmul.mubr.f32.gmra.mrb[0].mxu0 %v2732
    %v2893 = vpop.f32.mrb[0].mxu0
    %v2894 = vadd.f32 %v1945, %v2893
    %v2895 = vpop.f32.mrb[0].mxu0
    %2896 = vmatprep.mubr.f32.mxu0 0.0
    %2897 = vmatmul.mubr.f32.gmra.mrb[0].mxu0 %v2734
    %v2898 = vpop.f32.mrb[0].mxu0
    %v2899 = vadd.f32 %v1946, %v2898
    %v2900 = vpop.f32.mrb[0].mxu0
    %2901 = vmatprep.mubr.f32.mxu0 0.0
    %2902 = vmatmul.mubr.f32.gmra.mrb[0].mxu0 %v2736
    %v2903 = vpop.f32.mrb[0].mxu0
    %v2904 = vadd.f32 %v1947, %v2903
    %v2905 = vpop.f32.mrb[0].mxu0
    %2906 = vmatprep.mubr.f32.mxu0 0.0
    %2907 = vmatmul.mubr.f32.gmra.mrb[0].mxu0 %v2738
    %v2908 = vpop.f32.mrb[0].mxu0
    %v2909 = vadd.f32 %v1948, %v2908
    %v2910 = vpop.f32.mrb[0].mxu0
    %2911 = vmatprep.mubr.f32.mxu0 0.0
    %2912 = vmatmul.mubr.f32.gmra.mrb[0].mxu0 %v2740
    %v2913 = vpop.f32.mrb[0].mxu0
    %v2914 = vadd.f32 %v1949, %v2913
    %v2915 = vpop.f32.mrb[0].mxu0
    %2916 = vdwg.mxu0
    %v2917 = vsel %vm2191, %v2819, -inf
    %2918 = vmax.xlane.f32.xlu0 %v2917
    %v2919 = vpop.xlane.xlu0 %2918
    %v2920 = vsel %vm2191, %v2824, -inf
    %2921 = vmax.xlane.f32.xlu0 %v2920
    %v2922 = vpop.xlane.xlu0 %2921
    %v2923 = vsel %vm2191, %v2829, -inf
    %2924 = vmax.xlane.f32.xlu0 %v2923
    %v2925 = vpop.xlane.xlu0 %2924
    %v2926 = vsel %vm2191, %v2834, -inf
    %2927 = vmax.xlane.f32.xlu0 %v2926
    %v2928 = vpop.xlane.xlu0 %2927
    %v2929 = vsel %vm2191, %v2839, -inf
    %2930 = vmax.xlane.f32.xlu0 %v2929
    %v2931 = vpop.xlane.xlu0 %2930
    %v2932 = vsel %vm2191, %v2844, -inf
    %2933 = vmax.xlane.f32.xlu0 %v2932
    %v2934 = vpop.xlane.xlu0 %2933
    %v2935 = vsel %vm2191, %v2849, -inf
    %2936 = vmax.xlane.f32.xlu0 %v2935
    %v2937 = vpop.xlane.xlu0 %2936
    %v2938 = vsel %vm2191, %v2854, -inf
    %2939 = vmax.xlane.f32.xlu0 %v2938
    %v2940 = vpop.xlane.xlu0 %2939
    %v2941 = vsel %vm2191, %v2859, -inf
    %2942 = vmax.xlane.f32.xlu0 %v2941
    %v2943 = vpop.xlane.xlu0 %2942
    %v2944 = vsel %vm2191, %v2864, -inf
    %2945 = vmax.xlane.f32.xlu0 %v2944
    %v2946 = vpop.xlane.xlu0 %2945
    %v2947 = vsel %vm2191, %v2869, -inf
    %2948 = vmax.xlane.f32.xlu0 %v2947
    %v2949 = vpop.xlane.xlu0 %2948
    %v2950 = vsel %vm2191, %v2874, -inf
    %2951 = vmax.xlane.f32.xlu0 %v2950
    %v2952 = vpop.xlane.xlu0 %2951
    %v2953 = vsel %vm2191, %v2879, -inf
    %2954 = vmax.xlane.f32.xlu0 %v2953
    %v2955 = vpop.xlane.xlu0 %2954
    %v2956 = vsel %vm2191, %v2884, -inf
    %2957 = vmax.xlane.f32.xlu0 %v2956
    %v2958 = vpop.xlane.xlu0 %2957
    %v2959 = vsel %vm2191, %v2889, -inf
    %2960 = vmax.xlane.f32.xlu0 %v2959
    %v2961 = vpop.xlane.xlu0 %2960
    %v2962 = vsel %vm2191, %v2894, -inf
    %2963 = vmax.xlane.f32.xlu0 %v2962
    %v2964 = vpop.xlane.xlu0 %2963
    %v2965 = vsel %vm2191, %v2899, -inf
    %2966 = vmax.xlane.f32.xlu0 %v2965
    %v2967 = vpop.xlane.xlu0 %2966
    %v2968 = vsel %vm2191, %v2904, -inf
    %2969 = vmax.xlane.f32.xlu0 %v2968
    %v2970 = vpop.xlane.xlu0 %2969
    %v2971 = vsel %vm2191, %v2909, -inf
    %2972 = vmax.xlane.f32.xlu0 %v2971
    %v2973 = vpop.xlane.xlu0 %2972
    %v2974 = vsel %vm2191, %v2914, -inf
    %2975 = vmax.xlane.f32.xlu0 %v2974
    %v2976 = vpop.xlane.xlu0 %2975
    %v2977 = vsub.f32 %v2819, %v2919
    %v2978 = vsub.f32 %v2824, %v2922
    %v2979 = vsub.f32 %v2829, %v2925
    %v2980 = vsub.f32 %v2834, %v2928
    %v2981 = vsub.f32 %v2839, %v2931
    %v2982 = vsub.f32 %v2844, %v2934
    %v2983 = vsub.f32 %v2849, %v2937
    %v2984 = vsub.f32 %v2854, %v2940
    %v2985 = vsub.f32 %v2859, %v2943
    %v2986 = vsub.f32 %v2864, %v2946
    %v2987 = vsub.f32 %v2869, %v2949
    %v2988 = vsub.f32 %v2874, %v2952
    %v2989 = vsub.f32 %v2879, %v2955
    %v2990 = vsub.f32 %v2884, %v2958
    %v2991 = vsub.f32 %v2889, %v2961
    %v2992 = vsub.f32 %v2894, %v2964
    %v2993 = vsub.f32 %v2899, %v2967
    %v2994 = vsub.f32 %v2904, %v2970
    %v2995 = vsub.f32 %v2909, %v2973
    %v2996 = vsub.f32 %v2914, %v2976
    %v2997 = vmul.f32 %v2977, 1.442695
    %v2998 = vpow.pop %v2997
    %v2999 = vmul.f32 %v2978, 1.442695
    %v3000 = vpow.pop %v2999
    %v3001 = vmul.f32 %v2979, 1.442695
    %v3002 = vpow.pop %v3001
    %v3003 = vmul.f32 %v2980, 1.442695
    %v3004 = vpow.pop %v3003
    %v3005 = vmul.f32 %v2981, 1.442695
    %v3006 = vpow.pop %v3005
    %v3007 = vmul.f32 %v2982, 1.442695
    %v3008 = vpow.pop %v3007
    %v3009 = vmul.f32 %v2983, 1.442695
    %v3010 = vpow.pop %v3009
    %v3011 = vmul.f32 %v2984, 1.442695
    %v3012 = vpow.pop %v3011
    %v3013 = vmul.f32 %v2985, 1.442695
    %v3014 = vpow.pop %v3013
    %v3015 = vmul.f32 %v2986, 1.442695
    %v3016 = vpow.pop %v3015
    %v3017 = vmul.f32 %v2987, 1.442695
    %v3018 = vpow.pop %v3017
    %v3019 = vmul.f32 %v2988, 1.442695
    %v3020 = vpow.pop %v3019
    %v3021 = vmul.f32 %v2989, 1.442695
    %v3022 = vpow.pop %v3021
    %v3023 = vmul.f32 %v2990, 1.442695
    %v3024 = vpow.pop %v3023
    %v3025 = vmul.f32 %v2991, 1.442695
    %v3026 = vpow.pop %v3025
    %v3027 = vmul.f32 %v2992, 1.442695
    %v3028 = vpow.pop %v3027
    %v3029 = vmul.f32 %v2993, 1.442695
    %v3030 = vpow.pop %v3029
    %v3031 = vmul.f32 %v2994, 1.442695
    %v3032 = vpow.pop %v3031
    %v3033 = vmul.f32 %v2995, 1.442695
    %v3034 = vpow.pop %v3033
    %v3035 = vmul.f32 %v2996, 1.442695
    %v3036 = vpow.pop %v3035
    %v3037 = vsel %vm2191, %v2998, 0.0
    %3038 = vadd.xlane.f32.xlu0 %v3037
    %v3039 = vpop.xlane.xlu0 %3038
    %v3040 = vsel %vm2191, %v3000, 0.0
    %3041 = vadd.xlane.f32.xlu0 %v3040
    %v3042 = vpop.xlane.xlu0 %3041
    %v3043 = vsel %vm2191, %v3002, 0.0
    %3044 = vadd.xlane.f32.xlu0 %v3043
    %v3045 = vpop.xlane.xlu0 %3044
    %v3046 = vsel %vm2191, %v3004, 0.0
    %3047 = vadd.xlane.f32.xlu0 %v3046
    %v3048 = vpop.xlane.xlu0 %3047
    %v3049 = vsel %vm2191, %v3006, 0.0
    %3050 = vadd.xlane.f32.xlu0 %v3049
    %v3051 = vpop.xlane.xlu0 %3050
    %v3052 = vsel %vm2191, %v3008, 0.0
    %3053 = vadd.xlane.f32.xlu0 %v3052
    %v3054 = vpop.xlane.xlu0 %3053
    %v3055 = vsel %vm2191, %v3010, 0.0
    %3056 = vadd.xlane.f32.xlu0 %v3055
    %v3057 = vpop.xlane.xlu0 %3056
    %v3058 = vsel %vm2191, %v3012, 0.0
    %3059 = vadd.xlane.f32.xlu0 %v3058
    %v3060 = vpop.xlane.xlu0 %3059
    %v3061 = vsel %vm2191, %v3014, 0.0
    %3062 = vadd.xlane.f32.xlu0 %v3061
    %v3063 = vpop.xlane.xlu0 %3062
    %v3064 = vsel %vm2191, %v3016, 0.0
    %3065 = vadd.xlane.f32.xlu0 %v3064
    %v3066 = vpop.xlane.xlu0 %3065
    %v3067 = vsel %vm2191, %v3018, 0.0
    %3068 = vadd.xlane.f32.xlu0 %v3067
    %v3069 = vpop.xlane.xlu0 %3068
    %v3070 = vsel %vm2191, %v3020, 0.0
    %3071 = vadd.xlane.f32.xlu0 %v3070
    %v3072 = vpop.xlane.xlu0 %3071
    %v3073 = vsel %vm2191, %v3022, 0.0
    %3074 = vadd.xlane.f32.xlu0 %v3073
    %v3075 = vpop.xlane.xlu0 %3074
    %v3076 = vsel %vm2191, %v3024, 0.0
    %3077 = vadd.xlane.f32.xlu0 %v3076
    %v3078 = vpop.xlane.xlu0 %3077
    %v3079 = vsel %vm2191, %v3026, 0.0
    %3080 = vadd.xlane.f32.xlu0 %v3079
    %v3081 = vpop.xlane.xlu0 %3080
    %v3082 = vsel %vm2191, %v3028, 0.0
    %3083 = vadd.xlane.f32.xlu0 %v3082
    %v3084 = vpop.xlane.xlu0 %3083
    %v3085 = vsel %vm2191, %v3030, 0.0
    %3086 = vadd.xlane.f32.xlu0 %v3085
    %v3087 = vpop.xlane.xlu0 %3086
    %v3088 = vsel %vm2191, %v3032, 0.0
    %3089 = vadd.xlane.f32.xlu0 %v3088
    %v3090 = vpop.xlane.xlu0 %3089
    %v3091 = vsel %vm2191, %v3034, 0.0
    %3092 = vadd.xlane.f32.xlu0 %v3091
    %v3093 = vpop.xlane.xlu0 %3092
    %v3094 = vsel %vm2191, %v3036, 0.0
    %3095 = vadd.xlane.f32.xlu0 %v3094
    %v3096 = vpop.xlane.xlu0 %3095
    %v3097 = vrcp.pop %v3039
    %v3098 = vrcp.pop %v3042
    %v3099 = vrcp.pop %v3045
    %v3100 = vrcp.pop %v3048
    %v3101 = vrcp.pop %v3051
    %v3102 = vrcp.pop %v3054
    %v3103 = vrcp.pop %v3057
    %v3104 = vrcp.pop %v3060
    %v3105 = vrcp.pop %v3063
    %v3106 = vrcp.pop %v3066
    %v3107 = vrcp.pop %v3069
    %v3108 = vrcp.pop %v3072
    %v3109 = vrcp.pop %v3075
    %v3110 = vrcp.pop %v3078
    %v3111 = vrcp.pop %v3081
    %v3112 = vrcp.pop %v3084
    %v3113 = vrcp.pop %v3087
    %v3114 = vrcp.pop %v3090
    %v3115 = vrcp.pop %v3093
    %v3116 = vrcp.pop %v3096
    %v3117 = vmul.f32 %v2998, %v3097
    %v3118 = vmul.f32 %v3000, %v3098
    %v3119 = vmul.f32 %v3002, %v3099
    %v3120 = vmul.f32 %v3004, %v3100
    %v3121 = vmul.f32 %v3006, %v3101
    %v3122 = vmul.f32 %v3008, %v3102
    %v3123 = vmul.f32 %v3010, %v3103
    %v3124 = vmul.f32 %v3012, %v3104
    %v3125 = vmul.f32 %v3014, %v3105
    %v3126 = vmul.f32 %v3016, %v3106
    %v3127 = vmul.f32 %v3018, %v3107
    %v3128 = vmul.f32 %v3020, %v3108
    %v3129 = vmul.f32 %v3022, %v3109
    %v3130 = vmul.f32 %v3024, %v3110
    %v3131 = vmul.f32 %v3026, %v3111
    %v3132 = vmul.f32 %v3028, %v3112
    %v3133 = vmul.f32 %v3030, %v3113
    %v3134 = vmul.f32 %v3032, %v3114
    %v3135 = vmul.f32 %v3034, %v3115
    %v3136 = vmul.f32 %v3036, %v3116
    %3137 = vrot.lane.b32.xlu0 %v1660, 88
    %v3138 = vpop.permute.xlu0 %3137
    %3139 = vrot.lane.b32.xlu0 %v1665, 88
    %v3140 = vpop.permute.xlu0 %3139
    %3141 = vrot.lane.b32.xlu0 %v1670, 88
    %v3142 = vpop.permute.xlu0 %3141
    %3143 = vrot.lane.b32.xlu0 %v1675, 88
    %v3144 = vpop.permute.xlu0 %3143
    %3145 = vrot.lane.b32.xlu0 %v1680, 88
    %v3146 = vpop.permute.xlu0 %3145
    %v3153 = vsel %vm2191, %v3117, 0
    %v3156 = vsel %vm2191, %v3118, 0
    %v3159 = vsel %vm2191, %v3119, 0
    %v3162 = vsel %vm2191, %v3120, 0
    %v3165 = vsel %vm2191, %v3121, 0
    %v3168 = vsel %vm2191, %v3122, 0
    %v3171 = vsel %vm2191, %v3123, 0
    %v3174 = vsel %vm2191, %v3124, 0
    %v3177 = vsel %vm2191, %v3125, 0
    %v3180 = vsel %vm2191, %v3126, 0
    %v3183 = vsel %vm2191, %v3127, 0
    %v3186 = vsel %vm2191, %v3128, 0
    %v3189 = vsel %vm2191, %v3129, 0
    %v3192 = vsel %vm2191, %v3130, 0
    %v3195 = vsel %vm2191, %v3131, 0
    %v3198 = vsel %vm2191, %v3132, 0
    %v3201 = vsel %vm2191, %v3133, 0
    %v3204 = vsel %vm2191, %v3134, 0
    %v3207 = vsel %vm2191, %v3135, 0
    %v3210 = vsel %vm2191, %v3136, 0
    %3212 = vmatprep.subr.mxu0 0.0
    %3213 = vmatpush1.msra.mxu0 %v3138
    %3214 = vmatprep.subr.mxu0 0.0
    %3215 = vmatpush1.msra.mxu0 %v3140
    %3216 = vmatprep.subr.mxu0 0.0
    %3217 = vmatpush1.msra.mxu0 %v3142
    %3218 = vmatprep.subr.mxu0 0.0
    %3219 = vmatpush1.msra.mxu0 %v3144
    %3220 = vmatprep.subr.mxu0 0.0
    %3221 = vmatpush1.msra.mxu0 %v3146
    %3222 = vmatprep.subr.mxu0 0.0
    %3223 = vmatpush1.msra.mxu0 0.0
    %3224 = vmatprep.subr.mxu0 0.0
    %3225 = vmatpush1.msra.mxu0 0.0
    %3226 = vmatprep.subr.mxu0 0.0
    %3227 = vmatpush1.msra.mxu0 0.0
    %3228 = vmatprep.subr.mxu0 0.0
    %3229 = vmatpush1.msra.mxu0 0.0
    %3230 = vmatprep.subr.mxu0 0.0
    %3231 = vmatpush1.msra.mxu0 0.0
    %3232 = vmatprep.subr.mxu0 0.0
    %3233 = vmatpush1.msra.mxu0 0.0
    %3234 = vmatprep.subr.mxu0 0.0
    %3235 = vmatpush1.msra.mxu0 0.0
    %3236 = vmatprep.subr.mxu0 0.0
    %3237 = vmatpush1.msra.mxu0 0.0
    %3238 = vmatprep.subr.mxu0 0.0
    %3239 = vmatpush1.msra.mxu0 0.0
    %3240 = vmatprep.subr.mxu0 0.0
    %3241 = vmatpush1.msra.mxu0 0.0
    %3242 = vmatprep.subr.mxu0 0.0
    %3243 = vmatpush1.msra.mxu0 0.0
    %3244 = vmatprep.subr.mxu0 0.0
    %3245 = vmatpush1.msra.mxu0 0.0
    %3246 = vmatprep.subr.mxu0 0.0
    %3247 = vmatpush1.msra.mxu0 0.0
    %3248 = vmatprep.subr.mxu0 0.0
    %3249 = vmatpush1.msra.mxu0 0.0
    %3250 = vmatprep.subr.mxu0 0.0
    %3251 = vmatpush1.msra.mxu0 0.0
    %3252 = vmatprep.subr.mxu0 0.0
    %3253 = vmatpush1.msra.mxu0 0.0
    %3254 = vmatprep.subr.mxu0 0.0
    %3255 = vmatpush1.msra.mxu0 0.0
    %3256 = vmatprep.subr.mxu0 0.0
    %3257 = vmatpush1.msra.mxu0 0.0
    %3258 = vmatprep.subr.mxu0 0.0
    %3259 = vmatpush1.msra.mxu0 0.0
    %3260 = vmatprep.subr.mxu0 0.0
    %3261 = vmatpush1.msra.mxu0 0.0
    %3262 = vmatprep.subr.mxu0 0.0
    %3263 = vmatpush1.msra.mxu0 0.0
    %3264 = vmatprep.subr.mxu0 0.0
    %3265 = vmatpush1.msra.mxu0 0.0
    %3266 = vmatprep.subr.mxu0 0.0
    %3267 = vmatpush1.msra.mxu0 0.0
    %3268 = vmatprep.subr.mxu0 0.0
    %3269 = vmatpush1.msra.mxu0 0.0
    %3270 = vmatprep.subr.mxu0 0.0
    %3271 = vmatpush1.msra.mxu0 0.0
    %3272 = vmatprep.subr.mxu0 0.0
    %3273 = vmatpush1.msra.mxu0 0.0
    %3274 = vmatprep.subr.mxu0 0.0
    %3275 = vmatpush1.msra.mxu0 0.0
    %3276 = vmatprep.mubr.f32.mxu0 0.0
    %3277 = vmatmul.mubr.f32.gmra.mrb[0].mxu0 %v3153
    %v3278 = vpop.f32.mrb[0].mxu0
    %v3279 = vadd.f32 0.0, %v3278
    %v3280 = vpop.f32.mrb[0].mxu0
    %3281 = vmatprep.mubr.f32.mxu0 0.0
    %3282 = vmatmul.mubr.f32.gmra.mrb[0].mxu0 %v3156
    %v3283 = vpop.f32.mrb[0].mxu0
    %v3284 = vadd.f32 0.0, %v3283
    %v3285 = vpop.f32.mrb[0].mxu0
    %3286 = vmatprep.mubr.f32.mxu0 0.0
    %3287 = vmatmul.mubr.f32.gmra.mrb[0].mxu0 %v3159
    %v3288 = vpop.f32.mrb[0].mxu0
    %v3289 = vadd.f32 0.0, %v3288
    %v3290 = vpop.f32.mrb[0].mxu0
    %3291 = vmatprep.mubr.f32.mxu0 0.0
    %3292 = vmatmul.mubr.f32.gmra.mrb[0].mxu0 %v3162
    %v3293 = vpop.f32.mrb[0].mxu0
    %v3294 = vadd.f32 0.0, %v3293
    %v3295 = vpop.f32.mrb[0].mxu0
    %3296 = vmatprep.mubr.f32.mxu0 0.0
    %3297 = vmatmul.mubr.f32.gmra.mrb[0].mxu0 %v3165
    %v3298 = vpop.f32.mrb[0].mxu0
    %v3299 = vadd.f32 0.0, %v3298
    %v3300 = vpop.f32.mrb[0].mxu0
    %3301 = vmatprep.mubr.f32.mxu0 0.0
    %3302 = vmatmul.mubr.f32.gmra.mrb[0].mxu0 %v3168
    %v3303 = vpop.f32.mrb[0].mxu0
    %v3304 = vadd.f32 0.0, %v3303
    %v3305 = vpop.f32.mrb[0].mxu0
    %3306 = vmatprep.mubr.f32.mxu0 0.0
    %3307 = vmatmul.mubr.f32.gmra.mrb[0].mxu0 %v3171
    %v3308 = vpop.f32.mrb[0].mxu0
    %v3309 = vadd.f32 0.0, %v3308
    %v3310 = vpop.f32.mrb[0].mxu0
    %3311 = vmatprep.mubr.f32.mxu0 0.0
    %3312 = vmatmul.mubr.f32.gmra.mrb[0].mxu0 %v3174
    %v3313 = vpop.f32.mrb[0].mxu0
    %v3314 = vadd.f32 0.0, %v3313
    %v3315 = vpop.f32.mrb[0].mxu0
    %3316 = vmatprep.mubr.f32.mxu0 0.0
    %3317 = vmatmul.mubr.f32.gmra.mrb[0].mxu0 %v3177
    %v3318 = vpop.f32.mrb[0].mxu0
    %v3319 = vadd.f32 0.0, %v3318
    %v3320 = vpop.f32.mrb[0].mxu0
    %3321 = vmatprep.mubr.f32.mxu0 0.0
    %3322 = vmatmul.mubr.f32.gmra.mrb[0].mxu0 %v3180
    %v3323 = vpop.f32.mrb[0].mxu0
    %v3324 = vadd.f32 0.0, %v3323
    %v3325 = vpop.f32.mrb[0].mxu0
    %3326 = vmatprep.mubr.f32.mxu0 0.0
    %3327 = vmatmul.mubr.f32.gmra.mrb[0].mxu0 %v3183
    %v3328 = vpop.f32.mrb[0].mxu0
    %v3329 = vadd.f32 0.0, %v3328
    %v3330 = vpop.f32.mrb[0].mxu0
    %3331 = vmatprep.mubr.f32.mxu0 0.0
    %3332 = vmatmul.mubr.f32.gmra.mrb[0].mxu0 %v3186
    %v3333 = vpop.f32.mrb[0].mxu0
    %v3334 = vadd.f32 0.0, %v3333
    %v3335 = vpop.f32.mrb[0].mxu0
    %3336 = vmatprep.mubr.f32.mxu0 0.0
    %3337 = vmatmul.mubr.f32.gmra.mrb[0].mxu0 %v3189
    %v3338 = vpop.f32.mrb[0].mxu0
    %v3339 = vadd.f32 0.0, %v3338
    %v3340 = vpop.f32.mrb[0].mxu0
    %3341 = vmatprep.mubr.f32.mxu0 0.0
    %3342 = vmatmul.mubr.f32.gmra.mrb[0].mxu0 %v3192
    %v3343 = vpop.f32.mrb[0].mxu0
    %v3344 = vadd.f32 0.0, %v3343
    %v3345 = vpop.f32.mrb[0].mxu0
    %3346 = vmatprep.mubr.f32.mxu0 0.0
    %3347 = vmatmul.mubr.f32.gmra.mrb[0].mxu0 %v3195
    %v3348 = vpop.f32.mrb[0].mxu0
    %v3349 = vadd.f32 0.0, %v3348
    %v3350 = vpop.f32.mrb[0].mxu0
    %3351 = vmatprep.mubr.f32.mxu0 0.0
    %3352 = vmatmul.mubr.f32.gmra.mrb[0].mxu0 %v3198
    %v3353 = vpop.f32.mrb[0].mxu0
    %v3354 = vadd.f32 0.0, %v3353
    %v3355 = vpop.f32.mrb[0].mxu0
    %3356 = vmatprep.mubr.f32.mxu0 0.0
    %3357 = vmatmul.mubr.f32.gmra.mrb[0].mxu0 %v3201
    %v3358 = vpop.f32.mrb[0].mxu0
    %v3359 = vadd.f32 0.0, %v3358
    %v3360 = vpop.f32.mrb[0].mxu0
    %3361 = vmatprep.mubr.f32.mxu0 0.0
    %3362 = vmatmul.mubr.f32.gmra.mrb[0].mxu0 %v3204
    %v3363 = vpop.f32.mrb[0].mxu0
    %v3364 = vadd.f32 0.0, %v3363
    %v3365 = vpop.f32.mrb[0].mxu0
    %3366 = vmatprep.mubr.f32.mxu0 0.0
    %3367 = vmatmul.mubr.f32.gmra.mrb[0].mxu0 %v3207
    %v3368 = vpop.f32.mrb[0].mxu0
    %v3369 = vadd.f32 0.0, %v3368
    %v3370 = vpop.f32.mrb[0].mxu0
    %3371 = vmatprep.mubr.f32.mxu0 0.0
    %3372 = vmatmul.mubr.f32.gmra.mrb[0].mxu0 %v3210
    %v3373 = vpop.f32.mrb[0].mxu0
    %v3374 = vadd.f32 0.0, %v3373
    %v3375 = vpop.f32.mrb[0].mxu0
    %3376 = vdwg.mxu0
    %3377 = vrot.lane.b32.xlu0 %v1476, 112
    %v3378 = vpop.permute.xlu0 %3377
    %3379 = vrot.lane.b32.xlu0 %v1481, 112
    %v3380 = vpop.permute.xlu0 %3379
    %3381 = vrot.lane.b32.xlu0 %v1486, 112
    %v3382 = vpop.permute.xlu0 %3381
    %3383 = vrot.lane.b32.xlu0 %v1491, 112
    %v3384 = vpop.permute.xlu0 %3383
    %3385 = vrot.lane.b32.xlu0 %v1496, 112
    %v3386 = vpop.permute.xlu0 %3385
    %3387 = vrot.lane.b32.xlu0 %v1501, 112
    %v3388 = vpop.permute.xlu0 %3387
    %3389 = vrot.lane.b32.xlu0 %v1506, 112
    %v3390 = vpop.permute.xlu0 %3389
    %3391 = vrot.lane.b32.xlu0 %v1511, 112
    %v3392 = vpop.permute.xlu0 %3391
    %3393 = vrot.lane.b32.xlu0 %v1516, 112
    %v3394 = vpop.permute.xlu0 %3393
    %3395 = vrot.lane.b32.xlu0 %v1521, 112
    %v3396 = vpop.permute.xlu0 %3395
    %3397 = vrot.lane.b32.xlu0 %v1526, 112
    %v3398 = vpop.permute.xlu0 %3397
    %3399 = vrot.lane.b32.xlu0 %v1531, 112
    %v3400 = vpop.permute.xlu0 %3399
    %3401 = vrot.lane.b32.xlu0 %v1536, 112
    %v3402 = vpop.permute.xlu0 %3401
    %3403 = vrot.lane.b32.xlu0 %v1541, 112
    %v3404 = vpop.permute.xlu0 %3403
    %3405 = vrot.lane.b32.xlu0 %v1546, 112
    %v3406 = vpop.permute.xlu0 %3405
    %3407 = vrot.lane.b32.xlu0 %v1551, 112
    %v3408 = vpop.permute.xlu0 %3407
    %3409 = vrot.lane.b32.xlu0 %v1556, 112
    %v3410 = vpop.permute.xlu0 %3409
    %3411 = vrot.lane.b32.xlu0 %v1561, 112
    %v3412 = vpop.permute.xlu0 %3411
    %3413 = vrot.lane.b32.xlu0 %v1566, 112
    %v3414 = vpop.permute.xlu0 %3413
    %3415 = vrot.lane.b32.xlu0 %v1571, 112
    %v3416 = vpop.permute.xlu0 %3415
    %3417 = vrot.lane.b32.xlu0 %v1660, 112
    %v3418 = vpop.permute.xlu0 %3417
    %3419 = vrot.lane.b32.xlu0 %v1665, 112
    %v3420 = vpop.permute.xlu0 %3419
    %3421 = vrot.lane.b32.xlu0 %v1670, 112
    %v3422 = vpop.permute.xlu0 %3421
    %3423 = vrot.lane.b32.xlu0 %v1675, 112
    %v3424 = vpop.permute.xlu0 %3423
    %3425 = vrot.lane.b32.xlu0 %v1680, 112
    %v3426 = vpop.permute.xlu0 %3425
    %v3427 = vsel %vm1950, %v3378, 0
    %v3429 = vsel %vm1950, %v3380, 0
    %v3431 = vsel %vm1950, %v3382, 0
    %v3433 = vsel %vm1950, %v3384, 0
    %v3435 = vsel %vm1950, %v3386, 0
    %v3437 = vsel %vm1950, %v3388, 0
    %v3439 = vsel %vm1950, %v3390, 0
    %v3441 = vsel %vm1950, %v3392, 0
    %v3443 = vsel %vm1950, %v3394, 0
    %v3445 = vsel %vm1950, %v3396, 0
    %v3447 = vsel %vm1950, %v3398, 0
    %v3449 = vsel %vm1950, %v3400, 0
    %v3451 = vsel %vm1950, %v3402, 0
    %v3453 = vsel %vm1950, %v3404, 0
    %v3455 = vsel %vm1950, %v3406, 0
    %v3457 = vsel %vm1950, %v3408, 0
    %v3459 = vsel %vm1950, %v3410, 0
    %v3461 = vsel %vm1950, %v3412, 0
    %v3463 = vsel %vm1950, %v3414, 0
    %v3465 = vsel %vm1950, %v3416, 0
    %v3467 = vsel %vm1950, %v3418, 0
    %v3469 = vsel %vm1950, %v3420, 0
    %v3471 = vsel %vm1950, %v3422, 0
    %v3473 = vsel %vm1950, %v3424, 0
    %v3475 = vsel %vm1950, %v3426, 0
    %3477 = vmatprep.subr.mxu0 0.0
    %3478 = vmatpush1.xpose.msra.mxu0 %v3467
    %3479 = vmatprep.subr.mxu0 0.0
    %3480 = vmatpush1.xpose.msra.mxu0 %v3469
    %3481 = vmatprep.subr.mxu0 0.0
    %3482 = vmatpush1.xpose.msra.mxu0 %v3471
    %3483 = vmatprep.subr.mxu0 0.0
    %3484 = vmatpush1.xpose.msra.mxu0 %v3473
    %3485 = vmatprep.subr.mxu0 0.0
    %3486 = vmatpush1.xpose.msra.mxu0 %v3475
    %3487 = vmatprep.subr.mxu0 0.0
    %3488 = vmatpush1.xpose.msra.mxu0 0.0
    %3489 = vmatprep.subr.mxu0 0.0
    %3490 = vmatpush1.xpose.msra.mxu0 0.0
    %3491 = vmatprep.subr.mxu0 0.0
    %3492 = vmatpush1.xpose.msra.mxu0 0.0
    %3493 = vmatprep.subr.mxu0 0.0
    %3494 = vmatpush1.xpose.msra.mxu0 0.0
    %3495 = vmatprep.subr.mxu0 0.0
    %3496 = vmatpush1.xpose.msra.mxu0 0.0
    %3497 = vmatprep.subr.mxu0 0.0
    %3498 = vmatpush1.xpose.msra.mxu0 0.0
    %3499 = vmatprep.subr.mxu0 0.0
    %3500 = vmatpush1.xpose.msra.mxu0 0.0
    %3501 = vmatprep.subr.mxu0 0.0
    %3502 = vmatpush1.xpose.msra.mxu0 0.0
    %3503 = vmatprep.subr.mxu0 0.0
    %3504 = vmatpush1.xpose.msra.mxu0 0.0
    %3505 = vmatprep.subr.mxu0 0.0
    %3506 = vmatpush1.xpose.msra.mxu0 0.0
    %3507 = vmatprep.subr.mxu0 0.0
    %3508 = vmatpush1.xpose.msra.mxu0 0.0
    %3509 = vmatprep.subr.mxu0 0.0
    %3510 = vmatpush1.xpose.msra.mxu0 0.0
    %3511 = vmatprep.subr.mxu0 0.0
    %3512 = vmatpush1.xpose.msra.mxu0 0.0
    %3513 = vmatprep.subr.mxu0 0.0
    %3514 = vmatpush1.xpose.msra.mxu0 0.0
    %3515 = vmatprep.subr.mxu0 0.0
    %3516 = vmatpush1.xpose.msra.mxu0 0.0
    %3517 = vmatprep.subr.mxu0 0.0
    %3518 = vmatpush1.xpose.msra.mxu0 0.0
    %3519 = vmatprep.subr.mxu0 0.0
    %3520 = vmatpush1.xpose.msra.mxu0 0.0
    %3521 = vmatprep.subr.mxu0 0.0
    %3522 = vmatpush1.xpose.msra.mxu0 0.0
    %3523 = vmatprep.subr.mxu0 0.0
    %3524 = vmatpush1.xpose.msra.mxu0 0.0
    %3525 = vmatprep.subr.mxu0 0.0
    %3526 = vmatpush1.xpose.msra.mxu0 0.0
    %3527 = vmatprep.subr.mxu0 0.0
    %3528 = vmatpush1.xpose.msra.mxu0 0.0
    %3529 = vmatprep.subr.mxu0 0.0
    %3530 = vmatpush1.xpose.msra.mxu0 0.0
    %3531 = vmatprep.subr.mxu0 0.0
    %3532 = vmatpush1.xpose.msra.mxu0 0.0
    %3533 = vmatprep.subr.mxu0 0.0
    %3534 = vmatpush1.xpose.msra.mxu0 0.0
    %3535 = vmatprep.subr.mxu0 0.0
    %3536 = vmatpush1.xpose.msra.mxu0 0.0
    %3537 = vmatprep.subr.mxu0 0.0
    %3538 = vmatpush1.xpose.msra.mxu0 0.0
    %3539 = vmatprep.subr.mxu0 0.0
    %3540 = vmatpush1.xpose.msra.mxu0 0.0
    %3541 = vmatprep.mubr.f32.mxu0 0.0
    %3542 = vmatmul.mubr.f32.gmra.mrb[0].mxu0 %v3427
    %v3543 = vpop.f32.mrb[0].mxu0
    %v3544 = vadd.f32 %v1930, %v3543
    %v3545 = vpop.f32.mrb[0].mxu0
    %3546 = vmatprep.mubr.f32.mxu0 0.0
    %3547 = vmatmul.mubr.f32.gmra.mrb[0].mxu0 %v3429
    %v3548 = vpop.f32.mrb[0].mxu0
    %v3549 = vadd.f32 %v1931, %v3548
    %v3550 = vpop.f32.mrb[0].mxu0
    %3551 = vmatprep.mubr.f32.mxu0 0.0
    %3552 = vmatmul.mubr.f32.gmra.mrb[0].mxu0 %v3431
    %v3553 = vpop.f32.mrb[0].mxu0
    %v3554 = vadd.f32 %v1932, %v3553
    %v3555 = vpop.f32.mrb[0].mxu0
    %3556 = vmatprep.mubr.f32.mxu0 0.0
    %3557 = vmatmul.mubr.f32.gmra.mrb[0].mxu0 %v3433
    %v3558 = vpop.f32.mrb[0].mxu0
    %v3559 = vadd.f32 %v1933, %v3558
    %v3560 = vpop.f32.mrb[0].mxu0
    %3561 = vmatprep.mubr.f32.mxu0 0.0
    %3562 = vmatmul.mubr.f32.gmra.mrb[0].mxu0 %v3435
    %v3563 = vpop.f32.mrb[0].mxu0
    %v3564 = vadd.f32 %v1934, %v3563
    %v3565 = vpop.f32.mrb[0].mxu0
    %3566 = vmatprep.mubr.f32.mxu0 0.0
    %3567 = vmatmul.mubr.f32.gmra.mrb[0].mxu0 %v3437
    %v3568 = vpop.f32.mrb[0].mxu0
    %v3569 = vadd.f32 %v1935, %v3568
    %v3570 = vpop.f32.mrb[0].mxu0
    %3571 = vmatprep.mubr.f32.mxu0 0.0
    %3572 = vmatmul.mubr.f32.gmra.mrb[0].mxu0 %v3439
    %v3573 = vpop.f32.mrb[0].mxu0
    %v3574 = vadd.f32 %v1936, %v3573
    %v3575 = vpop.f32.mrb[0].mxu0
    %3576 = vmatprep.mubr.f32.mxu0 0.0
    %3577 = vmatmul.mubr.f32.gmra.mrb[0].mxu0 %v3441
    %v3578 = vpop.f32.mrb[0].mxu0
    %v3579 = vadd.f32 %v1937, %v3578
    %v3580 = vpop.f32.mrb[0].mxu0
    %3581 = vmatprep.mubr.f32.mxu0 0.0
    %3582 = vmatmul.mubr.f32.gmra.mrb[0].mxu0 %v3443
    %v3583 = vpop.f32.mrb[0].mxu0
    %v3584 = vadd.f32 %v1938, %v3583
    %v3585 = vpop.f32.mrb[0].mxu0
    %3586 = vmatprep.mubr.f32.mxu0 0.0
    %3587 = vmatmul.mubr.f32.gmra.mrb[0].mxu0 %v3445
    %v3588 = vpop.f32.mrb[0].mxu0
    %v3589 = vadd.f32 %v1939, %v3588
    %v3590 = vpop.f32.mrb[0].mxu0
    %3591 = vmatprep.mubr.f32.mxu0 0.0
    %3592 = vmatmul.mubr.f32.gmra.mrb[0].mxu0 %v3447
    %v3593 = vpop.f32.mrb[0].mxu0
    %v3594 = vadd.f32 %v1940, %v3593
    %v3595 = vpop.f32.mrb[0].mxu0
    %3596 = vmatprep.mubr.f32.mxu0 0.0
    %3597 = vmatmul.mubr.f32.gmra.mrb[0].mxu0 %v3449
    %v3598 = vpop.f32.mrb[0].mxu0
    %v3599 = vadd.f32 %v1941, %v3598
    %v3600 = vpop.f32.mrb[0].mxu0
    %3601 = vmatprep.mubr.f32.mxu0 0.0
    %3602 = vmatmul.mubr.f32.gmra.mrb[0].mxu0 %v3451
    %v3603 = vpop.f32.mrb[0].mxu0
    %v3604 = vadd.f32 %v1942, %v3603
    %v3605 = vpop.f32.mrb[0].mxu0
    %3606 = vmatprep.mubr.f32.mxu0 0.0
    %3607 = vmatmul.mubr.f32.gmra.mrb[0].mxu0 %v3453
    %v3608 = vpop.f32.mrb[0].mxu0
    %v3609 = vadd.f32 %v1943, %v3608
    %v3610 = vpop.f32.mrb[0].mxu0
    %3611 = vmatprep.mubr.f32.mxu0 0.0
    %3612 = vmatmul.mubr.f32.gmra.mrb[0].mxu0 %v3455
    %v3613 = vpop.f32.mrb[0].mxu0
    %v3614 = vadd.f32 %v1944, %v3613
    %v3615 = vpop.f32.mrb[0].mxu0
    %3616 = vmatprep.mubr.f32.mxu0 0.0
    %3617 = vmatmul.mubr.f32.gmra.mrb[0].mxu0 %v3457
    %v3618 = vpop.f32.mrb[0].mxu0
    %v3619 = vadd.f32 %v1945, %v3618
    %v3620 = vpop.f32.mrb[0].mxu0
    %3621 = vmatprep.mubr.f32.mxu0 0.0
    %3622 = vmatmul.mubr.f32.gmra.mrb[0].mxu0 %v3459
    %v3623 = vpop.f32.mrb[0].mxu0
    %v3624 = vadd.f32 %v1946, %v3623
    %v3625 = vpop.f32.mrb[0].mxu0
    %3626 = vmatprep.mubr.f32.mxu0 0.0
    %3627 = vmatmul.mubr.f32.gmra.mrb[0].mxu0 %v3461
    %v3628 = vpop.f32.mrb[0].mxu0
    %v3629 = vadd.f32 %v1947, %v3628
    %v3630 = vpop.f32.mrb[0].mxu0
    %3631 = vmatprep.mubr.f32.mxu0 0.0
    %3632 = vmatmul.mubr.f32.gmra.mrb[0].mxu0 %v3463
    %v3633 = vpop.f32.mrb[0].mxu0
    %v3634 = vadd.f32 %v1948, %v3633
    %v3635 = vpop.f32.mrb[0].mxu0
    %3636 = vmatprep.mubr.f32.mxu0 0.0
    %3637 = vmatmul.mubr.f32.gmra.mrb[0].mxu0 %v3465
    %v3638 = vpop.f32.mrb[0].mxu0
    %v3639 = vadd.f32 %v1949, %v3638
    %v3640 = vpop.f32.mrb[0].mxu0
    %3641 = vdwg.mxu0
    %v3642 = vsel %vm2191, %v3544, -inf
    %3643 = vmax.xlane.f32.xlu0 %v3642
    %v3644 = vpop.xlane.xlu0 %3643
    %v3645 = vsel %vm2191, %v3549, -inf
    %3646 = vmax.xlane.f32.xlu0 %v3645
    %v3647 = vpop.xlane.xlu0 %3646
    %v3648 = vsel %vm2191, %v3554, -inf
    %3649 = vmax.xlane.f32.xlu0 %v3648
    %v3650 = vpop.xlane.xlu0 %3649
    %v3651 = vsel %vm2191, %v3559, -inf
    %3652 = vmax.xlane.f32.xlu0 %v3651
    %v3653 = vpop.xlane.xlu0 %3652
    %v3654 = vsel %vm2191, %v3564, -inf
    %3655 = vmax.xlane.f32.xlu0 %v3654
    %v3656 = vpop.xlane.xlu0 %3655
    %v3657 = vsel %vm2191, %v3569, -inf
    %3658 = vmax.xlane.f32.xlu0 %v3657
    %v3659 = vpop.xlane.xlu0 %3658
    %v3660 = vsel %vm2191, %v3574, -inf
    %3661 = vmax.xlane.f32.xlu0 %v3660
    %v3662 = vpop.xlane.xlu0 %3661
    %v3663 = vsel %vm2191, %v3579, -inf
    %3664 = vmax.xlane.f32.xlu0 %v3663
    %v3665 = vpop.xlane.xlu0 %3664
    %v3666 = vsel %vm2191, %v3584, -inf
    %3667 = vmax.xlane.f32.xlu0 %v3666
    %v3668 = vpop.xlane.xlu0 %3667
    %v3669 = vsel %vm2191, %v3589, -inf
    %3670 = vmax.xlane.f32.xlu0 %v3669
    %v3671 = vpop.xlane.xlu0 %3670
    %v3672 = vsel %vm2191, %v3594, -inf
    %3673 = vmax.xlane.f32.xlu0 %v3672
    %v3674 = vpop.xlane.xlu0 %3673
    %v3675 = vsel %vm2191, %v3599, -inf
    %3676 = vmax.xlane.f32.xlu0 %v3675
    %v3677 = vpop.xlane.xlu0 %3676
    %v3678 = vsel %vm2191, %v3604, -inf
    %3679 = vmax.xlane.f32.xlu0 %v3678
    %v3680 = vpop.xlane.xlu0 %3679
    %v3681 = vsel %vm2191, %v3609, -inf
    %3682 = vmax.xlane.f32.xlu0 %v3681
    %v3683 = vpop.xlane.xlu0 %3682
    %v3684 = vsel %vm2191, %v3614, -inf
    %3685 = vmax.xlane.f32.xlu0 %v3684
    %v3686 = vpop.xlane.xlu0 %3685
    %v3687 = vsel %vm2191, %v3619, -inf
    %3688 = vmax.xlane.f32.xlu0 %v3687
    %v3689 = vpop.xlane.xlu0 %3688
    %v3690 = vsel %vm2191, %v3624, -inf
    %3691 = vmax.xlane.f32.xlu0 %v3690
    %v3692 = vpop.xlane.xlu0 %3691
    %v3693 = vsel %vm2191, %v3629, -inf
    %3694 = vmax.xlane.f32.xlu0 %v3693
    %v3695 = vpop.xlane.xlu0 %3694
    %v3696 = vsel %vm2191, %v3634, -inf
    %3697 = vmax.xlane.f32.xlu0 %v3696
    %v3698 = vpop.xlane.xlu0 %3697
    %v3699 = vsel %vm2191, %v3639, -inf
    %3700 = vmax.xlane.f32.xlu0 %v3699
    %v3701 = vpop.xlane.xlu0 %3700
    %v3702 = vsub.f32 %v3544, %v3644
    %v3703 = vsub.f32 %v3549, %v3647
    %v3704 = vsub.f32 %v3554, %v3650
    %v3705 = vsub.f32 %v3559, %v3653
    %v3706 = vsub.f32 %v3564, %v3656
    %v3707 = vsub.f32 %v3569, %v3659
    %v3708 = vsub.f32 %v3574, %v3662
    %v3709 = vsub.f32 %v3579, %v3665
    %v3710 = vsub.f32 %v3584, %v3668
    %v3711 = vsub.f32 %v3589, %v3671
    %v3712 = vsub.f32 %v3594, %v3674
    %v3713 = vsub.f32 %v3599, %v3677
    %v3714 = vsub.f32 %v3604, %v3680
    %v3715 = vsub.f32 %v3609, %v3683
    %v3716 = vsub.f32 %v3614, %v3686
    %v3717 = vsub.f32 %v3619, %v3689
    %v3718 = vsub.f32 %v3624, %v3692
    %v3719 = vsub.f32 %v3629, %v3695
    %v3720 = vsub.f32 %v3634, %v3698
    %v3721 = vsub.f32 %v3639, %v3701
    %v3722 = vmul.f32 %v3702, 1.442695
    %v3723 = vpow.pop %v3722
    %v3724 = vmul.f32 %v3703, 1.442695
    %v3725 = vpow.pop %v3724
    %v3726 = vmul.f32 %v3704, 1.442695
    %v3727 = vpow.pop %v3726
    %v3728 = vmul.f32 %v3705, 1.442695
    %v3729 = vpow.pop %v3728
    %v3730 = vmul.f32 %v3706, 1.442695
    %v3731 = vpow.pop %v3730
    %v3732 = vmul.f32 %v3707, 1.442695
    %v3733 = vpow.pop %v3732
    %v3734 = vmul.f32 %v3708, 1.442695
    %v3735 = vpow.pop %v3734
    %v3736 = vmul.f32 %v3709, 1.442695
    %v3737 = vpow.pop %v3736
    %v3738 = vmul.f32 %v3710, 1.442695
    %v3739 = vpow.pop %v3738
    %v3740 = vmul.f32 %v3711, 1.442695
    %v3741 = vpow.pop %v3740
    %v3742 = vmul.f32 %v3712, 1.442695
    %v3743 = vpow.pop %v3742
    %v3744 = vmul.f32 %v3713, 1.442695
    %v3745 = vpow.pop %v3744
    %v3746 = vmul.f32 %v3714, 1.442695
    %v3747 = vpow.pop %v3746
    %v3748 = vmul.f32 %v3715, 1.442695
    %v3749 = vpow.pop %v3748
    %v3750 = vmul.f32 %v3716, 1.442695
    %v3751 = vpow.pop %v3750
    %v3752 = vmul.f32 %v3717, 1.442695
    %v3753 = vpow.pop %v3752
    %v3754 = vmul.f32 %v3718, 1.442695
    %v3755 = vpow.pop %v3754
    %v3756 = vmul.f32 %v3719, 1.442695
    %v3757 = vpow.pop %v3756
    %v3758 = vmul.f32 %v3720, 1.442695
    %v3759 = vpow.pop %v3758
    %v3760 = vmul.f32 %v3721, 1.442695
    %v3761 = vpow.pop %v3760
    %v3762 = vsel %vm2191, %v3723, 0.0
    %3763 = vadd.xlane.f32.xlu0 %v3762
    %v3764 = vpop.xlane.xlu0 %3763
    %v3765 = vsel %vm2191, %v3725, 0.0
    %3766 = vadd.xlane.f32.xlu0 %v3765
    %v3767 = vpop.xlane.xlu0 %3766
    %v3768 = vsel %vm2191, %v3727, 0.0
    %3769 = vadd.xlane.f32.xlu0 %v3768
    %v3770 = vpop.xlane.xlu0 %3769
    %v3771 = vsel %vm2191, %v3729, 0.0
    %3772 = vadd.xlane.f32.xlu0 %v3771
    %v3773 = vpop.xlane.xlu0 %3772
    %v3774 = vsel %vm2191, %v3731, 0.0
    %3775 = vadd.xlane.f32.xlu0 %v3774
    %v3776 = vpop.xlane.xlu0 %3775
    %v3777 = vsel %vm2191, %v3733, 0.0
    %3778 = vadd.xlane.f32.xlu0 %v3777
    %v3779 = vpop.xlane.xlu0 %3778
    %v3780 = vsel %vm2191, %v3735, 0.0
    %3781 = vadd.xlane.f32.xlu0 %v3780
    %v3782 = vpop.xlane.xlu0 %3781
    %v3783 = vsel %vm2191, %v3737, 0.0
    %3784 = vadd.xlane.f32.xlu0 %v3783
    %v3785 = vpop.xlane.xlu0 %3784
    %v3786 = vsel %vm2191, %v3739, 0.0
    %3787 = vadd.xlane.f32.xlu0 %v3786
    %v3788 = vpop.xlane.xlu0 %3787
    %v3789 = vsel %vm2191, %v3741, 0.0
    %3790 = vadd.xlane.f32.xlu0 %v3789
    %v3791 = vpop.xlane.xlu0 %3790
    %v3792 = vsel %vm2191, %v3743, 0.0
    %3793 = vadd.xlane.f32.xlu0 %v3792
    %v3794 = vpop.xlane.xlu0 %3793
    %v3795 = vsel %vm2191, %v3745, 0.0
    %3796 = vadd.xlane.f32.xlu0 %v3795
    %v3797 = vpop.xlane.xlu0 %3796
    %v3798 = vsel %vm2191, %v3747, 0.0
    %3799 = vadd.xlane.f32.xlu0 %v3798
    %v3800 = vpop.xlane.xlu0 %3799
    %v3801 = vsel %vm2191, %v3749, 0.0
    %3802 = vadd.xlane.f32.xlu0 %v3801
    %v3803 = vpop.xlane.xlu0 %3802
    %v3804 = vsel %vm2191, %v3751, 0.0
    %3805 = vadd.xlane.f32.xlu0 %v3804
    %v3806 = vpop.xlane.xlu0 %3805
    %v3807 = vsel %vm2191, %v3753, 0.0
    %3808 = vadd.xlane.f32.xlu0 %v3807
    %v3809 = vpop.xlane.xlu0 %3808
    %v3810 = vsel %vm2191, %v3755, 0.0
    %3811 = vadd.xlane.f32.xlu0 %v3810
    %v3812 = vpop.xlane.xlu0 %3811
    %v3813 = vsel %vm2191, %v3757, 0.0
    %3814 = vadd.xlane.f32.xlu0 %v3813
    %v3815 = vpop.xlane.xlu0 %3814
    %v3816 = vsel %vm2191, %v3759, 0.0
    %3817 = vadd.xlane.f32.xlu0 %v3816
    %v3818 = vpop.xlane.xlu0 %3817
    %v3819 = vsel %vm2191, %v3761, 0.0
    %3820 = vadd.xlane.f32.xlu0 %v3819
    %v3821 = vpop.xlane.xlu0 %3820
    %v3822 = vrcp.pop %v3764
    %v3823 = vrcp.pop %v3767
    %v3824 = vrcp.pop %v3770
    %v3825 = vrcp.pop %v3773
    %v3826 = vrcp.pop %v3776
    %v3827 = vrcp.pop %v3779
    %v3828 = vrcp.pop %v3782
    %v3829 = vrcp.pop %v3785
    %v3830 = vrcp.pop %v3788
    %v3831 = vrcp.pop %v3791
    %v3832 = vrcp.pop %v3794
    %v3833 = vrcp.pop %v3797
    %v3834 = vrcp.pop %v3800
    %v3835 = vrcp.pop %v3803
    %v3836 = vrcp.pop %v3806
    %v3837 = vrcp.pop %v3809
    %v3838 = vrcp.pop %v3812
    %v3839 = vrcp.pop %v3815
    %v3840 = vrcp.pop %v3818
    %v3841 = vrcp.pop %v3821
    %v3842 = vmul.f32 %v3723, %v3822
    %v3843 = vmul.f32 %v3725, %v3823
    %v3844 = vmul.f32 %v3727, %v3824
    %v3845 = vmul.f32 %v3729, %v3825
    %v3846 = vmul.f32 %v3731, %v3826
    %v3847 = vmul.f32 %v3733, %v3827
    %v3848 = vmul.f32 %v3735, %v3828
    %v3849 = vmul.f32 %v3737, %v3829
    %v3850 = vmul.f32 %v3739, %v3830
    %v3851 = vmul.f32 %v3741, %v3831
    %v3852 = vmul.f32 %v3743, %v3832
    %v3853 = vmul.f32 %v3745, %v3833
    %v3854 = vmul.f32 %v3747, %v3834
    %v3855 = vmul.f32 %v3749, %v3835
    %v3856 = vmul.f32 %v3751, %v3836
    %v3857 = vmul.f32 %v3753, %v3837
    %v3858 = vmul.f32 %v3755, %v3838
    %v3859 = vmul.f32 %v3757, %v3839
    %v3860 = vmul.f32 %v3759, %v3840
    %v3861 = vmul.f32 %v3761, %v3841
    %3862 = vrot.lane.b32.xlu0 %v1660, 80
    %v3863 = vpop.permute.xlu0 %3862
    %3864 = vrot.lane.b32.xlu0 %v1665, 80
    %v3865 = vpop.permute.xlu0 %3864
    %3866 = vrot.lane.b32.xlu0 %v1670, 80
    %v3867 = vpop.permute.xlu0 %3866
    %3868 = vrot.lane.b32.xlu0 %v1675, 80
    %v3869 = vpop.permute.xlu0 %3868
    %3870 = vrot.lane.b32.xlu0 %v1680, 80
    %v3871 = vpop.permute.xlu0 %3870
    %v3878 = vsel %vm2191, %v3842, 0
    %v3881 = vsel %vm2191, %v3843, 0
    %v3884 = vsel %vm2191, %v3844, 0
    %v3887 = vsel %vm2191, %v3845, 0
    %v3890 = vsel %vm2191, %v3846, 0
    %v3893 = vsel %vm2191, %v3847, 0
    %v3896 = vsel %vm2191, %v3848, 0
    %v3899 = vsel %vm2191, %v3849, 0
    %v3902 = vsel %vm2191, %v3850, 0
    %v3905 = vsel %vm2191, %v3851, 0
    %v3908 = vsel %vm2191, %v3852, 0
    %v3911 = vsel %vm2191, %v3853, 0
    %v3914 = vsel %vm2191, %v3854, 0
    %v3917 = vsel %vm2191, %v3855, 0
    %v3920 = vsel %vm2191, %v3856, 0
    %v3923 = vsel %vm2191, %v3857, 0
    %v3926 = vsel %vm2191, %v3858, 0
    %v3929 = vsel %vm2191, %v3859, 0
    %v3932 = vsel %vm2191, %v3860, 0
    %v3935 = vsel %vm2191, %v3861, 0
    %3937 = vmatprep.subr.mxu0 0.0
    %3938 = vmatpush1.msra.mxu0 %v3863
    %3939 = vmatprep.subr.mxu0 0.0
    %3940 = vmatpush1.msra.mxu0 %v3865
    %3941 = vmatprep.subr.mxu0 0.0
    %3942 = vmatpush1.msra.mxu0 %v3867
    %3943 = vmatprep.subr.mxu0 0.0
    %3944 = vmatpush1.msra.mxu0 %v3869
    %3945 = vmatprep.subr.mxu0 0.0
    %3946 = vmatpush1.msra.mxu0 %v3871
    %3947 = vmatprep.subr.mxu0 0.0
    %3948 = vmatpush1.msra.mxu0 0.0
    %3949 = vmatprep.subr.mxu0 0.0
    %3950 = vmatpush1.msra.mxu0 0.0
    %3951 = vmatprep.subr.mxu0 0.0
    %3952 = vmatpush1.msra.mxu0 0.0
    %3953 = vmatprep.subr.mxu0 0.0
    %3954 = vmatpush1.msra.mxu0 0.0
    %3955 = vmatprep.subr.mxu0 0.0
    %3956 = vmatpush1.msra.mxu0 0.0
    %3957 = vmatprep.subr.mxu0 0.0
    %3958 = vmatpush1.msra.mxu0 0.0
    %3959 = vmatprep.subr.mxu0 0.0
    %3960 = vmatpush1.msra.mxu0 0.0
    %3961 = vmatprep.subr.mxu0 0.0
    %3962 = vmatpush1.msra.mxu0 0.0
    %3963 = vmatprep.subr.mxu0 0.0
    %3964 = vmatpush1.msra.mxu0 0.0
    %3965 = vmatprep.subr.mxu0 0.0
    %3966 = vmatpush1.msra.mxu0 0.0
    %3967 = vmatprep.subr.mxu0 0.0
    %3968 = vmatpush1.msra.mxu0 0.0
    %3969 = vmatprep.subr.mxu0 0.0
    %3970 = vmatpush1.msra.mxu0 0.0
    %3971 = vmatprep.subr.mxu0 0.0
    %3972 = vmatpush1.msra.mxu0 0.0
    %3973 = vmatprep.subr.mxu0 0.0
    %3974 = vmatpush1.msra.mxu0 0.0
    %3975 = vmatprep.subr.mxu0 0.0
    %3976 = vmatpush1.msra.mxu0 0.0
    %3977 = vmatprep.subr.mxu0 0.0
    %3978 = vmatpush1.msra.mxu0 0.0
    %3979 = vmatprep.subr.mxu0 0.0
    %3980 = vmatpush1.msra.mxu0 0.0
    %3981 = vmatprep.subr.mxu0 0.0
    %3982 = vmatpush1.msra.mxu0 0.0
    %3983 = vmatprep.subr.mxu0 0.0
    %3984 = vmatpush1.msra.mxu0 0.0
    %3985 = vmatprep.subr.mxu0 0.0
    %3986 = vmatpush1.msra.mxu0 0.0
    %3987 = vmatprep.subr.mxu0 0.0
    %3988 = vmatpush1.msra.mxu0 0.0
    %3989 = vmatprep.subr.mxu0 0.0
    %3990 = vmatpush1.msra.mxu0 0.0
    %3991 = vmatprep.subr.mxu0 0.0
    %3992 = vmatpush1.msra.mxu0 0.0
    %3993 = vmatprep.subr.mxu0 0.0
    %3994 = vmatpush1.msra.mxu0 0.0
    %3995 = vmatprep.subr.mxu0 0.0
    %3996 = vmatpush1.msra.mxu0 0.0
    %3997 = vmatprep.subr.mxu0 0.0
    %3998 = vmatpush1.msra.mxu0 0.0
    %3999 = vmatprep.subr.mxu0 0.0
    %4000 = vmatpush1.msra.mxu0 0.0
    %4001 = vmatprep.mubr.f32.mxu0 0.0
    %4002 = vmatmul.mubr.f32.gmra.mrb[0].mxu0 %v3878
    %v4003 = vpop.f32.mrb[0].mxu0
    %v4004 = vadd.f32 0.0, %v4003
    %v4005 = vpop.f32.mrb[0].mxu0
    %4006 = vmatprep.mubr.f32.mxu0 0.0
    %4007 = vmatmul.mubr.f32.gmra.mrb[0].mxu0 %v3881
    %v4008 = vpop.f32.mrb[0].mxu0
    %v4009 = vadd.f32 0.0, %v4008
    %v4010 = vpop.f32.mrb[0].mxu0
    %4011 = vmatprep.mubr.f32.mxu0 0.0
    %4012 = vmatmul.mubr.f32.gmra.mrb[0].mxu0 %v3884
    %v4013 = vpop.f32.mrb[0].mxu0
    %v4014 = vadd.f32 0.0, %v4013
    %v4015 = vpop.f32.mrb[0].mxu0
    %4016 = vmatprep.mubr.f32.mxu0 0.0
    %4017 = vmatmul.mubr.f32.gmra.mrb[0].mxu0 %v3887
    %v4018 = vpop.f32.mrb[0].mxu0
    %v4019 = vadd.f32 0.0, %v4018
    %v4020 = vpop.f32.mrb[0].mxu0
    %4021 = vmatprep.mubr.f32.mxu0 0.0
    %4022 = vmatmul.mubr.f32.gmra.mrb[0].mxu0 %v3890
    %v4023 = vpop.f32.mrb[0].mxu0
    %v4024 = vadd.f32 0.0, %v4023
    %v4025 = vpop.f32.mrb[0].mxu0
    %4026 = vmatprep.mubr.f32.mxu0 0.0
    %4027 = vmatmul.mubr.f32.gmra.mrb[0].mxu0 %v3893
    %v4028 = vpop.f32.mrb[0].mxu0
    %v4029 = vadd.f32 0.0, %v4028
    %v4030 = vpop.f32.mrb[0].mxu0
    %4031 = vmatprep.mubr.f32.mxu0 0.0
    %4032 = vmatmul.mubr.f32.gmra.mrb[0].mxu0 %v3896
    %v4033 = vpop.f32.mrb[0].mxu0
    %v4034 = vadd.f32 0.0, %v4033
    %v4035 = vpop.f32.mrb[0].mxu0
    %4036 = vmatprep.mubr.f32.mxu0 0.0
    %4037 = vmatmul.mubr.f32.gmra.mrb[0].mxu0 %v3899
    %v4038 = vpop.f32.mrb[0].mxu0
    %v4039 = vadd.f32 0.0, %v4038
    %v4040 = vpop.f32.mrb[0].mxu0
    %4041 = vmatprep.mubr.f32.mxu0 0.0
    %4042 = vmatmul.mubr.f32.gmra.mrb[0].mxu0 %v3902
    %v4043 = vpop.f32.mrb[0].mxu0
    %v4044 = vadd.f32 0.0, %v4043
    %v4045 = vpop.f32.mrb[0].mxu0
    %4046 = vmatprep.mubr.f32.mxu0 0.0
    %4047 = vmatmul.mubr.f32.gmra.mrb[0].mxu0 %v3905
    %v4048 = vpop.f32.mrb[0].mxu0
    %v4049 = vadd.f32 0.0, %v4048
    %v4050 = vpop.f32.mrb[0].mxu0
    %4051 = vmatprep.mubr.f32.mxu0 0.0
    %4052 = vmatmul.mubr.f32.gmra.mrb[0].mxu0 %v3908
    %v4053 = vpop.f32.mrb[0].mxu0
    %v4054 = vadd.f32 0.0, %v4053
    %v4055 = vpop.f32.mrb[0].mxu0
    %4056 = vmatprep.mubr.f32.mxu0 0.0
    %4057 = vmatmul.mubr.f32.gmra.mrb[0].mxu0 %v3911
    %v4058 = vpop.f32.mrb[0].mxu0
    %v4059 = vadd.f32 0.0, %v4058
    %v4060 = vpop.f32.mrb[0].mxu0
    %4061 = vmatprep.mubr.f32.mxu0 0.0
    %4062 = vmatmul.mubr.f32.gmra.mrb[0].mxu0 %v3914
    %v4063 = vpop.f32.mrb[0].mxu0
    %v4064 = vadd.f32 0.0, %v4063
    %v4065 = vpop.f32.mrb[0].mxu0
    %4066 = vmatprep.mubr.f32.mxu0 0.0
    %4067 = vmatmul.mubr.f32.gmra.mrb[0].mxu0 %v3917
    %v4068 = vpop.f32.mrb[0].mxu0
    %v4069 = vadd.f32 0.0, %v4068
    %v4070 = vpop.f32.mrb[0].mxu0
    %4071 = vmatprep.mubr.f32.mxu0 0.0
    %4072 = vmatmul.mubr.f32.gmra.mrb[0].mxu0 %v3920
    %v4073 = vpop.f32.mrb[0].mxu0
    %v4074 = vadd.f32 0.0, %v4073
    %v4075 = vpop.f32.mrb[0].mxu0
    %4076 = vmatprep.mubr.f32.mxu0 0.0
    %4077 = vmatmul.mubr.f32.gmra.mrb[0].mxu0 %v3923
    %v4078 = vpop.f32.mrb[0].mxu0
    %v4079 = vadd.f32 0.0, %v4078
    %v4080 = vpop.f32.mrb[0].mxu0
    %4081 = vmatprep.mubr.f32.mxu0 0.0
    %4082 = vmatmul.mubr.f32.gmra.mrb[0].mxu0 %v3926
    %v4083 = vpop.f32.mrb[0].mxu0
    %v4084 = vadd.f32 0.0, %v4083
    %v4085 = vpop.f32.mrb[0].mxu0
    %4086 = vmatprep.mubr.f32.mxu0 0.0
    %4087 = vmatmul.mubr.f32.gmra.mrb[0].mxu0 %v3929
    %v4088 = vpop.f32.mrb[0].mxu0
    %v4089 = vadd.f32 0.0, %v4088
    %v4090 = vpop.f32.mrb[0].mxu0
    %4091 = vmatprep.mubr.f32.mxu0 0.0
    %4092 = vmatmul.mubr.f32.gmra.mrb[0].mxu0 %v3932
    %v4093 = vpop.f32.mrb[0].mxu0
    %v4094 = vadd.f32 0.0, %v4093
    %v4095 = vpop.f32.mrb[0].mxu0
    %4096 = vmatprep.mubr.f32.mxu0 0.0
    %4097 = vmatmul.mubr.f32.gmra.mrb[0].mxu0 %v3935
    %v4098 = vpop.f32.mrb[0].mxu0
    %v4099 = vadd.f32 0.0, %v4098
    %v4100 = vpop.f32.mrb[0].mxu0
    %4101 = vdwg.mxu0
    %4102 = vrot.lane.b32.xlu0 %v1476, 104
    %v4103 = vpop.permute.xlu0 %4102
    %4104 = vrot.lane.b32.xlu0 %v1481, 104
    %v4105 = vpop.permute.xlu0 %4104
    %4106 = vrot.lane.b32.xlu0 %v1486, 104
    %v4107 = vpop.permute.xlu0 %4106
    %4108 = vrot.lane.b32.xlu0 %v1491, 104
    %v4109 = vpop.permute.xlu0 %4108
    %4110 = vrot.lane.b32.xlu0 %v1496, 104
    %v4111 = vpop.permute.xlu0 %4110
    %4112 = vrot.lane.b32.xlu0 %v1501, 104
    %v4113 = vpop.permute.xlu0 %4112
    %4114 = vrot.lane.b32.xlu0 %v1506, 104
    %v4115 = vpop.permute.xlu0 %4114
    %4116 = vrot.lane.b32.xlu0 %v1511, 104
    %v4117 = vpop.permute.xlu0 %4116
    %4118 = vrot.lane.b32.xlu0 %v1516, 104
    %v4119 = vpop.permute.xlu0 %4118
    %4120 = vrot.lane.b32.xlu0 %v1521, 104
    %v4121 = vpop.permute.xlu0 %4120
    %4122 = vrot.lane.b32.xlu0 %v1526, 104
    %v4123 = vpop.permute.xlu0 %4122
    %4124 = vrot.lane.b32.xlu0 %v1531, 104
    %v4125 = vpop.permute.xlu0 %4124
    %4126 = vrot.lane.b32.xlu0 %v1536, 104
    %v4127 = vpop.permute.xlu0 %4126
    %4128 = vrot.lane.b32.xlu0 %v1541, 104
    %v4129 = vpop.permute.xlu0 %4128
    %4130 = vrot.lane.b32.xlu0 %v1546, 104
    %v4131 = vpop.permute.xlu0 %4130
    %4132 = vrot.lane.b32.xlu0 %v1551, 104
    %v4133 = vpop.permute.xlu0 %4132
    %4134 = vrot.lane.b32.xlu0 %v1556, 104
    %v4135 = vpop.permute.xlu0 %4134
    %4136 = vrot.lane.b32.xlu0 %v1561, 104
    %v4137 = vpop.permute.xlu0 %4136
    %4138 = vrot.lane.b32.xlu0 %v1566, 104
    %v4139 = vpop.permute.xlu0 %4138
    %4140 = vrot.lane.b32.xlu0 %v1571, 104
    %v4141 = vpop.permute.xlu0 %4140
    %4142 = vrot.lane.b32.xlu0 %v1660, 104
    %v4143 = vpop.permute.xlu0 %4142
    %4144 = vrot.lane.b32.xlu0 %v1665, 104
    %v4145 = vpop.permute.xlu0 %4144
    %4146 = vrot.lane.b32.xlu0 %v1670, 104
    %v4147 = vpop.permute.xlu0 %4146
    %4148 = vrot.lane.b32.xlu0 %v1675, 104
    %v4149 = vpop.permute.xlu0 %4148
    %4150 = vrot.lane.b32.xlu0 %v1680, 104
    %v4151 = vpop.permute.xlu0 %4150
    %v4152 = vsel %vm1950, %v4103, 0
    %v4154 = vsel %vm1950, %v4105, 0
    %v4156 = vsel %vm1950, %v4107, 0
    %v4158 = vsel %vm1950, %v4109, 0
    %v4160 = vsel %vm1950, %v4111, 0
    %v4162 = vsel %vm1950, %v4113, 0
    %v4164 = vsel %vm1950, %v4115, 0
    %v4166 = vsel %vm1950, %v4117, 0
    %v4168 = vsel %vm1950, %v4119, 0
    %v4170 = vsel %vm1950, %v4121, 0
    %v4172 = vsel %vm1950, %v4123, 0
    %v4174 = vsel %vm1950, %v4125, 0
    %v4176 = vsel %vm1950, %v4127, 0
    %v4178 = vsel %vm1950, %v4129, 0
    %v4180 = vsel %vm1950, %v4131, 0
    %v4182 = vsel %vm1950, %v4133, 0
    %v4184 = vsel %vm1950, %v4135, 0
    %v4186 = vsel %vm1950, %v4137, 0
    %v4188 = vsel %vm1950, %v4139, 0
    %v4190 = vsel %vm1950, %v4141, 0
    %v4192 = vsel %vm1950, %v4143, 0
    %v4194 = vsel %vm1950, %v4145, 0
    %v4196 = vsel %vm1950, %v4147, 0
    %v4198 = vsel %vm1950, %v4149, 0
    %v4200 = vsel %vm1950, %v4151, 0
    %4202 = vmatprep.subr.mxu0 0.0
    %4203 = vmatpush1.xpose.msra.mxu0 %v4192
    %4204 = vmatprep.subr.mxu0 0.0
    %4205 = vmatpush1.xpose.msra.mxu0 %v4194
    %4206 = vmatprep.subr.mxu0 0.0
    %4207 = vmatpush1.xpose.msra.mxu0 %v4196
    %4208 = vmatprep.subr.mxu0 0.0
    %4209 = vmatpush1.xpose.msra.mxu0 %v4198
    %4210 = vmatprep.subr.mxu0 0.0
    %4211 = vmatpush1.xpose.msra.mxu0 %v4200
    %4212 = vmatprep.subr.mxu0 0.0
    %4213 = vmatpush1.xpose.msra.mxu0 0.0
    %4214 = vmatprep.subr.mxu0 0.0
    %4215 = vmatpush1.xpose.msra.mxu0 0.0
    %4216 = vmatprep.subr.mxu0 0.0
    %4217 = vmatpush1.xpose.msra.mxu0 0.0
    %4218 = vmatprep.subr.mxu0 0.0
    %4219 = vmatpush1.xpose.msra.mxu0 0.0
    %4220 = vmatprep.subr.mxu0 0.0
    %4221 = vmatpush1.xpose.msra.mxu0 0.0
    %4222 = vmatprep.subr.mxu0 0.0
    %4223 = vmatpush1.xpose.msra.mxu0 0.0
    %4224 = vmatprep.subr.mxu0 0.0
    %4225 = vmatpush1.xpose.msra.mxu0 0.0
    %4226 = vmatprep.subr.mxu0 0.0
    %4227 = vmatpush1.xpose.msra.mxu0 0.0
    %4228 = vmatprep.subr.mxu0 0.0
    %4229 = vmatpush1.xpose.msra.mxu0 0.0
    %4230 = vmatprep.subr.mxu0 0.0
    %4231 = vmatpush1.xpose.msra.mxu0 0.0
    %4232 = vmatprep.subr.mxu0 0.0
    %4233 = vmatpush1.xpose.msra.mxu0 0.0
    %4234 = vmatprep.subr.mxu0 0.0
    %4235 = vmatpush1.xpose.msra.mxu0 0.0
    %4236 = vmatprep.subr.mxu0 0.0
    %4237 = vmatpush1.xpose.msra.mxu0 0.0
    %4238 = vmatprep.subr.mxu0 0.0
    %4239 = vmatpush1.xpose.msra.mxu0 0.0
    %4240 = vmatprep.subr.mxu0 0.0
    %4241 = vmatpush1.xpose.msra.mxu0 0.0
    %4242 = vmatprep.subr.mxu0 0.0
    %4243 = vmatpush1.xpose.msra.mxu0 0.0
    %4244 = vmatprep.subr.mxu0 0.0
    %4245 = vmatpush1.xpose.msra.mxu0 0.0
    %4246 = vmatprep.subr.mxu0 0.0
    %4247 = vmatpush1.xpose.msra.mxu0 0.0
    %4248 = vmatprep.subr.mxu0 0.0
    %4249 = vmatpush1.xpose.msra.mxu0 0.0
    %4250 = vmatprep.subr.mxu0 0.0
    %4251 = vmatpush1.xpose.msra.mxu0 0.0
    %4252 = vmatprep.subr.mxu0 0.0
    %4253 = vmatpush1.xpose.msra.mxu0 0.0
    %4254 = vmatprep.subr.mxu0 0.0
    %4255 = vmatpush1.xpose.msra.mxu0 0.0
    %4256 = vmatprep.subr.mxu0 0.0
    %4257 = vmatpush1.xpose.msra.mxu0 0.0
    %4258 = vmatprep.subr.mxu0 0.0
    %4259 = vmatpush1.xpose.msra.mxu0 0.0
    %4260 = vmatprep.subr.mxu0 0.0
    %4261 = vmatpush1.xpose.msra.mxu0 0.0
    %4262 = vmatprep.subr.mxu0 0.0
    %4263 = vmatpush1.xpose.msra.mxu0 0.0
    %4264 = vmatprep.subr.mxu0 0.0
    %4265 = vmatpush1.xpose.msra.mxu0 0.0
    %4266 = vmatprep.mubr.f32.mxu0 0.0
    %4267 = vmatmul.mubr.f32.gmra.mrb[0].mxu0 %v4152
    %v4268 = vpop.f32.mrb[0].mxu0
    %v4269 = vadd.f32 %v1930, %v4268
    %v4270 = vpop.f32.mrb[0].mxu0
    %4271 = vmatprep.mubr.f32.mxu0 0.0
    %4272 = vmatmul.mubr.f32.gmra.mrb[0].mxu0 %v4154
    %v4273 = vpop.f32.mrb[0].mxu0
    %v4274 = vadd.f32 %v1931, %v4273
    %v4275 = vpop.f32.mrb[0].mxu0
    %4276 = vmatprep.mubr.f32.mxu0 0.0
    %4277 = vmatmul.mubr.f32.gmra.mrb[0].mxu0 %v4156
    %v4278 = vpop.f32.mrb[0].mxu0
    %v4279 = vadd.f32 %v1932, %v4278
    %v4280 = vpop.f32.mrb[0].mxu0
    %4281 = vmatprep.mubr.f32.mxu0 0.0
    %4282 = vmatmul.mubr.f32.gmra.mrb[0].mxu0 %v4158
    %v4283 = vpop.f32.mrb[0].mxu0
    %v4284 = vadd.f32 %v1933, %v4283
    %v4285 = vpop.f32.mrb[0].mxu0
    %4286 = vmatprep.mubr.f32.mxu0 0.0
    %4287 = vmatmul.mubr.f32.gmra.mrb[0].mxu0 %v4160
    %v4288 = vpop.f32.mrb[0].mxu0
    %v4289 = vadd.f32 %v1934, %v4288
    %v4290 = vpop.f32.mrb[0].mxu0
    %4291 = vmatprep.mubr.f32.mxu0 0.0
    %4292 = vmatmul.mubr.f32.gmra.mrb[0].mxu0 %v4162
    %v4293 = vpop.f32.mrb[0].mxu0
    %v4294 = vadd.f32 %v1935, %v4293
    %v4295 = vpop.f32.mrb[0].mxu0
    %4296 = vmatprep.mubr.f32.mxu0 0.0
    %4297 = vmatmul.mubr.f32.gmra.mrb[0].mxu0 %v4164
    %v4298 = vpop.f32.mrb[0].mxu0
    %v4299 = vadd.f32 %v1936, %v4298
    %v4300 = vpop.f32.mrb[0].mxu0
    %4301 = vmatprep.mubr.f32.mxu0 0.0
    %4302 = vmatmul.mubr.f32.gmra.mrb[0].mxu0 %v4166
    %v4303 = vpop.f32.mrb[0].mxu0
    %v4304 = vadd.f32 %v1937, %v4303
    %v4305 = vpop.f32.mrb[0].mxu0
    %4306 = vmatprep.mubr.f32.mxu0 0.0
    %4307 = vmatmul.mubr.f32.gmra.mrb[0].mxu0 %v4168
    %v4308 = vpop.f32.mrb[0].mxu0
    %v4309 = vadd.f32 %v1938, %v4308
    %v4310 = vpop.f32.mrb[0].mxu0
    %4311 = vmatprep.mubr.f32.mxu0 0.0
    %4312 = vmatmul.mubr.f32.gmra.mrb[0].mxu0 %v4170
    %v4313 = vpop.f32.mrb[0].mxu0
    %v4314 = vadd.f32 %v1939, %v4313
    %v4315 = vpop.f32.mrb[0].mxu0
    %4316 = vmatprep.mubr.f32.mxu0 0.0
    %4317 = vmatmul.mubr.f32.gmra.mrb[0].mxu0 %v4172
    %v4318 = vpop.f32.mrb[0].mxu0
    %v4319 = vadd.f32 %v1940, %v4318
    %v4320 = vpop.f32.mrb[0].mxu0
    %4321 = vmatprep.mubr.f32.mxu0 0.0
    %4322 = vmatmul.mubr.f32.gmra.mrb[0].mxu0 %v4174
    %v4323 = vpop.f32.mrb[0].mxu0
    %v4324 = vadd.f32 %v1941, %v4323
    %v4325 = vpop.f32.mrb[0].mxu0
    %4326 = vmatprep.mubr.f32.mxu0 0.0
    %4327 = vmatmul.mubr.f32.gmra.mrb[0].mxu0 %v4176
    %v4328 = vpop.f32.mrb[0].mxu0
    %v4329 = vadd.f32 %v1942, %v4328
    %v4330 = vpop.f32.mrb[0].mxu0
    %4331 = vmatprep.mubr.f32.mxu0 0.0
    %4332 = vmatmul.mubr.f32.gmra.mrb[0].mxu0 %v4178
    %v4333 = vpop.f32.mrb[0].mxu0
    %v4334 = vadd.f32 %v1943, %v4333
    %v4335 = vpop.f32.mrb[0].mxu0
    %4336 = vmatprep.mubr.f32.mxu0 0.0
    %4337 = vmatmul.mubr.f32.gmra.mrb[0].mxu0 %v4180
    %v4338 = vpop.f32.mrb[0].mxu0
    %v4339 = vadd.f32 %v1944, %v4338
    %v4340 = vpop.f32.mrb[0].mxu0
    %4341 = vmatprep.mubr.f32.mxu0 0.0
    %4342 = vmatmul.mubr.f32.gmra.mrb[0].mxu0 %v4182
    %v4343 = vpop.f32.mrb[0].mxu0
    %v4344 = vadd.f32 %v1945, %v4343
    %v4345 = vpop.f32.mrb[0].mxu0
    %4346 = vmatprep.mubr.f32.mxu0 0.0
    %4347 = vmatmul.mubr.f32.gmra.mrb[0].mxu0 %v4184
    %v4348 = vpop.f32.mrb[0].mxu0
    %v4349 = vadd.f32 %v1946, %v4348
    %v4350 = vpop.f32.mrb[0].mxu0
    %4351 = vmatprep.mubr.f32.mxu0 0.0
    %4352 = vmatmul.mubr.f32.gmra.mrb[0].mxu0 %v4186
    %v4353 = vpop.f32.mrb[0].mxu0
    %v4354 = vadd.f32 %v1947, %v4353
    %v4355 = vpop.f32.mrb[0].mxu0
    %4356 = vmatprep.mubr.f32.mxu0 0.0
    %4357 = vmatmul.mubr.f32.gmra.mrb[0].mxu0 %v4188
    %v4358 = vpop.f32.mrb[0].mxu0
    %v4359 = vadd.f32 %v1948, %v4358
    %v4360 = vpop.f32.mrb[0].mxu0
    %4361 = vmatprep.mubr.f32.mxu0 0.0
    %4362 = vmatmul.mubr.f32.gmra.mrb[0].mxu0 %v4190
    %v4363 = vpop.f32.mrb[0].mxu0
    %v4364 = vadd.f32 %v1949, %v4363
    %v4365 = vpop.f32.mrb[0].mxu0
    %4366 = vdwg.mxu0
    %v4367 = vsel %vm2191, %v4269, -inf
    %4368 = vmax.xlane.f32.xlu0 %v4367
    %v4369 = vpop.xlane.xlu0 %4368
    %v4370 = vsel %vm2191, %v4274, -inf
    %4371 = vmax.xlane.f32.xlu0 %v4370
    %v4372 = vpop.xlane.xlu0 %4371
    %v4373 = vsel %vm2191, %v4279, -inf
    %4374 = vmax.xlane.f32.xlu0 %v4373
    %v4375 = vpop.xlane.xlu0 %4374
    %v4376 = vsel %vm2191, %v4284, -inf
    %4377 = vmax.xlane.f32.xlu0 %v4376
    %v4378 = vpop.xlane.xlu0 %4377
    %v4379 = vsel %vm2191, %v4289, -inf
    %4380 = vmax.xlane.f32.xlu0 %v4379
    %v4381 = vpop.xlane.xlu0 %4380
    %v4382 = vsel %vm2191, %v4294, -inf
    %4383 = vmax.xlane.f32.xlu0 %v4382
    %v4384 = vpop.xlane.xlu0 %4383
    %v4385 = vsel %vm2191, %v4299, -inf
    %4386 = vmax.xlane.f32.xlu0 %v4385
    %v4387 = vpop.xlane.xlu0 %4386
    %v4388 = vsel %vm2191, %v4304, -inf
    %4389 = vmax.xlane.f32.xlu0 %v4388
    %v4390 = vpop.xlane.xlu0 %4389
    %v4391 = vsel %vm2191, %v4309, -inf
    %4392 = vmax.xlane.f32.xlu0 %v4391
    %v4393 = vpop.xlane.xlu0 %4392
    %v4394 = vsel %vm2191, %v4314, -inf
    %4395 = vmax.xlane.f32.xlu0 %v4394
    %v4396 = vpop.xlane.xlu0 %4395
    %v4397 = vsel %vm2191, %v4319, -inf
    %4398 = vmax.xlane.f32.xlu0 %v4397
    %v4399 = vpop.xlane.xlu0 %4398
    %v4400 = vsel %vm2191, %v4324, -inf
    %4401 = vmax.xlane.f32.xlu0 %v4400
    %v4402 = vpop.xlane.xlu0 %4401
    %v4403 = vsel %vm2191, %v4329, -inf
    %4404 = vmax.xlane.f32.xlu0 %v4403
    %v4405 = vpop.xlane.xlu0 %4404
    %v4406 = vsel %vm2191, %v4334, -inf
    %4407 = vmax.xlane.f32.xlu0 %v4406
    %v4408 = vpop.xlane.xlu0 %4407
    %v4409 = vsel %vm2191, %v4339, -inf
    %4410 = vmax.xlane.f32.xlu0 %v4409
    %v4411 = vpop.xlane.xlu0 %4410
    %v4412 = vsel %vm2191, %v4344, -inf
    %4413 = vmax.xlane.f32.xlu0 %v4412
    %v4414 = vpop.xlane.xlu0 %4413
    %v4415 = vsel %vm2191, %v4349, -inf
    %4416 = vmax.xlane.f32.xlu0 %v4415
    %v4417 = vpop.xlane.xlu0 %4416
    %v4418 = vsel %vm2191, %v4354, -inf
    %4419 = vmax.xlane.f32.xlu0 %v4418
    %v4420 = vpop.xlane.xlu0 %4419
    %v4421 = vsel %vm2191, %v4359, -inf
    %4422 = vmax.xlane.f32.xlu0 %v4421
    %v4423 = vpop.xlane.xlu0 %4422
    %v4424 = vsel %vm2191, %v4364, -inf
    %4425 = vmax.xlane.f32.xlu0 %v4424
    %v4426 = vpop.xlane.xlu0 %4425
    %v4427 = vsub.f32 %v4269, %v4369
    %v4428 = vsub.f32 %v4274, %v4372
    %v4429 = vsub.f32 %v4279, %v4375
    %v4430 = vsub.f32 %v4284, %v4378
    %v4431 = vsub.f32 %v4289, %v4381
    %v4432 = vsub.f32 %v4294, %v4384
    %v4433 = vsub.f32 %v4299, %v4387
    %v4434 = vsub.f32 %v4304, %v4390
    %v4435 = vsub.f32 %v4309, %v4393
    %v4436 = vsub.f32 %v4314, %v4396
    %v4437 = vsub.f32 %v4319, %v4399
    %v4438 = vsub.f32 %v4324, %v4402
    %v4439 = vsub.f32 %v4329, %v4405
    %v4440 = vsub.f32 %v4334, %v4408
    %v4441 = vsub.f32 %v4339, %v4411
    %v4442 = vsub.f32 %v4344, %v4414
    %v4443 = vsub.f32 %v4349, %v4417
    %v4444 = vsub.f32 %v4354, %v4420
    %v4445 = vsub.f32 %v4359, %v4423
    %v4446 = vsub.f32 %v4364, %v4426
    %v4447 = vmul.f32 %v4427, 1.442695
    %v4448 = vpow.pop %v4447
    %v4449 = vmul.f32 %v4428, 1.442695
    %v4450 = vpow.pop %v4449
    %v4451 = vmul.f32 %v4429, 1.442695
    %v4452 = vpow.pop %v4451
    %v4453 = vmul.f32 %v4430, 1.442695
    %v4454 = vpow.pop %v4453
    %v4455 = vmul.f32 %v4431, 1.442695
    %v4456 = vpow.pop %v4455
    %v4457 = vmul.f32 %v4432, 1.442695
    %v4458 = vpow.pop %v4457
    %v4459 = vmul.f32 %v4433, 1.442695
    %v4460 = vpow.pop %v4459
    %v4461 = vmul.f32 %v4434, 1.442695
    %v4462 = vpow.pop %v4461
    %v4463 = vmul.f32 %v4435, 1.442695
    %v4464 = vpow.pop %v4463
    %v4465 = vmul.f32 %v4436, 1.442695
    %v4466 = vpow.pop %v4465
    %v4467 = vmul.f32 %v4437, 1.442695
    %v4468 = vpow.pop %v4467
    %v4469 = vmul.f32 %v4438, 1.442695
    %v4470 = vpow.pop %v4469
    %v4471 = vmul.f32 %v4439, 1.442695
    %v4472 = vpow.pop %v4471
    %v4473 = vmul.f32 %v4440, 1.442695
    %v4474 = vpow.pop %v4473
    %v4475 = vmul.f32 %v4441, 1.442695
    %v4476 = vpow.pop %v4475
    %v4477 = vmul.f32 %v4442, 1.442695
    %v4478 = vpow.pop %v4477
    %v4479 = vmul.f32 %v4443, 1.442695
    %v4480 = vpow.pop %v4479
    %v4481 = vmul.f32 %v4444, 1.442695
    %v4482 = vpow.pop %v4481
    %v4483 = vmul.f32 %v4445, 1.442695
    %v4484 = vpow.pop %v4483
    %v4485 = vmul.f32 %v4446, 1.442695
    %v4486 = vpow.pop %v4485
    %v4487 = vsel %vm2191, %v4448, 0.0
    %4488 = vadd.xlane.f32.xlu0 %v4487
    %v4489 = vpop.xlane.xlu0 %4488
    %v4490 = vsel %vm2191, %v4450, 0.0
    %4491 = vadd.xlane.f32.xlu0 %v4490
    %v4492 = vpop.xlane.xlu0 %4491
    %v4493 = vsel %vm2191, %v4452, 0.0
    %4494 = vadd.xlane.f32.xlu0 %v4493
    %v4495 = vpop.xlane.xlu0 %4494
    %v4496 = vsel %vm2191, %v4454, 0.0
    %4497 = vadd.xlane.f32.xlu0 %v4496
    %v4498 = vpop.xlane.xlu0 %4497
    %v4499 = vsel %vm2191, %v4456, 0.0
    %4500 = vadd.xlane.f32.xlu0 %v4499
    %v4501 = vpop.xlane.xlu0 %4500
    %v4502 = vsel %vm2191, %v4458, 0.0
    %4503 = vadd.xlane.f32.xlu0 %v4502
    %v4504 = vpop.xlane.xlu0 %4503
    %v4505 = vsel %vm2191, %v4460, 0.0
    %4506 = vadd.xlane.f32.xlu0 %v4505
    %v4507 = vpop.xlane.xlu0 %4506
    %v4508 = vsel %vm2191, %v4462, 0.0
    %4509 = vadd.xlane.f32.xlu0 %v4508
    %v4510 = vpop.xlane.xlu0 %4509
    %v4511 = vsel %vm2191, %v4464, 0.0
    %4512 = vadd.xlane.f32.xlu0 %v4511
    %v4513 = vpop.xlane.xlu0 %4512
    %v4514 = vsel %vm2191, %v4466, 0.0
    %4515 = vadd.xlane.f32.xlu0 %v4514
    %v4516 = vpop.xlane.xlu0 %4515
    %v4517 = vsel %vm2191, %v4468, 0.0
    %4518 = vadd.xlane.f32.xlu0 %v4517
    %v4519 = vpop.xlane.xlu0 %4518
    %v4520 = vsel %vm2191, %v4470, 0.0
    %4521 = vadd.xlane.f32.xlu0 %v4520
    %v4522 = vpop.xlane.xlu0 %4521
    %v4523 = vsel %vm2191, %v4472, 0.0
    %4524 = vadd.xlane.f32.xlu0 %v4523
    %v4525 = vpop.xlane.xlu0 %4524
    %v4526 = vsel %vm2191, %v4474, 0.0
    %4527 = vadd.xlane.f32.xlu0 %v4526
    %v4528 = vpop.xlane.xlu0 %4527
    %v4529 = vsel %vm2191, %v4476, 0.0
    %4530 = vadd.xlane.f32.xlu0 %v4529
    %v4531 = vpop.xlane.xlu0 %4530
    %v4532 = vsel %vm2191, %v4478, 0.0
    %4533 = vadd.xlane.f32.xlu0 %v4532
    %v4534 = vpop.xlane.xlu0 %4533
    %v4535 = vsel %vm2191, %v4480, 0.0
    %4536 = vadd.xlane.f32.xlu0 %v4535
    %v4537 = vpop.xlane.xlu0 %4536
    %v4538 = vsel %vm2191, %v4482, 0.0
    %4539 = vadd.xlane.f32.xlu0 %v4538
    %v4540 = vpop.xlane.xlu0 %4539
    %v4541 = vsel %vm2191, %v4484, 0.0
    %4542 = vadd.xlane.f32.xlu0 %v4541
    %v4543 = vpop.xlane.xlu0 %4542
    %v4544 = vsel %vm2191, %v4486, 0.0
    %4545 = vadd.xlane.f32.xlu0 %v4544
    %v4546 = vpop.xlane.xlu0 %4545
    %v4547 = vrcp.pop %v4489
    %v4548 = vrcp.pop %v4492
    %v4549 = vrcp.pop %v4495
    %v4550 = vrcp.pop %v4498
    %v4551 = vrcp.pop %v4501
    %v4552 = vrcp.pop %v4504
    %v4553 = vrcp.pop %v4507
    %v4554 = vrcp.pop %v4510
    %v4555 = vrcp.pop %v4513
    %v4556 = vrcp.pop %v4516
    %v4557 = vrcp.pop %v4519
    %v4558 = vrcp.pop %v4522
    %v4559 = vrcp.pop %v4525
    %v4560 = vrcp.pop %v4528
    %v4561 = vrcp.pop %v4531
    %v4562 = vrcp.pop %v4534
    %v4563 = vrcp.pop %v4537
    %v4564 = vrcp.pop %v4540
    %v4565 = vrcp.pop %v4543
    %v4566 = vrcp.pop %v4546
    %v4567 = vmul.f32 %v4448, %v4547
    %v4568 = vmul.f32 %v4450, %v4548
    %v4569 = vmul.f32 %v4452, %v4549
    %v4570 = vmul.f32 %v4454, %v4550
    %v4571 = vmul.f32 %v4456, %v4551
    %v4572 = vmul.f32 %v4458, %v4552
    %v4573 = vmul.f32 %v4460, %v4553
    %v4574 = vmul.f32 %v4462, %v4554
    %v4575 = vmul.f32 %v4464, %v4555
    %v4576 = vmul.f32 %v4466, %v4556
    %v4577 = vmul.f32 %v4468, %v4557
    %v4578 = vmul.f32 %v4470, %v4558
    %v4579 = vmul.f32 %v4472, %v4559
    %v4580 = vmul.f32 %v4474, %v4560
    %v4581 = vmul.f32 %v4476, %v4561
    %v4582 = vmul.f32 %v4478, %v4562
    %v4583 = vmul.f32 %v4480, %v4563
    %v4584 = vmul.f32 %v4482, %v4564
    %v4585 = vmul.f32 %v4484, %v4565
    %v4586 = vmul.f32 %v4486, %v4566
    %4587 = vrot.lane.b32.xlu0 %v1660, 72
    %v4588 = vpop.permute.xlu0 %4587
    %4589 = vrot.lane.b32.xlu0 %v1665, 72
    %v4590 = vpop.permute.xlu0 %4589
    %4591 = vrot.lane.b32.xlu0 %v1670, 72
    %v4592 = vpop.permute.xlu0 %4591
    %4593 = vrot.lane.b32.xlu0 %v1675, 72
    %v4594 = vpop.permute.xlu0 %4593
    %4595 = vrot.lane.b32.xlu0 %v1680, 72
    %v4596 = vpop.permute.xlu0 %4595
    %v4603 = vsel %vm2191, %v4567, 0
    %v4606 = vsel %vm2191, %v4568, 0
    %v4609 = vsel %vm2191, %v4569, 0
    %v4612 = vsel %vm2191, %v4570, 0
    %v4615 = vsel %vm2191, %v4571, 0
    %v4618 = vsel %vm2191, %v4572, 0
    %v4621 = vsel %vm2191, %v4573, 0
    %v4624 = vsel %vm2191, %v4574, 0
    %v4627 = vsel %vm2191, %v4575, 0
    %v4630 = vsel %vm2191, %v4576, 0
    %v4633 = vsel %vm2191, %v4577, 0
    %v4636 = vsel %vm2191, %v4578, 0
    %v4639 = vsel %vm2191, %v4579, 0
    %v4642 = vsel %vm2191, %v4580, 0
    %v4645 = vsel %vm2191, %v4581, 0
    %v4648 = vsel %vm2191, %v4582, 0
    %v4651 = vsel %vm2191, %v4583, 0
    %v4654 = vsel %vm2191, %v4584, 0
    %v4657 = vsel %vm2191, %v4585, 0
    %v4660 = vsel %vm2191, %v4586, 0
    %4662 = vmatprep.subr.mxu0 0.0
    %4663 = vmatpush1.msra.mxu0 %v4588
    %4664 = vmatprep.subr.mxu0 0.0
    %4665 = vmatpush1.msra.mxu0 %v4590
    %4666 = vmatprep.subr.mxu0 0.0
    %4667 = vmatpush1.msra.mxu0 %v4592
    %4668 = vmatprep.subr.mxu0 0.0
    %4669 = vmatpush1.msra.mxu0 %v4594
    %4670 = vmatprep.subr.mxu0 0.0
    %4671 = vmatpush1.msra.mxu0 %v4596
    %4672 = vmatprep.subr.mxu0 0.0
    %4673 = vmatpush1.msra.mxu0 0.0
    %4674 = vmatprep.subr.mxu0 0.0
    %4675 = vmatpush1.msra.mxu0 0.0
    %4676 = vmatprep.subr.mxu0 0.0
    %4677 = vmatpush1.msra.mxu0 0.0
    %4678 = vmatprep.subr.mxu0 0.0
    %4679 = vmatpush1.msra.mxu0 0.0
    %4680 = vmatprep.subr.mxu0 0.0
    %4681 = vmatpush1.msra.mxu0 0.0
    %4682 = vmatprep.subr.mxu0 0.0
    %4683 = vmatpush1.msra.mxu0 0.0
    %4684 = vmatprep.subr.mxu0 0.0
    %4685 = vmatpush1.msra.mxu0 0.0
    %4686 = vmatprep.subr.mxu0 0.0
    %4687 = vmatpush1.msra.mxu0 0.0
    %4688 = vmatprep.subr.mxu0 0.0
    %4689 = vmatpush1.msra.mxu0 0.0
    %4690 = vmatprep.subr.mxu0 0.0
    %4691 = vmatpush1.msra.mxu0 0.0
    %4692 = vmatprep.subr.mxu0 0.0
    %4693 = vmatpush1.msra.mxu0 0.0
    %4694 = vmatprep.subr.mxu0 0.0
    %4695 = vmatpush1.msra.mxu0 0.0
    %4696 = vmatprep.subr.mxu0 0.0
    %4697 = vmatpush1.msra.mxu0 0.0
    %4698 = vmatprep.subr.mxu0 0.0
    %4699 = vmatpush1.msra.mxu0 0.0
    %4700 = vmatprep.subr.mxu0 0.0
    %4701 = vmatpush1.msra.mxu0 0.0
    %4702 = vmatprep.subr.mxu0 0.0
    %4703 = vmatpush1.msra.mxu0 0.0
    %4704 = vmatprep.subr.mxu0 0.0
    %4705 = vmatpush1.msra.mxu0 0.0
    %4706 = vmatprep.subr.mxu0 0.0
    %4707 = vmatpush1.msra.mxu0 0.0
    %4708 = vmatprep.subr.mxu0 0.0
    %4709 = vmatpush1.msra.mxu0 0.0
    %4710 = vmatprep.subr.mxu0 0.0
    %4711 = vmatpush1.msra.mxu0 0.0
    %4712 = vmatprep.subr.mxu0 0.0
    %4713 = vmatpush1.msra.mxu0 0.0
    %4714 = vmatprep.subr.mxu0 0.0
    %4715 = vmatpush1.msra.mxu0 0.0
    %4716 = vmatprep.subr.mxu0 0.0
    %4717 = vmatpush1.msra.mxu0 0.0
    %4718 = vmatprep.subr.mxu0 0.0
    %4719 = vmatpush1.msra.mxu0 0.0
    %4720 = vmatprep.subr.mxu0 0.0
    %4721 = vmatpush1.msra.mxu0 0.0
    %4722 = vmatprep.subr.mxu0 0.0
    %4723 = vmatpush1.msra.mxu0 0.0
    %4724 = vmatprep.subr.mxu0 0.0
    %4725 = vmatpush1.msra.mxu0 0.0
    %4726 = vmatprep.mubr.f32.mxu0 0.0
    %4727 = vmatmul.mubr.f32.gmra.mrb[0].mxu0 %v4603
    %v4728 = vpop.f32.mrb[0].mxu0
    %v4729 = vadd.f32 0.0, %v4728
    %v4730 = vpop.f32.mrb[0].mxu0
    %4731 = vmatprep.mubr.f32.mxu0 0.0
    %4732 = vmatmul.mubr.f32.gmra.mrb[0].mxu0 %v4606
    %v4733 = vpop.f32.mrb[0].mxu0
    %v4734 = vadd.f32 0.0, %v4733
    %v4735 = vpop.f32.mrb[0].mxu0
    %4736 = vmatprep.mubr.f32.mxu0 0.0
    %4737 = vmatmul.mubr.f32.gmra.mrb[0].mxu0 %v4609
    %v4738 = vpop.f32.mrb[0].mxu0
    %v4739 = vadd.f32 0.0, %v4738
    %v4740 = vpop.f32.mrb[0].mxu0
    %4741 = vmatprep.mubr.f32.mxu0 0.0
    %4742 = vmatmul.mubr.f32.gmra.mrb[0].mxu0 %v4612
    %v4743 = vpop.f32.mrb[0].mxu0
    %v4744 = vadd.f32 0.0, %v4743
    %v4745 = vpop.f32.mrb[0].mxu0
    %4746 = vmatprep.mubr.f32.mxu0 0.0
    %4747 = vmatmul.mubr.f32.gmra.mrb[0].mxu0 %v4615
    %v4748 = vpop.f32.mrb[0].mxu0
    %v4749 = vadd.f32 0.0, %v4748
    %v4750 = vpop.f32.mrb[0].mxu0
    %4751 = vmatprep.mubr.f32.mxu0 0.0
    %4752 = vmatmul.mubr.f32.gmra.mrb[0].mxu0 %v4618
    %v4753 = vpop.f32.mrb[0].mxu0
    %v4754 = vadd.f32 0.0, %v4753
    %v4755 = vpop.f32.mrb[0].mxu0
    %4756 = vmatprep.mubr.f32.mxu0 0.0
    %4757 = vmatmul.mubr.f32.gmra.mrb[0].mxu0 %v4621
    %v4758 = vpop.f32.mrb[0].mxu0
    %v4759 = vadd.f32 0.0, %v4758
    %v4760 = vpop.f32.mrb[0].mxu0
    %4761 = vmatprep.mubr.f32.mxu0 0.0
    %4762 = vmatmul.mubr.f32.gmra.mrb[0].mxu0 %v4624
    %v4763 = vpop.f32.mrb[0].mxu0
    %v4764 = vadd.f32 0.0, %v4763
    %v4765 = vpop.f32.mrb[0].mxu0
    %4766 = vmatprep.mubr.f32.mxu0 0.0
    %4767 = vmatmul.mubr.f32.gmra.mrb[0].mxu0 %v4627
    %v4768 = vpop.f32.mrb[0].mxu0
    %v4769 = vadd.f32 0.0, %v4768
    %v4770 = vpop.f32.mrb[0].mxu0
    %4771 = vmatprep.mubr.f32.mxu0 0.0
    %4772 = vmatmul.mubr.f32.gmra.mrb[0].mxu0 %v4630
    %v4773 = vpop.f32.mrb[0].mxu0
    %v4774 = vadd.f32 0.0, %v4773
    %v4775 = vpop.f32.mrb[0].mxu0
    %4776 = vmatprep.mubr.f32.mxu0 0.0
    %4777 = vmatmul.mubr.f32.gmra.mrb[0].mxu0 %v4633
    %v4778 = vpop.f32.mrb[0].mxu0
    %v4779 = vadd.f32 0.0, %v4778
    %v4780 = vpop.f32.mrb[0].mxu0
    %4781 = vmatprep.mubr.f32.mxu0 0.0
    %4782 = vmatmul.mubr.f32.gmra.mrb[0].mxu0 %v4636
    %v4783 = vpop.f32.mrb[0].mxu0
    %v4784 = vadd.f32 0.0, %v4783
    %v4785 = vpop.f32.mrb[0].mxu0
    %4786 = vmatprep.mubr.f32.mxu0 0.0
    %4787 = vmatmul.mubr.f32.gmra.mrb[0].mxu0 %v4639
    %v4788 = vpop.f32.mrb[0].mxu0
    %v4789 = vadd.f32 0.0, %v4788
    %v4790 = vpop.f32.mrb[0].mxu0
    %4791 = vmatprep.mubr.f32.mxu0 0.0
    %4792 = vmatmul.mubr.f32.gmra.mrb[0].mxu0 %v4642
    %v4793 = vpop.f32.mrb[0].mxu0
    %v4794 = vadd.f32 0.0, %v4793
    %v4795 = vpop.f32.mrb[0].mxu0
    %4796 = vmatprep.mubr.f32.mxu0 0.0
    %4797 = vmatmul.mubr.f32.gmra.mrb[0].mxu0 %v4645
    %v4798 = vpop.f32.mrb[0].mxu0
    %v4799 = vadd.f32 0.0, %v4798
    %v4800 = vpop.f32.mrb[0].mxu0
    %4801 = vmatprep.mubr.f32.mxu0 0.0
    %4802 = vmatmul.mubr.f32.gmra.mrb[0].mxu0 %v4648
    %v4803 = vpop.f32.mrb[0].mxu0
    %v4804 = vadd.f32 0.0, %v4803
    %v4805 = vpop.f32.mrb[0].mxu0
    %4806 = vmatprep.mubr.f32.mxu0 0.0
    %4807 = vmatmul.mubr.f32.gmra.mrb[0].mxu0 %v4651
    %v4808 = vpop.f32.mrb[0].mxu0
    %v4809 = vadd.f32 0.0, %v4808
    %v4810 = vpop.f32.mrb[0].mxu0
    %4811 = vmatprep.mubr.f32.mxu0 0.0
    %4812 = vmatmul.mubr.f32.gmra.mrb[0].mxu0 %v4654
    %v4813 = vpop.f32.mrb[0].mxu0
    %v4814 = vadd.f32 0.0, %v4813
    %v4815 = vpop.f32.mrb[0].mxu0
    %4816 = vmatprep.mubr.f32.mxu0 0.0
    %4817 = vmatmul.mubr.f32.gmra.mrb[0].mxu0 %v4657
    %v4818 = vpop.f32.mrb[0].mxu0
    %v4819 = vadd.f32 0.0, %v4818
    %v4820 = vpop.f32.mrb[0].mxu0
    %4821 = vmatprep.mubr.f32.mxu0 0.0
    %4822 = vmatmul.mubr.f32.gmra.mrb[0].mxu0 %v4660
    %v4823 = vpop.f32.mrb[0].mxu0
    %v4824 = vadd.f32 0.0, %v4823
    %v4825 = vpop.f32.mrb[0].mxu0
    %4826 = vdwg.mxu0
    %4847 = vrot.lane.b32.xlu0 %v3279, 8
    %v4848 = vpop.permute.xlu0 %4847
    %4849 = vrot.lane.b32.xlu0 %v3284, 8
    %v4850 = vpop.permute.xlu0 %4849
    %4851 = vrot.lane.b32.xlu0 %v3289, 8
    %v4852 = vpop.permute.xlu0 %4851
    %4853 = vrot.lane.b32.xlu0 %v3294, 8
    %v4854 = vpop.permute.xlu0 %4853
    %4855 = vrot.lane.b32.xlu0 %v3299, 8
    %v4856 = vpop.permute.xlu0 %4855
    %4857 = vrot.lane.b32.xlu0 %v3304, 8
    %v4858 = vpop.permute.xlu0 %4857
    %4859 = vrot.lane.b32.xlu0 %v3309, 8
    %v4860 = vpop.permute.xlu0 %4859
    %4861 = vrot.lane.b32.xlu0 %v3314, 8
    %v4862 = vpop.permute.xlu0 %4861
    %4863 = vrot.lane.b32.xlu0 %v3319, 8
    %v4864 = vpop.permute.xlu0 %4863
    %4865 = vrot.lane.b32.xlu0 %v3324, 8
    %v4866 = vpop.permute.xlu0 %4865
    %4867 = vrot.lane.b32.xlu0 %v3329, 8
    %v4868 = vpop.permute.xlu0 %4867
    %4869 = vrot.lane.b32.xlu0 %v3334, 8
    %v4870 = vpop.permute.xlu0 %4869
    %4871 = vrot.lane.b32.xlu0 %v3339, 8
    %v4872 = vpop.permute.xlu0 %4871
    %4873 = vrot.lane.b32.xlu0 %v3344, 8
    %v4874 = vpop.permute.xlu0 %4873
    %4875 = vrot.lane.b32.xlu0 %v3349, 8
    %v4876 = vpop.permute.xlu0 %4875
    %4877 = vrot.lane.b32.xlu0 %v3354, 8
    %v4878 = vpop.permute.xlu0 %4877
    %4879 = vrot.lane.b32.xlu0 %v3359, 8
    %v4880 = vpop.permute.xlu0 %4879
    %4881 = vrot.lane.b32.xlu0 %v3364, 8
    %v4882 = vpop.permute.xlu0 %4881
    %4883 = vrot.lane.b32.xlu0 %v3369, 8
    %v4884 = vpop.permute.xlu0 %4883
    %4885 = vrot.lane.b32.xlu0 %v3374, 8
    %v4886 = vpop.permute.xlu0 %4885
    %4927 = vrot.lane.b32.xlu0 %v4004, 16
    %v4928 = vpop.permute.xlu0 %4927
    %4929 = vrot.lane.b32.xlu0 %v4009, 16
    %v4930 = vpop.permute.xlu0 %4929
    %4931 = vrot.lane.b32.xlu0 %v4014, 16
    %v4932 = vpop.permute.xlu0 %4931
    %4933 = vrot.lane.b32.xlu0 %v4019, 16
    %v4934 = vpop.permute.xlu0 %4933
    %4935 = vrot.lane.b32.xlu0 %v4024, 16
    %v4936 = vpop.permute.xlu0 %4935
    %4937 = vrot.lane.b32.xlu0 %v4029, 16
    %v4938 = vpop.permute.xlu0 %4937
    %4939 = vrot.lane.b32.xlu0 %v4034, 16
    %v4940 = vpop.permute.xlu0 %4939
    %4941 = vrot.lane.b32.xlu0 %v4039, 16
    %v4942 = vpop.permute.xlu0 %4941
    %4943 = vrot.lane.b32.xlu0 %v4044, 16
    %v4944 = vpop.permute.xlu0 %4943
    %4945 = vrot.lane.b32.xlu0 %v4049, 16
    %v4946 = vpop.permute.xlu0 %4945
    %4947 = vrot.lane.b32.xlu0 %v4054, 16
    %v4948 = vpop.permute.xlu0 %4947
    %4949 = vrot.lane.b32.xlu0 %v4059, 16
    %v4950 = vpop.permute.xlu0 %4949
    %4951 = vrot.lane.b32.xlu0 %v4064, 16
    %v4952 = vpop.permute.xlu0 %4951
    %4953 = vrot.lane.b32.xlu0 %v4069, 16
    %v4954 = vpop.permute.xlu0 %4953
    %4955 = vrot.lane.b32.xlu0 %v4074, 16
    %v4956 = vpop.permute.xlu0 %4955
    %4957 = vrot.lane.b32.xlu0 %v4079, 16
    %v4958 = vpop.permute.xlu0 %4957
    %4959 = vrot.lane.b32.xlu0 %v4084, 16
    %v4960 = vpop.permute.xlu0 %4959
    %4961 = vrot.lane.b32.xlu0 %v4089, 16
    %v4962 = vpop.permute.xlu0 %4961
    %4963 = vrot.lane.b32.xlu0 %v4094, 16
    %v4964 = vpop.permute.xlu0 %4963
    %4965 = vrot.lane.b32.xlu0 %v4099, 16
    %v4966 = vpop.permute.xlu0 %4965
    %5007 = vrot.lane.b32.xlu0 %v4729, 24
    %v5008 = vpop.permute.xlu0 %5007
    %5009 = vrot.lane.b32.xlu0 %v4734, 24
    %v5010 = vpop.permute.xlu0 %5009
    %5011 = vrot.lane.b32.xlu0 %v4739, 24
    %v5012 = vpop.permute.xlu0 %5011
    %5013 = vrot.lane.b32.xlu0 %v4744, 24
    %v5014 = vpop.permute.xlu0 %5013
    %5015 = vrot.lane.b32.xlu0 %v4749, 24
    %v5016 = vpop.permute.xlu0 %5015
    %5017 = vrot.lane.b32.xlu0 %v4754, 24
    %v5018 = vpop.permute.xlu0 %5017
    %5019 = vrot.lane.b32.xlu0 %v4759, 24
    %v5020 = vpop.permute.xlu0 %5019
    %5021 = vrot.lane.b32.xlu0 %v4764, 24
    %v5022 = vpop.permute.xlu0 %5021
    %5023 = vrot.lane.b32.xlu0 %v4769, 24
    %v5024 = vpop.permute.xlu0 %5023
    %5025 = vrot.lane.b32.xlu0 %v4774, 24
    %v5026 = vpop.permute.xlu0 %5025
    %5027 = vrot.lane.b32.xlu0 %v4779, 24
    %v5028 = vpop.permute.xlu0 %5027
    %5029 = vrot.lane.b32.xlu0 %v4784, 24
    %v5030 = vpop.permute.xlu0 %5029
    %5031 = vrot.lane.b32.xlu0 %v4789, 24
    %v5032 = vpop.permute.xlu0 %5031
    %5033 = vrot.lane.b32.xlu0 %v4794, 24
    %v5034 = vpop.permute.xlu0 %5033
    %5035 = vrot.lane.b32.xlu0 %v4799, 24
    %v5036 = vpop.permute.xlu0 %5035
    %5037 = vrot.lane.b32.xlu0 %v4804, 24
    %v5038 = vpop.permute.xlu0 %5037
    %5039 = vrot.lane.b32.xlu0 %v4809, 24
    %v5040 = vpop.permute.xlu0 %5039
    %5041 = vrot.lane.b32.xlu0 %v4814, 24
    %v5042 = vpop.permute.xlu0 %5041
    %5043 = vrot.lane.b32.xlu0 %v4819, 24
    %v5044 = vpop.permute.xlu0 %5043
    %5045 = vrot.lane.b32.xlu0 %v4824, 24
    %v5046 = vpop.permute.xlu0 %5045
    %v5067 = vsel %vm1950, %v2554, %v4848
    %v5068 = vsel %vm1950, %v2559, %v4850
    %v5069 = vsel %vm1950, %v2564, %v4852
    %v5070 = vsel %vm1950, %v2569, %v4854
    %v5071 = vsel %vm1950, %v2574, %v4856
    %v5072 = vsel %vm1950, %v2579, %v4858
    %v5073 = vsel %vm1950, %v2584, %v4860
    %v5074 = vsel %vm1950, %v2589, %v4862
    %v5075 = vsel %vm1950, %v2594, %v4864
    %v5076 = vsel %vm1950, %v2599, %v4866
    %v5077 = vsel %vm1950, %v2604, %v4868
    %v5078 = vsel %vm1950, %v2609, %v4870
    %v5079 = vsel %vm1950, %v2614, %v4872
    %v5080 = vsel %vm1950, %v2619, %v4874
    %v5081 = vsel %vm1950, %v2624, %v4876
    %v5082 = vsel %vm1950, %v2629, %v4878
    %v5083 = vsel %vm1950, %v2634, %v4880
    %v5084 = vsel %vm1950, %v2639, %v4882
    %v5085 = vsel %vm1950, %v2644, %v4884
    %v5086 = vsel %vm1950, %v2649, %v4886
    %vm5087 = vcmask 130048
    %v5088 = vsel %vm5087, %v5067, %v4928
    %v5089 = vsel %vm5087, %v5068, %v4930
    %v5090 = vsel %vm5087, %v5069, %v4932
    %v5091 = vsel %vm5087, %v5070, %v4934
    %v5092 = vsel %vm5087, %v5071, %v4936
    %v5093 = vsel %vm5087, %v5072, %v4938
    %v5094 = vsel %vm5087, %v5073, %v4940
    %v5095 = vsel %vm5087, %v5074, %v4942
    %v5096 = vsel %vm5087, %v5075, %v4944
    %v5097 = vsel %vm5087, %v5076, %v4946
    %v5098 = vsel %vm5087, %v5077, %v4948
    %v5099 = vsel %vm5087, %v5078, %v4950
    %v5100 = vsel %vm5087, %v5079, %v4952
    %v5101 = vsel %vm5087, %v5080, %v4954
    %v5102 = vsel %vm5087, %v5081, %v4956
    %v5103 = vsel %vm5087, %v5082, %v4958
    %v5104 = vsel %vm5087, %v5083, %v4960
    %v5105 = vsel %vm5087, %v5084, %v4962
    %v5106 = vsel %vm5087, %v5085, %v4964
    %v5107 = vsel %vm5087, %v5086, %v4966
    %vm5108 = vcmask 195584
    %v5109 = vsel %vm5108, %v5088, %v5008
    %v5110 = vsel %vm5108, %v5089, %v5010
    %v5111 = vsel %vm5108, %v5090, %v5012
    %v5112 = vsel %vm5108, %v5091, %v5014
    %v5113 = vsel %vm5108, %v5092, %v5016
    %v5114 = vsel %vm5108, %v5093, %v5018
    %v5115 = vsel %vm5108, %v5094, %v5020
    %v5116 = vsel %vm5108, %v5095, %v5022
    %v5117 = vsel %vm5108, %v5096, %v5024
    %v5118 = vsel %vm5108, %v5097, %v5026
    %v5119 = vsel %vm5108, %v5098, %v5028
    %v5120 = vsel %vm5108, %v5099, %v5030
    %v5121 = vsel %vm5108, %v5100, %v5032
    %v5122 = vsel %vm5108, %v5101, %v5034
    %v5123 = vsel %vm5108, %v5102, %v5036
    %v5124 = vsel %vm5108, %v5103, %v5038
    %v5125 = vsel %vm5108, %v5104, %v5040
    %v5126 = vsel %vm5108, %v5105, %v5042
    %v5127 = vsel %vm5108, %v5106, %v5044
    %v5128 = vsel %vm5108, %v5107, %v5046
    %v5129 = vld [vmem:[#allocation4] sm:$0xff]
    %v5130 = vld [vmem:[#allocation4 + $0x8] sm:$0xff]
    %v5131 = vld [vmem:[#allocation4 + $0x10] sm:$0xff]
    %v5132 = vld [vmem:[#allocation4 + $0x18] sm:$0xff]
    %v5133 = vlaneseq
    %v5134 = vshrl.u32 %v5133, 7
    %v5135 = vsub.s32 5, %v5134
    %v5136 = vrot.slane %v93, %v5135
    %v5138 = vsel %vm95, %v5109, 0
    %v5141 = vsel %vm95, %v5110, 0
    %v5144 = vsel %vm95, %v5111, 0
    %v5147 = vsel %vm95, %v5112, 0
    %v5150 = vsel %vm95, %v5113, 0
    %v5153 = vsel %vm95, %v5114, 0
    %v5156 = vsel %vm95, %v5115, 0
    %v5159 = vsel %vm95, %v5116, 0
    %v5162 = vsel %vm95, %v5117, 0
    %v5165 = vsel %vm95, %v5118, 0
    %v5168 = vsel %vm95, %v5119, 0
    %v5171 = vsel %vm95, %v5120, 0
    %v5174 = vsel %vm95, %v5121, 0
    %v5177 = vsel %vm95, %v5122, 0
    %v5180 = vsel %vm95, %v5123, 0
    %v5183 = vsel %vm95, %v5124, 0
    %v5186 = vsel %vm95, %v5125, 0
    %v5189 = vsel %vm95, %v5126, 0
    %v5192 = vsel %vm95, %v5127, 0
    %v5195 = vsel %vm95, %v5128, 0
    %5197 = vmatprep.subr.mxu0 0.0
    %5198 = vmatpush1.msra.mxu0 %v5129
    %5199 = vmatprep.subr.mxu0 0.0
    %5200 = vmatpush1.msra.mxu0 %v5130
    %5201 = vmatprep.subr.mxu0 0.0
    %5202 = vmatpush1.msra.mxu0 %v5131
    %5203 = vmatprep.subr.mxu0 0.0
    %5204 = vmatpush1.msra.mxu0 %v5132
    %5205 = vmatprep.subr.mxu0 0.0
    %5206 = vmatpush1.msra.mxu0 0.0
    %5207 = vmatprep.subr.mxu0 0.0
    %5208 = vmatpush1.msra.mxu0 0.0
    %5209 = vmatprep.subr.mxu0 0.0
    %5210 = vmatpush1.msra.mxu0 0.0
    %5211 = vmatprep.subr.mxu0 0.0
    %5212 = vmatpush1.msra.mxu0 0.0
    %5213 = vmatprep.subr.mxu0 0.0
    %5214 = vmatpush1.msra.mxu0 0.0
    %5215 = vmatprep.subr.mxu0 0.0
    %5216 = vmatpush1.msra.mxu0 0.0
    %5217 = vmatprep.subr.mxu0 0.0
    %5218 = vmatpush1.msra.mxu0 0.0
    %5219 = vmatprep.subr.mxu0 0.0
    %5220 = vmatpush1.msra.mxu0 0.0
    %5221 = vmatprep.subr.mxu0 0.0
    %5222 = vmatpush1.msra.mxu0 0.0
    %5223 = vmatprep.subr.mxu0 0.0
    %5224 = vmatpush1.msra.mxu0 0.0
    %5225 = vmatprep.subr.mxu0 0.0
    %5226 = vmatpush1.msra.mxu0 0.0
    %5227 = vmatprep.subr.mxu0 0.0
    %5228 = vmatpush1.msra.mxu0 0.0
    %5229 = vmatprep.subr.mxu0 0.0
    %5230 = vmatpush1.msra.mxu0 0.0
    %5231 = vmatprep.subr.mxu0 0.0
    %5232 = vmatpush1.msra.mxu0 0.0
    %5233 = vmatprep.subr.mxu0 0.0
    %5234 = vmatpush1.msra.mxu0 0.0
    %5235 = vmatprep.subr.mxu0 0.0
    %5236 = vmatpush1.msra.mxu0 0.0
    %5237 = vmatprep.subr.mxu0 0.0
    %5238 = vmatpush1.msra.mxu0 0.0
    %5239 = vmatprep.subr.mxu0 0.0
    %5240 = vmatpush1.msra.mxu0 0.0
    %5241 = vmatprep.subr.mxu0 0.0
    %5242 = vmatpush1.msra.mxu0 0.0
    %5243 = vmatprep.subr.mxu0 0.0
    %5244 = vmatpush1.msra.mxu0 0.0
    %5245 = vmatprep.subr.mxu0 0.0
    %5246 = vmatpush1.msra.mxu0 0.0
    %5247 = vmatprep.subr.mxu0 0.0
    %5248 = vmatpush1.msra.mxu0 0.0
    %5249 = vmatprep.subr.mxu0 0.0
    %5250 = vmatpush1.msra.mxu0 0.0
    %5251 = vmatprep.subr.mxu0 0.0
    %5252 = vmatpush1.msra.mxu0 0.0
    %5253 = vmatprep.subr.mxu0 0.0
    %5254 = vmatpush1.msra.mxu0 0.0
    %5255 = vmatprep.subr.mxu0 0.0
    %5256 = vmatpush1.msra.mxu0 0.0
    %5257 = vmatprep.subr.mxu0 0.0
    %5258 = vmatpush1.msra.mxu0 0.0
    %5259 = vmatprep.subr.mxu0 0.0
    %5260 = vmatpush1.msra.mxu0 0.0
    %5261 = vmatprep.mubr.f32.mxu0 0.0
    %5262 = vmatmul.mubr.f32.gmra.mrb[0].mxu0 %v5138
    %v5263 = vpop.f32.mrb[0].mxu0
    %v5264 = vadd.f32 %v5136, %v5263
    %v5265 = vpop.f32.mrb[0].mxu0
    %5266 = vmatprep.mubr.f32.mxu0 0.0
    %5267 = vmatmul.mubr.f32.gmra.mrb[0].mxu0 %v5141
    %v5268 = vpop.f32.mrb[0].mxu0
    %v5269 = vadd.f32 %v5136, %v5268
    %v5270 = vpop.f32.mrb[0].mxu0
    %5271 = vmatprep.mubr.f32.mxu0 0.0
    %5272 = vmatmul.mubr.f32.gmra.mrb[0].mxu0 %v5144
    %v5273 = vpop.f32.mrb[0].mxu0
    %v5274 = vadd.f32 %v5136, %v5273
    %v5275 = vpop.f32.mrb[0].mxu0
    %5276 = vmatprep.mubr.f32.mxu0 0.0
    %5277 = vmatmul.mubr.f32.gmra.mrb[0].mxu0 %v5147
    %v5278 = vpop.f32.mrb[0].mxu0
    %v5279 = vadd.f32 %v5136, %v5278
    %v5280 = vpop.f32.mrb[0].mxu0
    %5281 = vmatprep.mubr.f32.mxu0 0.0
    %5282 = vmatmul.mubr.f32.gmra.mrb[0].mxu0 %v5150
    %v5283 = vpop.f32.mrb[0].mxu0
    %v5284 = vadd.f32 %v5136, %v5283
    %v5285 = vpop.f32.mrb[0].mxu0
    %5286 = vmatprep.mubr.f32.mxu0 0.0
    %5287 = vmatmul.mubr.f32.gmra.mrb[0].mxu0 %v5153
    %v5288 = vpop.f32.mrb[0].mxu0
    %v5289 = vadd.f32 %v5136, %v5288
    %v5290 = vpop.f32.mrb[0].mxu0
    %5291 = vmatprep.mubr.f32.mxu0 0.0
    %5292 = vmatmul.mubr.f32.gmra.mrb[0].mxu0 %v5156
    %v5293 = vpop.f32.mrb[0].mxu0
    %v5294 = vadd.f32 %v5136, %v5293
    %v5295 = vpop.f32.mrb[0].mxu0
    %5296 = vmatprep.mubr.f32.mxu0 0.0
    %5297 = vmatmul.mubr.f32.gmra.mrb[0].mxu0 %v5159
    %v5298 = vpop.f32.mrb[0].mxu0
    %v5299 = vadd.f32 %v5136, %v5298
    %v5300 = vpop.f32.mrb[0].mxu0
    %5301 = vmatprep.mubr.f32.mxu0 0.0
    %5302 = vmatmul.mubr.f32.gmra.mrb[0].mxu0 %v5162
    %v5303 = vpop.f32.mrb[0].mxu0
    %v5304 = vadd.f32 %v5136, %v5303
    %v5305 = vpop.f32.mrb[0].mxu0
    %5306 = vmatprep.mubr.f32.mxu0 0.0
    %5307 = vmatmul.mubr.f32.gmra.mrb[0].mxu0 %v5165
    %v5308 = vpop.f32.mrb[0].mxu0
    %v5309 = vadd.f32 %v5136, %v5308
    %v5310 = vpop.f32.mrb[0].mxu0
    %5311 = vmatprep.mubr.f32.mxu0 0.0
    %5312 = vmatmul.mubr.f32.gmra.mrb[0].mxu0 %v5168
    %v5313 = vpop.f32.mrb[0].mxu0
    %v5314 = vadd.f32 %v5136, %v5313
    %v5315 = vpop.f32.mrb[0].mxu0
    %5316 = vmatprep.mubr.f32.mxu0 0.0
    %5317 = vmatmul.mubr.f32.gmra.mrb[0].mxu0 %v5171
    %v5318 = vpop.f32.mrb[0].mxu0
    %v5319 = vadd.f32 %v5136, %v5318
    %v5320 = vpop.f32.mrb[0].mxu0
    %5321 = vmatprep.mubr.f32.mxu0 0.0
    %5322 = vmatmul.mubr.f32.gmra.mrb[0].mxu0 %v5174
    %v5323 = vpop.f32.mrb[0].mxu0
    %v5324 = vadd.f32 %v5136, %v5323
    %v5325 = vpop.f32.mrb[0].mxu0
    %5326 = vmatprep.mubr.f32.mxu0 0.0
    %5327 = vmatmul.mubr.f32.gmra.mrb[0].mxu0 %v5177
    %v5328 = vpop.f32.mrb[0].mxu0
    %v5329 = vadd.f32 %v5136, %v5328
    %v5330 = vpop.f32.mrb[0].mxu0
    %5331 = vmatprep.mubr.f32.mxu0 0.0
    %5332 = vmatmul.mubr.f32.gmra.mrb[0].mxu0 %v5180
    %v5333 = vpop.f32.mrb[0].mxu0
    %v5334 = vadd.f32 %v5136, %v5333
    %v5335 = vpop.f32.mrb[0].mxu0
    %5336 = vmatprep.mubr.f32.mxu0 0.0
    %5337 = vmatmul.mubr.f32.gmra.mrb[0].mxu0 %v5183
    %v5338 = vpop.f32.mrb[0].mxu0
    %v5339 = vadd.f32 %v5136, %v5338
    %v5340 = vpop.f32.mrb[0].mxu0
    %5341 = vmatprep.mubr.f32.mxu0 0.0
    %5342 = vmatmul.mubr.f32.gmra.mrb[0].mxu0 %v5186
    %v5343 = vpop.f32.mrb[0].mxu0
    %v5344 = vadd.f32 %v5136, %v5343
    %v5345 = vpop.f32.mrb[0].mxu0
    %5346 = vmatprep.mubr.f32.mxu0 0.0
    %5347 = vmatmul.mubr.f32.gmra.mrb[0].mxu0 %v5189
    %v5348 = vpop.f32.mrb[0].mxu0
    %v5349 = vadd.f32 %v5136, %v5348
    %v5350 = vpop.f32.mrb[0].mxu0
    %5351 = vmatprep.mubr.f32.mxu0 0.0
    %5352 = vmatmul.mubr.f32.gmra.mrb[0].mxu0 %v5192
    %v5353 = vpop.f32.mrb[0].mxu0
    %v5354 = vadd.f32 %v5136, %v5353
    %v5355 = vpop.f32.mrb[0].mxu0
    %5356 = vmatprep.mubr.f32.mxu0 0.0
    %5357 = vmatmul.mubr.f32.gmra.mrb[0].mxu0 %v5195
    %v5358 = vpop.f32.mrb[0].mxu0
    %v5359 = vadd.f32 %v5136, %v5358
    %v5360 = vpop.f32.mrb[0].mxu0
    %5361 = vdwg.mxu0
    %v5362 = vadd.f32 %v73, %v5264
    %v5363 = vadd.f32 %v74, %v5269
    %v5364 = vadd.f32 %v75, %v5274
    %v5365 = vadd.f32 %v76, %v5279
    %v5366 = vadd.f32 %v77, %v5284
    %v5367 = vadd.f32 %v78, %v5289
    %v5368 = vadd.f32 %v79, %v5294
    %v5369 = vadd.f32 %v80, %v5299
    %v5370 = vadd.f32 %v81, %v5304
    %v5371 = vadd.f32 %v82, %v5309
    %v5372 = vadd.f32 %v83, %v5314
    %v5373 = vadd.f32 %v84, %v5319
    %v5374 = vadd.f32 %v85, %v5324
    %v5375 = vadd.f32 %v86, %v5329
    %v5376 = vadd.f32 %v87, %v5334
    %v5377 = vadd.f32 %v88, %v5339
    %v5378 = vadd.f32 %v89, %v5344
    %v5379 = vadd.f32 %v90, %v5349
    %v5380 = vadd.f32 %v91, %v5354
    %v5381 = vadd.f32 %v92, %v5359
    %v5382 = vsel %vm95, %v5362, 0.0
    %5383 = vadd.xlane.f32.xlu0 %v5382
    %v5384 = vpop.xlane.xlu0 %5383
    %v5385 = vsel %vm95, %v5363, 0.0
    %5386 = vadd.xlane.f32.xlu0 %v5385
    %v5387 = vpop.xlane.xlu0 %5386
    %v5388 = vsel %vm95, %v5364, 0.0
    %5389 = vadd.xlane.f32.xlu0 %v5388
    %v5390 = vpop.xlane.xlu0 %5389
    %v5391 = vsel %vm95, %v5365, 0.0
    %5392 = vadd.xlane.f32.xlu0 %v5391
    %v5393 = vpop.xlane.xlu0 %5392
    %v5394 = vsel %vm95, %v5366, 0.0
    %5395 = vadd.xlane.f32.xlu0 %v5394
    %v5396 = vpop.xlane.xlu0 %5395
    %v5397 = vsel %vm95, %v5367, 0.0
    %5398 = vadd.xlane.f32.xlu0 %v5397
    %v5399 = vpop.xlane.xlu0 %5398
    %v5400 = vsel %vm95, %v5368, 0.0
    %5401 = vadd.xlane.f32.xlu0 %v5400
    %v5402 = vpop.xlane.xlu0 %5401
    %v5403 = vsel %vm95, %v5369, 0.0
    %5404 = vadd.xlane.f32.xlu0 %v5403
    %v5405 = vpop.xlane.xlu0 %5404
    %v5406 = vsel %vm95, %v5370, 0.0
    %5407 = vadd.xlane.f32.xlu0 %v5406
    %v5408 = vpop.xlane.xlu0 %5407
    %v5409 = vsel %vm95, %v5371, 0.0
    %5410 = vadd.xlane.f32.xlu0 %v5409
    %v5411 = vpop.xlane.xlu0 %5410
    %v5412 = vsel %vm95, %v5372, 0.0
    %5413 = vadd.xlane.f32.xlu0 %v5412
    %v5414 = vpop.xlane.xlu0 %5413
    %v5415 = vsel %vm95, %v5373, 0.0
    %5416 = vadd.xlane.f32.xlu0 %v5415
    %v5417 = vpop.xlane.xlu0 %5416
    %v5418 = vsel %vm95, %v5374, 0.0
    %5419 = vadd.xlane.f32.xlu0 %v5418
    %v5420 = vpop.xlane.xlu0 %5419
    %v5421 = vsel %vm95, %v5375, 0.0
    %5422 = vadd.xlane.f32.xlu0 %v5421
    %v5423 = vpop.xlane.xlu0 %5422
    %v5424 = vsel %vm95, %v5376, 0.0
    %5425 = vadd.xlane.f32.xlu0 %v5424
    %v5426 = vpop.xlane.xlu0 %5425
    %v5427 = vsel %vm95, %v5377, 0.0
    %5428 = vadd.xlane.f32.xlu0 %v5427
    %v5429 = vpop.xlane.xlu0 %5428
    %v5430 = vsel %vm95, %v5378, 0.0
    %5431 = vadd.xlane.f32.xlu0 %v5430
    %v5432 = vpop.xlane.xlu0 %5431
    %v5433 = vsel %vm95, %v5379, 0.0
    %5434 = vadd.xlane.f32.xlu0 %v5433
    %v5435 = vpop.xlane.xlu0 %5434
    %v5436 = vsel %vm95, %v5380, 0.0
    %5437 = vadd.xlane.f32.xlu0 %v5436
    %v5438 = vpop.xlane.xlu0 %5437
    %v5439 = vsel %vm95, %v5381, 0.0
    %5440 = vadd.xlane.f32.xlu0 %v5439
    %v5441 = vpop.xlane.xlu0 %5440
    %v5442 = vmul.f32 %v5384, %v156
    %v5443 = vmul.f32 %v5387, %v156
    %v5444 = vmul.f32 %v5390, %v156
    %v5445 = vmul.f32 %v5393, %v156
    %v5446 = vmul.f32 %v5396, %v156
    %v5447 = vmul.f32 %v5399, %v156
    %v5448 = vmul.f32 %v5402, %v156
    %v5449 = vmul.f32 %v5405, %v156
    %v5450 = vmul.f32 %v5408, %v156
    %v5451 = vmul.f32 %v5411, %v156
    %v5452 = vmul.f32 %v5414, %v156
    %v5453 = vmul.f32 %v5417, %v156
    %v5454 = vmul.f32 %v5420, %v156
    %v5455 = vmul.f32 %v5423, %v156
    %v5456 = vmul.f32 %v5426, %v156
    %v5457 = vmul.f32 %v5429, %v156
    %v5458 = vmul.f32 %v5432, %v156
    %v5459 = vmul.f32 %v5435, %v156
    %v5460 = vmul.f32 %v5438, %v156
    %v5461 = vmul.f32 %v5441, %v156
    %v5462 = vsub.f32 %v5362, %v5442
    %v5463 = vsub.f32 %v5363, %v5443
    %v5464 = vsub.f32 %v5364, %v5444
    %v5465 = vsub.f32 %v5365, %v5445
    %v5466 = vsub.f32 %v5366, %v5446
    %v5467 = vsub.f32 %v5367, %v5447
    %v5468 = vsub.f32 %v5368, %v5448
    %v5469 = vsub.f32 %v5369, %v5449
    %v5470 = vsub.f32 %v5370, %v5450
    %v5471 = vsub.f32 %v5371, %v5451
    %v5472 = vsub.f32 %v5372, %v5452
    %v5473 = vsub.f32 %v5373, %v5453
    %v5474 = vsub.f32 %v5374, %v5454
    %v5475 = vsub.f32 %v5375, %v5455
    %v5476 = vsub.f32 %v5376, %v5456
    %v5477 = vsub.f32 %v5377, %v5457
    %v5478 = vsub.f32 %v5378, %v5458
    %v5479 = vsub.f32 %v5379, %v5459
    %v5480 = vsub.f32 %v5380, %v5460
    %v5481 = vsub.f32 %v5381, %v5461
    %v5482 = vmul.f32 %v5462, %v5462
    %v5483 = vmul.f32 %v5463, %v5463
    %v5484 = vmul.f32 %v5464, %v5464
    %v5485 = vmul.f32 %v5465, %v5465
    %v5486 = vmul.f32 %v5466, %v5466
    %v5487 = vmul.f32 %v5467, %v5467
    %v5488 = vmul.f32 %v5468, %v5468
    %v5489 = vmul.f32 %v5469, %v5469
    %v5490 = vmul.f32 %v5470, %v5470
    %v5491 = vmul.f32 %v5471, %v5471
    %v5492 = vmul.f32 %v5472, %v5472
    %v5493 = vmul.f32 %v5473, %v5473
    %v5494 = vmul.f32 %v5474, %v5474
    %v5495 = vmul.f32 %v5475, %v5475
    %v5496 = vmul.f32 %v5476, %v5476
    %v5497 = vmul.f32 %v5477, %v5477
    %v5498 = vmul.f32 %v5478, %v5478
    %v5499 = vmul.f32 %v5479, %v5479
    %v5500 = vmul.f32 %v5480, %v5480
    %v5501 = vmul.f32 %v5481, %v5481
    %v5502 = vsel %vm95, %v5482, 0.0
    %5503 = vadd.xlane.f32.xlu0 %v5502
    %v5504 = vpop.xlane.xlu0 %5503
    %v5505 = vsel %vm95, %v5483, 0.0
    %5506 = vadd.xlane.f32.xlu0 %v5505
    %v5507 = vpop.xlane.xlu0 %5506
    %v5508 = vsel %vm95, %v5484, 0.0
    %5509 = vadd.xlane.f32.xlu0 %v5508
    %v5510 = vpop.xlane.xlu0 %5509
    %v5511 = vsel %vm95, %v5485, 0.0
    %5512 = vadd.xlane.f32.xlu0 %v5511
    %v5513 = vpop.xlane.xlu0 %5512
    %v5514 = vsel %vm95, %v5486, 0.0
    %5515 = vadd.xlane.f32.xlu0 %v5514
    %v5516 = vpop.xlane.xlu0 %5515
    %v5517 = vsel %vm95, %v5487, 0.0
    %5518 = vadd.xlane.f32.xlu0 %v5517
    %v5519 = vpop.xlane.xlu0 %5518
    %v5520 = vsel %vm95, %v5488, 0.0
    %5521 = vadd.xlane.f32.xlu0 %v5520
    %v5522 = vpop.xlane.xlu0 %5521
    %v5523 = vsel %vm95, %v5489, 0.0
    %5524 = vadd.xlane.f32.xlu0 %v5523
    %v5525 = vpop.xlane.xlu0 %5524
    %v5526 = vsel %vm95, %v5490, 0.0
    %5527 = vadd.xlane.f32.xlu0 %v5526
    %v5528 = vpop.xlane.xlu0 %5527
    %v5529 = vsel %vm95, %v5491, 0.0
    %5530 = vadd.xlane.f32.xlu0 %v5529
    %v5531 = vpop.xlane.xlu0 %5530
    %v5532 = vsel %vm95, %v5492, 0.0
    %5533 = vadd.xlane.f32.xlu0 %v5532
    %v5534 = vpop.xlane.xlu0 %5533
    %v5535 = vsel %vm95, %v5493, 0.0
    %5536 = vadd.xlane.f32.xlu0 %v5535
    %v5537 = vpop.xlane.xlu0 %5536
    %v5538 = vsel %vm95, %v5494, 0.0
    %5539 = vadd.xlane.f32.xlu0 %v5538
    %v5540 = vpop.xlane.xlu0 %5539
    %v5541 = vsel %vm95, %v5495, 0.0
    %5542 = vadd.xlane.f32.xlu0 %v5541
    %v5543 = vpop.xlane.xlu0 %5542
    %v5544 = vsel %vm95, %v5496, 0.0
    %5545 = vadd.xlane.f32.xlu0 %v5544
    %v5546 = vpop.xlane.xlu0 %5545
    %v5547 = vsel %vm95, %v5497, 0.0
    %5548 = vadd.xlane.f32.xlu0 %v5547
    %v5549 = vpop.xlane.xlu0 %5548
    %v5550 = vsel %vm95, %v5498, 0.0
    %5551 = vadd.xlane.f32.xlu0 %v5550
    %v5552 = vpop.xlane.xlu0 %5551
    %v5553 = vsel %vm95, %v5499, 0.0
    %5554 = vadd.xlane.f32.xlu0 %v5553
    %v5555 = vpop.xlane.xlu0 %5554
    %v5556 = vsel %vm95, %v5500, 0.0
    %5557 = vadd.xlane.f32.xlu0 %v5556
    %v5558 = vpop.xlane.xlu0 %5557
    %v5559 = vsel %vm95, %v5501, 0.0
    %5560 = vadd.xlane.f32.xlu0 %v5559
    %v5561 = vpop.xlane.xlu0 %5560
    %v5562 = vmul.f32 %v5504, %v156
    %v5563 = vmul.f32 %v5507, %v156
    %v5564 = vmul.f32 %v5510, %v156
    %v5565 = vmul.f32 %v5513, %v156
    %v5566 = vmul.f32 %v5516, %v156
    %v5567 = vmul.f32 %v5519, %v156
    %v5568 = vmul.f32 %v5522, %v156
    %v5569 = vmul.f32 %v5525, %v156
    %v5570 = vmul.f32 %v5528, %v156
    %v5571 = vmul.f32 %v5531, %v156
    %v5572 = vmul.f32 %v5534, %v156
    %v5573 = vmul.f32 %v5537, %v156
    %v5574 = vmul.f32 %v5540, %v156
    %v5575 = vmul.f32 %v5543, %v156
    %v5576 = vmul.f32 %v5546, %v156
    %v5577 = vmul.f32 %v5549, %v156
    %v5578 = vmul.f32 %v5552, %v156
    %v5579 = vmul.f32 %v5555, %v156
    %v5580 = vmul.f32 %v5558, %v156
    %v5581 = vmul.f32 %v5561, %v156
    %v5582 = vadd.f32 %v5562, 1e-05
    %v5583 = vadd.f32 %v5563, 1e-05
    %v5584 = vadd.f32 %v5564, 1e-05
    %v5585 = vadd.f32 %v5565, 1e-05
    %v5586 = vadd.f32 %v5566, 1e-05
    %v5587 = vadd.f32 %v5567, 1e-05
    %v5588 = vadd.f32 %v5568, 1e-05
    %v5589 = vadd.f32 %v5569, 1e-05
    %v5590 = vadd.f32 %v5570, 1e-05
    %v5591 = vadd.f32 %v5571, 1e-05
    %v5592 = vadd.f32 %v5572, 1e-05
    %v5593 = vadd.f32 %v5573, 1e-05
    %v5594 = vadd.f32 %v5574, 1e-05
    %v5595 = vadd.f32 %v5575, 1e-05
    %v5596 = vadd.f32 %v5576, 1e-05
    %v5597 = vadd.f32 %v5577, 1e-05
    %v5598 = vadd.f32 %v5578, 1e-05
    %v5599 = vadd.f32 %v5579, 1e-05
    %v5600 = vadd.f32 %v5580, 1e-05
    %v5601 = vadd.f32 %v5581, 1e-05
    %v5602 = vrsqrt.pop %v5582
    %v5603 = vrsqrt.pop %v5583
    %v5604 = vrsqrt.pop %v5584
    %v5605 = vrsqrt.pop %v5585
    %v5606 = vrsqrt.pop %v5586
    %v5607 = vrsqrt.pop %v5587
    %v5608 = vrsqrt.pop %v5588
    %v5609 = vrsqrt.pop %v5589
    %v5610 = vrsqrt.pop %v5590
    %v5611 = vrsqrt.pop %v5591
    %v5612 = vrsqrt.pop %v5592
    %v5613 = vrsqrt.pop %v5593
    %v5614 = vrsqrt.pop %v5594
    %v5615 = vrsqrt.pop %v5595
    %v5616 = vrsqrt.pop %v5596
    %v5617 = vrsqrt.pop %v5597
    %v5618 = vrsqrt.pop %v5598
    %v5619 = vrsqrt.pop %v5599
    %v5620 = vrsqrt.pop %v5600
    %v5621 = vrsqrt.pop %v5601
    %v5622 = vmul.f32 %v5462, %v5602
    %v5623 = vmul.f32 %v5463, %v5603
    %v5624 = vmul.f32 %v5464, %v5604
    %v5625 = vmul.f32 %v5465, %v5605
    %v5626 = vmul.f32 %v5466, %v5606
    %v5627 = vmul.f32 %v5467, %v5607
    %v5628 = vmul.f32 %v5468, %v5608
    %v5629 = vmul.f32 %v5469, %v5609
    %v5630 = vmul.f32 %v5470, %v5610
    %v5631 = vmul.f32 %v5471, %v5611
    %v5632 = vmul.f32 %v5472, %v5612
    %v5633 = vmul.f32 %v5473, %v5613
    %v5634 = vmul.f32 %v5474, %v5614
    %v5635 = vmul.f32 %v5475, %v5615
    %v5636 = vmul.f32 %v5476, %v5616
    %v5637 = vmul.f32 %v5477, %v5617
    %v5638 = vmul.f32 %v5478, %v5618
    %v5639 = vmul.f32 %v5479, %v5619
    %v5640 = vmul.f32 %v5480, %v5620
    %v5641 = vmul.f32 %v5481, %v5621
    %v5642 = vlaneseq
    %v5643 = vshrl.u32 %v5642, 7
    %v5644 = vsub.s32 6, %v5643
    %v5645 = vrot.slane %v93, %v5644
    %v5646 = vmul.f32 %v5622, %v5645
    %v5647 = vmul.f32 %v5623, %v5645
    %v5648 = vmul.f32 %v5624, %v5645
    %v5649 = vmul.f32 %v5625, %v5645
    %v5650 = vmul.f32 %v5626, %v5645
    %v5651 = vmul.f32 %v5627, %v5645
    %v5652 = vmul.f32 %v5628, %v5645
    %v5653 = vmul.f32 %v5629, %v5645
    %v5654 = vmul.f32 %v5630, %v5645
    %v5655 = vmul.f32 %v5631, %v5645
    %v5656 = vmul.f32 %v5632, %v5645
    %v5657 = vmul.f32 %v5633, %v5645
    %v5658 = vmul.f32 %v5634, %v5645
    %v5659 = vmul.f32 %v5635, %v5645
    %v5660 = vmul.f32 %v5636, %v5645
    %v5661 = vmul.f32 %v5637, %v5645
    %v5662 = vmul.f32 %v5638, %v5645
    %v5663 = vmul.f32 %v5639, %v5645
    %v5664 = vmul.f32 %v5640, %v5645
    %v5665 = vmul.f32 %v5641, %v5645
    %v5666 = vlaneseq
    %v5667 = vshrl.u32 %v5666, 7
    %v5668 = vsub.s32 7, %v5667
    %v5669 = vrot.slane %v93, %v5668
    %v5670 = vadd.f32 %v5646, %v5669
    %v5671 = vadd.f32 %v5647, %v5669
    %v5672 = vadd.f32 %v5648, %v5669
    %v5673 = vadd.f32 %v5649, %v5669
    %v5674 = vadd.f32 %v5650, %v5669
    %v5675 = vadd.f32 %v5651, %v5669
    %v5676 = vadd.f32 %v5652, %v5669
    %v5677 = vadd.f32 %v5653, %v5669
    %v5678 = vadd.f32 %v5654, %v5669
    %v5679 = vadd.f32 %v5655, %v5669
    %v5680 = vadd.f32 %v5656, %v5669
    %v5681 = vadd.f32 %v5657, %v5669
    %v5682 = vadd.f32 %v5658, %v5669
    %v5683 = vadd.f32 %v5659, %v5669
    %v5684 = vadd.f32 %v5660, %v5669
    %v5685 = vadd.f32 %v5661, %v5669
    %v5686 = vadd.f32 %v5662, %v5669
    %v5687 = vadd.f32 %v5663, %v5669
    %v5688 = vadd.f32 %v5664, %v5669
    %v5689 = vadd.f32 %v5665, %v5669
    %v5690 = vld [vmem:[#allocation6] sm:$0xff]
    %v5691 = vld [vmem:[#allocation6 + $0x8] sm:$0xff]
    %v5692 = vld [vmem:[#allocation6 + $0x10] sm:$0xff]
    %v5693 = vld [vmem:[#allocation6 + $0x18] sm:$0xff]
    %v5694 = vlaneseq
    %v5695 = vshrl.u32 %v5694, 7
    %v5696 = vsub.s32 1, %v5695
    %v5697 = vrot.slane %v94, %v5696
    %v5699 = vsel %vm95, %v5670, 0
    %v5702 = vsel %vm95, %v5671, 0
    %v5705 = vsel %vm95, %v5672, 0
    %v5708 = vsel %vm95, %v5673, 0
    %v5711 = vsel %vm95, %v5674, 0
    %v5714 = vsel %vm95, %v5675, 0
    %v5717 = vsel %vm95, %v5676, 0
    %v5720 = vsel %vm95, %v5677, 0
    %v5723 = vsel %vm95, %v5678, 0
    %v5726 = vsel %vm95, %v5679, 0
    %v5729 = vsel %vm95, %v5680, 0
    %v5732 = vsel %vm95, %v5681, 0
    %v5735 = vsel %vm95, %v5682, 0
    %v5738 = vsel %vm95, %v5683, 0
    %v5741 = vsel %vm95, %v5684, 0
    %v5744 = vsel %vm95, %v5685, 0
    %v5747 = vsel %vm95, %v5686, 0
    %v5750 = vsel %vm95, %v5687, 0
    %v5753 = vsel %vm95, %v5688, 0
    %v5756 = vsel %vm95, %v5689, 0
    %5758 = vmatprep.subr.mxu0 0.0
    %5759 = vmatpush1.msra.mxu0 %v5690
    %5760 = vmatprep.subr.mxu0 0.0
    %5761 = vmatpush1.msra.mxu0 %v5691
    %5762 = vmatprep.subr.mxu0 0.0
    %5763 = vmatpush1.msra.mxu0 %v5692
    %5764 = vmatprep.subr.mxu0 0.0
    %5765 = vmatpush1.msra.mxu0 %v5693
    %5766 = vmatprep.subr.mxu0 0.0
    %5767 = vmatpush1.msra.mxu0 0.0
    %5768 = vmatprep.subr.mxu0 0.0
    %5769 = vmatpush1.msra.mxu0 0.0
    %5770 = vmatprep.subr.mxu0 0.0
    %5771 = vmatpush1.msra.mxu0 0.0
    %5772 = vmatprep.subr.mxu0 0.0
    %5773 = vmatpush1.msra.mxu0 0.0
    %5774 = vmatprep.subr.mxu0 0.0
    %5775 = vmatpush1.msra.mxu0 0.0
    %5776 = vmatprep.subr.mxu0 0.0
    %5777 = vmatpush1.msra.mxu0 0.0
    %5778 = vmatprep.subr.mxu0 0.0
    %5779 = vmatpush1.msra.mxu0 0.0
    %5780 = vmatprep.subr.mxu0 0.0
    %5781 = vmatpush1.msra.mxu0 0.0
    %5782 = vmatprep.subr.mxu0 0.0
    %5783 = vmatpush1.msra.mxu0 0.0
    %5784 = vmatprep.subr.mxu0 0.0
    %5785 = vmatpush1.msra.mxu0 0.0
    %5786 = vmatprep.subr.mxu0 0.0
    %5787 = vmatpush1.msra.mxu0 0.0
    %5788 = vmatprep.subr.mxu0 0.0
    %5789 = vmatpush1.msra.mxu0 0.0
    %5790 = vmatprep.subr.mxu0 0.0
    %5791 = vmatpush1.msra.mxu0 0.0
    %5792 = vmatprep.subr.mxu0 0.0
    %5793 = vmatpush1.msra.mxu0 0.0
    %5794 = vmatprep.subr.mxu0 0.0
    %5795 = vmatpush1.msra.mxu0 0.0
    %5796 = vmatprep.subr.mxu0 0.0
    %5797 = vmatpush1.msra.mxu0 0.0
    %5798 = vmatprep.subr.mxu0 0.0
    %5799 = vmatpush1.msra.mxu0 0.0
    %5800 = vmatprep.subr.mxu0 0.0
    %5801 = vmatpush1.msra.mxu0 0.0
    %5802 = vmatprep.subr.mxu0 0.0
    %5803 = vmatpush1.msra.mxu0 0.0
    %5804 = vmatprep.subr.mxu0 0.0
    %5805 = vmatpush1.msra.mxu0 0.0
    %5806 = vmatprep.subr.mxu0 0.0
    %5807 = vmatpush1.msra.mxu0 0.0
    %5808 = vmatprep.subr.mxu0 0.0
    %5809 = vmatpush1.msra.mxu0 0.0
    %5810 = vmatprep.subr.mxu0 0.0
    %5811 = vmatpush1.msra.mxu0 0.0
    %5812 = vmatprep.subr.mxu0 0.0
    %5813 = vmatpush1.msra.mxu0 0.0
    %5814 = vmatprep.subr.mxu0 0.0
    %5815 = vmatpush1.msra.mxu0 0.0
    %5816 = vmatprep.subr.mxu0 0.0
    %5817 = vmatpush1.msra.mxu0 0.0
    %5818 = vmatprep.subr.mxu0 0.0
    %5819 = vmatpush1.msra.mxu0 0.0
    %5820 = vmatprep.subr.mxu0 0.0
    %5821 = vmatpush1.msra.mxu0 0.0
    %5822 = vmatprep.mubr.f32.mxu0 0.0
    %5823 = vmatmul.mubr.f32.gmra.mrb[0].mxu0 %v5699
    %v5824 = vpop.f32.mrb[0].mxu0
    %v5825 = vadd.f32 %v5697, %v5824
    %v5826 = vpop.f32.mrb[0].mxu0
    %5827 = vmatprep.mubr.f32.mxu0 0.0
    %5828 = vmatmul.mubr.f32.gmra.mrb[0].mxu0 %v5702
    %v5829 = vpop.f32.mrb[0].mxu0
    %v5830 = vadd.f32 %v5697, %v5829
    %v5831 = vpop.f32.mrb[0].mxu0
    %5832 = vmatprep.mubr.f32.mxu0 0.0
    %5833 = vmatmul.mubr.f32.gmra.mrb[0].mxu0 %v5705
    %v5834 = vpop.f32.mrb[0].mxu0
    %v5835 = vadd.f32 %v5697, %v5834
    %v5836 = vpop.f32.mrb[0].mxu0
    %5837 = vmatprep.mubr.f32.mxu0 0.0
    %5838 = vmatmul.mubr.f32.gmra.mrb[0].mxu0 %v5708
    %v5839 = vpop.f32.mrb[0].mxu0
    %v5840 = vadd.f32 %v5697, %v5839
    %v5841 = vpop.f32.mrb[0].mxu0
    %5842 = vmatprep.mubr.f32.mxu0 0.0
    %5843 = vmatmul.mubr.f32.gmra.mrb[0].mxu0 %v5711
    %v5844 = vpop.f32.mrb[0].mxu0
    %v5845 = vadd.f32 %v5697, %v5844
    %v5846 = vpop.f32.mrb[0].mxu0
    %5847 = vmatprep.mubr.f32.mxu0 0.0
    %5848 = vmatmul.mubr.f32.gmra.mrb[0].mxu0 %v5714
    %v5849 = vpop.f32.mrb[0].mxu0
    %v5850 = vadd.f32 %v5697, %v5849
    %v5851 = vpop.f32.mrb[0].mxu0
    %5852 = vmatprep.mubr.f32.mxu0 0.0
    %5853 = vmatmul.mubr.f32.gmra.mrb[0].mxu0 %v5717
    %v5854 = vpop.f32.mrb[0].mxu0
    %v5855 = vadd.f32 %v5697, %v5854
    %v5856 = vpop.f32.mrb[0].mxu0
    %5857 = vmatprep.mubr.f32.mxu0 0.0
    %5858 = vmatmul.mubr.f32.gmra.mrb[0].mxu0 %v5720
    %v5859 = vpop.f32.mrb[0].mxu0
    %v5860 = vadd.f32 %v5697, %v5859
    %v5861 = vpop.f32.mrb[0].mxu0
    %5862 = vmatprep.mubr.f32.mxu0 0.0
    %5863 = vmatmul.mubr.f32.gmra.mrb[0].mxu0 %v5723
    %v5864 = vpop.f32.mrb[0].mxu0
    %v5865 = vadd.f32 %v5697, %v5864
    %v5866 = vpop.f32.mrb[0].mxu0
    %5867 = vmatprep.mubr.f32.mxu0 0.0
    %5868 = vmatmul.mubr.f32.gmra.mrb[0].mxu0 %v5726
    %v5869 = vpop.f32.mrb[0].mxu0
    %v5870 = vadd.f32 %v5697, %v5869
    %v5871 = vpop.f32.mrb[0].mxu0
    %5872 = vmatprep.mubr.f32.mxu0 0.0
    %5873 = vmatmul.mubr.f32.gmra.mrb[0].mxu0 %v5729
    %v5874 = vpop.f32.mrb[0].mxu0
    %v5875 = vadd.f32 %v5697, %v5874
    %v5876 = vpop.f32.mrb[0].mxu0
    %5877 = vmatprep.mubr.f32.mxu0 0.0
    %5878 = vmatmul.mubr.f32.gmra.mrb[0].mxu0 %v5732
    %v5879 = vpop.f32.mrb[0].mxu0
    %v5880 = vadd.f32 %v5697, %v5879
    %v5881 = vpop.f32.mrb[0].mxu0
    %5882 = vmatprep.mubr.f32.mxu0 0.0
    %5883 = vmatmul.mubr.f32.gmra.mrb[0].mxu0 %v5735
    %v5884 = vpop.f32.mrb[0].mxu0
    %v5885 = vadd.f32 %v5697, %v5884
    %v5886 = vpop.f32.mrb[0].mxu0
    %5887 = vmatprep.mubr.f32.mxu0 0.0
    %5888 = vmatmul.mubr.f32.gmra.mrb[0].mxu0 %v5738
    %v5889 = vpop.f32.mrb[0].mxu0
    %v5890 = vadd.f32 %v5697, %v5889
    %v5891 = vpop.f32.mrb[0].mxu0
    %5892 = vmatprep.mubr.f32.mxu0 0.0
    %5893 = vmatmul.mubr.f32.gmra.mrb[0].mxu0 %v5741
    %v5894 = vpop.f32.mrb[0].mxu0
    %v5895 = vadd.f32 %v5697, %v5894
    %v5896 = vpop.f32.mrb[0].mxu0
    %5897 = vmatprep.mubr.f32.mxu0 0.0
    %5898 = vmatmul.mubr.f32.gmra.mrb[0].mxu0 %v5744
    %v5899 = vpop.f32.mrb[0].mxu0
    %v5900 = vadd.f32 %v5697, %v5899
    %v5901 = vpop.f32.mrb[0].mxu0
    %5902 = vmatprep.mubr.f32.mxu0 0.0
    %5903 = vmatmul.mubr.f32.gmra.mrb[0].mxu0 %v5747
    %v5904 = vpop.f32.mrb[0].mxu0
    %v5905 = vadd.f32 %v5697, %v5904
    %v5906 = vpop.f32.mrb[0].mxu0
    %5907 = vmatprep.mubr.f32.mxu0 0.0
    %5908 = vmatmul.mubr.f32.gmra.mrb[0].mxu0 %v5750
    %v5909 = vpop.f32.mrb[0].mxu0
    %v5910 = vadd.f32 %v5697, %v5909
    %v5911 = vpop.f32.mrb[0].mxu0
    %5912 = vmatprep.mubr.f32.mxu0 0.0
    %5913 = vmatmul.mubr.f32.gmra.mrb[0].mxu0 %v5753
    %v5914 = vpop.f32.mrb[0].mxu0
    %v5915 = vadd.f32 %v5697, %v5914
    %v5916 = vpop.f32.mrb[0].mxu0
    %5917 = vmatprep.mubr.f32.mxu0 0.0
    %5918 = vmatmul.mubr.f32.gmra.mrb[0].mxu0 %v5756
    %v5919 = vpop.f32.mrb[0].mxu0
    %v5920 = vadd.f32 %v5697, %v5919
    %v5921 = vpop.f32.mrb[0].mxu0
    %5922 = vdwg.mxu0
    %v5923 = vmul.f32 %v5825, 0.5
    %v5924 = vmul.f32 %v5830, 0.5
    %v5925 = vmul.f32 %v5835, 0.5
    %v5926 = vmul.f32 %v5840, 0.5
    %v5927 = vmul.f32 %v5845, 0.5
    %v5928 = vmul.f32 %v5850, 0.5
    %v5929 = vmul.f32 %v5855, 0.5
    %v5930 = vmul.f32 %v5860, 0.5
    %v5931 = vmul.f32 %v5865, 0.5
    %v5932 = vmul.f32 %v5870, 0.5
    %v5933 = vmul.f32 %v5875, 0.5
    %v5934 = vmul.f32 %v5880, 0.5
    %v5935 = vmul.f32 %v5885, 0.5
    %v5936 = vmul.f32 %v5890, 0.5
    %v5937 = vmul.f32 %v5895, 0.5
    %v5938 = vmul.f32 %v5900, 0.5
    %v5939 = vmul.f32 %v5905, 0.5
    %v5940 = vmul.f32 %v5910, 0.5
    %v5941 = vmul.f32 %v5915, 0.5
    %v5942 = vmul.f32 %v5920, 0.5
    %v5943 = vmul.f32 %v5825, 0.044715
    %v5944 = vmul.f32 %v5830, 0.044715
    %v5945 = vmul.f32 %v5835, 0.044715
    %v5946 = vmul.f32 %v5840, 0.044715
    %v5947 = vmul.f32 %v5845, 0.044715
    %v5948 = vmul.f32 %v5850, 0.044715
    %v5949 = vmul.f32 %v5855, 0.044715
    %v5950 = vmul.f32 %v5860, 0.044715
    %v5951 = vmul.f32 %v5865, 0.044715
    %v5952 = vmul.f32 %v5870, 0.044715
    %v5953 = vmul.f32 %v5875, 0.044715
    %v5954 = vmul.f32 %v5880, 0.044715
    %v5955 = vmul.f32 %v5885, 0.044715
    %v5956 = vmul.f32 %v5890, 0.044715
    %v5957 = vmul.f32 %v5895, 0.044715
    %v5958 = vmul.f32 %v5900, 0.044715
    %v5959 = vmul.f32 %v5905, 0.044715
    %v5960 = vmul.f32 %v5910, 0.044715
    %v5961 = vmul.f32 %v5915, 0.044715
    %v5962 = vmul.f32 %v5920, 0.044715
    %v5963 = vmul.f32 %v5943, %v5825
    %v5964 = vmul.f32 %v5944, %v5830
    %v5965 = vmul.f32 %v5945, %v5835
    %v5966 = vmul.f32 %v5946, %v5840
    %v5967 = vmul.f32 %v5947, %v5845
    %v5968 = vmul.f32 %v5948, %v5850
    %v5969 = vmul.f32 %v5949, %v5855
    %v5970 = vmul.f32 %v5950, %v5860
    %v5971 = vmul.f32 %v5951, %v5865
    %v5972 = vmul.f32 %v5952, %v5870
    %v5973 = vmul.f32 %v5953, %v5875
    %v5974 = vmul.f32 %v5954, %v5880
    %v5975 = vmul.f32 %v5955, %v5885
    %v5976 = vmul.f32 %v5956, %v5890
    %v5977 = vmul.f32 %v5957, %v5895
    %v5978 = vmul.f32 %v5958, %v5900
    %v5979 = vmul.f32 %v5959, %v5905
    %v5980 = vmul.f32 %v5960, %v5910
    %v5981 = vmul.f32 %v5961, %v5915
    %v5982 = vmul.f32 %v5962, %v5920
    %v5983 = vmul.f32 %v5963, %v5825
    %v5984 = vmul.f32 %v5964, %v5830
    %v5985 = vmul.f32 %v5965, %v5835
    %v5986 = vmul.f32 %v5966, %v5840
    %v5987 = vmul.f32 %v5967, %v5845
    %v5988 = vmul.f32 %v5968, %v5850
    %v5989 = vmul.f32 %v5969, %v5855
    %v5990 = vmul.f32 %v5970, %v5860
    %v5991 = vmul.f32 %v5971, %v5865
    %v5992 = vmul.f32 %v5972, %v5870
    %v5993 = vmul.f32 %v5973, %v5875
    %v5994 = vmul.f32 %v5974, %v5880
    %v5995 = vmul.f32 %v5975, %v5885
    %v5996 = vmul.f32 %v5976, %v5890
    %v5997 = vmul.f32 %v5977, %v5895
    %v5998 = vmul.f32 %v5978, %v5900
    %v5999 = vmul.f32 %v5979, %v5905
    %v6000 = vmul.f32 %v5980, %v5910
    %v6001 = vmul.f32 %v5981, %v5915
    %v6002 = vmul.f32 %v5982, %v5920
    %v6003 = vadd.f32 %v5825, %v5983
    %v6004 = vadd.f32 %v5830, %v5984
    %v6005 = vadd.f32 %v5835, %v5985
    %v6006 = vadd.f32 %v5840, %v5986
    %v6007 = vadd.f32 %v5845, %v5987
    %v6008 = vadd.f32 %v5850, %v5988
    %v6009 = vadd.f32 %v5855, %v5989
    %v6010 = vadd.f32 %v5860, %v5990
    %v6011 = vadd.f32 %v5865, %v5991
    %v6012 = vadd.f32 %v5870, %v5992
    %v6013 = vadd.f32 %v5875, %v5993
    %v6014 = vadd.f32 %v5880, %v5994
    %v6015 = vadd.f32 %v5885, %v5995
    %v6016 = vadd.f32 %v5890, %v5996
    %v6017 = vadd.f32 %v5895, %v5997
    %v6018 = vadd.f32 %v5900, %v5998
    %v6019 = vadd.f32 %v5905, %v5999
    %v6020 = vadd.f32 %v5910, %v6000
    %v6021 = vadd.f32 %v5915, %v6001
    %v6022 = vadd.f32 %v5920, %v6002
    %v6023 = vmul.f32 %v6003, 0.7978846
    %v6024 = vmul.f32 %v6004, 0.7978846
    %v6025 = vmul.f32 %v6005, 0.7978846
    %v6026 = vmul.f32 %v6006, 0.7978846
    %v6027 = vmul.f32 %v6007, 0.7978846
    %v6028 = vmul.f32 %v6008, 0.7978846
    %v6029 = vmul.f32 %v6009, 0.7978846
    %v6030 = vmul.f32 %v6010, 0.7978846
    %v6031 = vmul.f32 %v6011, 0.7978846
    %v6032 = vmul.f32 %v6012, 0.7978846
    %v6033 = vmul.f32 %v6013, 0.7978846
    %v6034 = vmul.f32 %v6014, 0.7978846
    %v6035 = vmul.f32 %v6015, 0.7978846
    %v6036 = vmul.f32 %v6016, 0.7978846
    %v6037 = vmul.f32 %v6017, 0.7978846
    %v6038 = vmul.f32 %v6018, 0.7978846
    %v6039 = vmul.f32 %v6019, 0.7978846
    %v6040 = vmul.f32 %v6020, 0.7978846
    %v6041 = vmul.f32 %v6021, 0.7978846
    %v6042 = vmul.f32 %v6022, 0.7978846
    %v6043 = vtanh.pop %v6023
    %v6044 = vtanh.pop %v6024
    %v6045 = vtanh.pop %v6025
    %v6046 = vtanh.pop %v6026
    %v6047 = vtanh.pop %v6027
    %v6048 = vtanh.pop %v6028
    %v6049 = vtanh.pop %v6029
    %v6050 = vtanh.pop %v6030
    %v6051 = vtanh.pop %v6031
    %v6052 = vtanh.pop %v6032
    %v6053 = vtanh.pop %v6033
    %v6054 = vtanh.pop %v6034
    %v6055 = vtanh.pop %v6035
    %v6056 = vtanh.pop %v6036
    %v6057 = vtanh.pop %v6037
    %v6058 = vtanh.pop %v6038
    %v6059 = vtanh.pop %v6039
    %v6060 = vtanh.pop %v6040
    %v6061 = vtanh.pop %v6041
    %v6062 = vtanh.pop %v6042
    %v6063 = vadd.f32 %v6043, 1.0
    %v6064 = vadd.f32 %v6044, 1.0
    %v6065 = vadd.f32 %v6045, 1.0
    %v6066 = vadd.f32 %v6046, 1.0
    %v6067 = vadd.f32 %v6047, 1.0
    %v6068 = vadd.f32 %v6048, 1.0
    %v6069 = vadd.f32 %v6049, 1.0
    %v6070 = vadd.f32 %v6050, 1.0
    %v6071 = vadd.f32 %v6051, 1.0
    %v6072 = vadd.f32 %v6052, 1.0
    %v6073 = vadd.f32 %v6053, 1.0
    %v6074 = vadd.f32 %v6054, 1.0
    %v6075 = vadd.f32 %v6055, 1.0
    %v6076 = vadd.f32 %v6056, 1.0
    %v6077 = vadd.f32 %v6057, 1.0
    %v6078 = vadd.f32 %v6058, 1.0
    %v6079 = vadd.f32 %v6059, 1.0
    %v6080 = vadd.f32 %v6060, 1.0
    %v6081 = vadd.f32 %v6061, 1.0
    %v6082 = vadd.f32 %v6062, 1.0
    %v6083 = vmul.f32 %v5923, %v6063
    %v6084 = vmul.f32 %v5924, %v6064
    %v6085 = vmul.f32 %v5925, %v6065
    %v6086 = vmul.f32 %v5926, %v6066
    %v6087 = vmul.f32 %v5927, %v6067
    %v6088 = vmul.f32 %v5928, %v6068
    %v6089 = vmul.f32 %v5929, %v6069
    %v6090 = vmul.f32 %v5930, %v6070
    %v6091 = vmul.f32 %v5931, %v6071
    %v6092 = vmul.f32 %v5932, %v6072
    %v6093 = vmul.f32 %v5933, %v6073
    %v6094 = vmul.f32 %v5934, %v6074
    %v6095 = vmul.f32 %v5935, %v6075
    %v6096 = vmul.f32 %v5936, %v6076
    %v6097 = vmul.f32 %v5937, %v6077
    %v6098 = vmul.f32 %v5938, %v6078
    %v6099 = vmul.f32 %v5939, %v6079
    %v6100 = vmul.f32 %v5940, %v6080
    %v6101 = vmul.f32 %v5941, %v6081
    %v6102 = vmul.f32 %v5942, %v6082
    %v6103 = vld [vmem:[%s7] sm:$0xff]
    %v6104 = vld [vmem:[%s7 + $0x8] sm:$0xff]
    %v6105 = vld [vmem:[%s7 + $0x10] sm:$0xff]
    %v6106 = vld [vmem:[%s7 + $0x18] sm:$0xff]
    %v6107 = vld [vmem:[%s7 + $0x20] sm:$0xff]
    %v6108 = vld [vmem:[%s7 + $0x28] sm:$0xff]
    %v6109 = vld [vmem:[%s7 + $0x30] sm:$0xff]
    %v6110 = vld [vmem:[%s7 + $0x38] sm:$0xff]
    %v6111 = vld [vmem:[%s7 + $0x40] sm:$0xff]
    %v6112 = vld [vmem:[%s7 + $0x48] sm:$0xff]
    %v6113 = vld [vmem:[%s7 + $0x50] sm:$0xff]
    %v6114 = vld [vmem:[%s7 + $0x58] sm:$0xff]
    %v6115 = vld [vmem:[%s7 + $0x60] sm:$0xff]
    %v6116 = vld [vmem:[%s7 + $0x68] sm:$0xff]
    %v6117 = vld [vmem:[%s7 + $0x70] sm:$0xff]
    %v6118 = vld [vmem:[%s7 + $0x78] sm:$0xff]
    %6119 = vmatprep.subr.mxu0 0.0
    %6120 = vmatpush1.msra.mxu0 %v6103
    %6121 = vmatprep.subr.mxu0 0.0
    %6122 = vmatpush1.msra.mxu0 %v6104
    %6123 = vmatprep.subr.mxu0 0.0
    %6124 = vmatpush1.msra.mxu0 %v6105
    %6125 = vmatprep.subr.mxu0 0.0
    %6126 = vmatpush1.msra.mxu0 %v6106
    %6127 = vmatprep.subr.mxu0 0.0
    %6128 = vmatpush1.msra.mxu0 %v6107
    %6129 = vmatprep.subr.mxu0 0.0
    %6130 = vmatpush1.msra.mxu0 %v6108
    %6131 = vmatprep.subr.mxu0 0.0
    %6132 = vmatpush1.msra.mxu0 %v6109
    %6133 = vmatprep.subr.mxu0 0.0
    %6134 = vmatpush1.msra.mxu0 %v6110
    %6135 = vmatprep.subr.mxu0 0.0
    %6136 = vmatpush1.msra.mxu0 %v6111
    %6137 = vmatprep.subr.mxu0 0.0
    %6138 = vmatpush1.msra.mxu0 %v6112
    %6139 = vmatprep.subr.mxu0 0.0
    %6140 = vmatpush1.msra.mxu0 %v6113
    %6141 = vmatprep.subr.mxu0 0.0
    %6142 = vmatpush1.msra.mxu0 %v6114
    %6143 = vmatprep.subr.mxu0 0.0
    %6144 = vmatpush1.msra.mxu0 %v6115
    %6145 = vmatprep.subr.mxu0 0.0
    %6146 = vmatpush1.msra.mxu0 %v6116
    %6147 = vmatprep.subr.mxu0 0.0
    %6148 = vmatpush1.msra.mxu0 %v6117
    %6149 = vmatprep.subr.mxu0 0.0
    %6150 = vmatpush1.msra.mxu0 %v6118
    %6151 = vmatprep.subr.mxu0 0.0
    %6152 = vmatpush1.msra.mxu0 0.0
    %6153 = vmatprep.subr.mxu0 0.0
    %6154 = vmatpush1.msra.mxu0 0.0
    %6155 = vmatprep.subr.mxu0 0.0
    %6156 = vmatpush1.msra.mxu0 0.0
    %6157 = vmatprep.subr.mxu0 0.0
    %6158 = vmatpush1.msra.mxu0 0.0
    %6159 = vmatprep.subr.mxu0 0.0
    %6160 = vmatpush1.msra.mxu0 0.0
    %6161 = vmatprep.subr.mxu0 0.0
    %6162 = vmatpush1.msra.mxu0 0.0
    %6163 = vmatprep.subr.mxu0 0.0
    %6164 = vmatpush1.msra.mxu0 0.0
    %6165 = vmatprep.subr.mxu0 0.0
    %6166 = vmatpush1.msra.mxu0 0.0
    %6167 = vmatprep.subr.mxu0 0.0
    %6168 = vmatpush1.msra.mxu0 0.0
    %6169 = vmatprep.subr.mxu0 0.0
    %6170 = vmatpush1.msra.mxu0 0.0
    %6171 = vmatprep.subr.mxu0 0.0
    %6172 = vmatpush1.msra.mxu0 0.0
    %6173 = vmatprep.subr.mxu0 0.0
    %6174 = vmatpush1.msra.mxu0 0.0
    %6175 = vmatprep.subr.mxu0 0.0
    %6176 = vmatpush1.msra.mxu0 0.0
    %6177 = vmatprep.subr.mxu0 0.0
    %6178 = vmatpush1.msra.mxu0 0.0
    %6179 = vmatprep.subr.mxu0 0.0
    %6180 = vmatpush1.msra.mxu0 0.0
    %6181 = vmatprep.subr.mxu0 0.0
    %6182 = vmatpush1.msra.mxu0 0.0
    %6183 = vmatprep.mubr.f32.mxu0 0.0
    %6184 = vmatmul.mubr.f32.gmra.mrb[0].mxu0 %v6083
    %v6185 = vpop.f32.mrb[0].mxu0
    %v6186 = vadd.f32 0.0, %v6185
    %v6187 = vpop.f32.mrb[0].mxu0
    %6188 = vmatprep.mubr.f32.mxu0 0.0
    %6189 = vmatmul.mubr.f32.gmra.mrb[0].mxu0 %v6084
    %v6190 = vpop.f32.mrb[0].mxu0
    %v6191 = vadd.f32 0.0, %v6190
    %v6192 = vpop.f32.mrb[0].mxu0
    %6193 = vmatprep.mubr.f32.mxu0 0.0
    %6194 = vmatmul.mubr.f32.gmra.mrb[0].mxu0 %v6085
    %v6195 = vpop.f32.mrb[0].mxu0
    %v6196 = vadd.f32 0.0, %v6195
    %v6197 = vpop.f32.mrb[0].mxu0
    %6198 = vmatprep.mubr.f32.mxu0 0.0
    %6199 = vmatmul.mubr.f32.gmra.mrb[0].mxu0 %v6086
    %v6200 = vpop.f32.mrb[0].mxu0
    %v6201 = vadd.f32 0.0, %v6200
    %v6202 = vpop.f32.mrb[0].mxu0
    %6203 = vmatprep.mubr.f32.mxu0 0.0
    %6204 = vmatmul.mubr.f32.gmra.mrb[0].mxu0 %v6087
    %v6205 = vpop.f32.mrb[0].mxu0
    %v6206 = vadd.f32 0.0, %v6205
    %v6207 = vpop.f32.mrb[0].mxu0
    %6208 = vmatprep.mubr.f32.mxu0 0.0
    %6209 = vmatmul.mubr.f32.gmra.mrb[0].mxu0 %v6088
    %v6210 = vpop.f32.mrb[0].mxu0
    %v6211 = vadd.f32 0.0, %v6210
    %v6212 = vpop.f32.mrb[0].mxu0
    %6213 = vmatprep.mubr.f32.mxu0 0.0
    %6214 = vmatmul.mubr.f32.gmra.mrb[0].mxu0 %v6089
    %v6215 = vpop.f32.mrb[0].mxu0
    %v6216 = vadd.f32 0.0, %v6215
    %v6217 = vpop.f32.mrb[0].mxu0
    %6218 = vmatprep.mubr.f32.mxu0 0.0
    %6219 = vmatmul.mubr.f32.gmra.mrb[0].mxu0 %v6090
    %v6220 = vpop.f32.mrb[0].mxu0
    %v6221 = vadd.f32 0.0, %v6220
    %v6222 = vpop.f32.mrb[0].mxu0
    %6223 = vmatprep.mubr.f32.mxu0 0.0
    %6224 = vmatmul.mubr.f32.gmra.mrb[0].mxu0 %v6091
    %v6225 = vpop.f32.mrb[0].mxu0
    %v6226 = vadd.f32 0.0, %v6225
    %v6227 = vpop.f32.mrb[0].mxu0
    %6228 = vmatprep.mubr.f32.mxu0 0.0
    %6229 = vmatmul.mubr.f32.gmra.mrb[0].mxu0 %v6092
    %v6230 = vpop.f32.mrb[0].mxu0
    %v6231 = vadd.f32 0.0, %v6230
    %v6232 = vpop.f32.mrb[0].mxu0
    %6233 = vmatprep.mubr.f32.mxu0 0.0
    %6234 = vmatmul.mubr.f32.gmra.mrb[0].mxu0 %v6093
    %v6235 = vpop.f32.mrb[0].mxu0
    %v6236 = vadd.f32 0.0, %v6235
    %v6237 = vpop.f32.mrb[0].mxu0
    %6238 = vmatprep.mubr.f32.mxu0 0.0
    %6239 = vmatmul.mubr.f32.gmra.mrb[0].mxu0 %v6094
    %v6240 = vpop.f32.mrb[0].mxu0
    %v6241 = vadd.f32 0.0, %v6240
    %v6242 = vpop.f32.mrb[0].mxu0
    %6243 = vmatprep.mubr.f32.mxu0 0.0
    %6244 = vmatmul.mubr.f32.gmra.mrb[0].mxu0 %v6095
    %v6245 = vpop.f32.mrb[0].mxu0
    %v6246 = vadd.f32 0.0, %v6245
    %v6247 = vpop.f32.mrb[0].mxu0
    %6248 = vmatprep.mubr.f32.mxu0 0.0
    %6249 = vmatmul.mubr.f32.gmra.mrb[0].mxu0 %v6096
    %v6250 = vpop.f32.mrb[0].mxu0
    %v6251 = vadd.f32 0.0, %v6250
    %v6252 = vpop.f32.mrb[0].mxu0
    %6253 = vmatprep.mubr.f32.mxu0 0.0
    %6254 = vmatmul.mubr.f32.gmra.mrb[0].mxu0 %v6097
    %v6255 = vpop.f32.mrb[0].mxu0
    %v6256 = vadd.f32 0.0, %v6255
    %v6257 = vpop.f32.mrb[0].mxu0
    %6258 = vmatprep.mubr.f32.mxu0 0.0
    %6259 = vmatmul.mubr.f32.gmra.mrb[0].mxu0 %v6098
    %v6260 = vpop.f32.mrb[0].mxu0
    %v6261 = vadd.f32 0.0, %v6260
    %v6262 = vpop.f32.mrb[0].mxu0
    %6263 = vmatprep.mubr.f32.mxu0 0.0
    %6264 = vmatmul.mubr.f32.gmra.mrb[0].mxu0 %v6099
    %v6265 = vpop.f32.mrb[0].mxu0
    %v6266 = vadd.f32 0.0, %v6265
    %v6267 = vpop.f32.mrb[0].mxu0
    %6268 = vmatprep.mubr.f32.mxu0 0.0
    %6269 = vmatmul.mubr.f32.gmra.mrb[0].mxu0 %v6100
    %v6270 = vpop.f32.mrb[0].mxu0
    %v6271 = vadd.f32 0.0, %v6270
    %v6272 = vpop.f32.mrb[0].mxu0
    %6273 = vmatprep.mubr.f32.mxu0 0.0
    %6274 = vmatmul.mubr.f32.gmra.mrb[0].mxu0 %v6101
    %v6275 = vpop.f32.mrb[0].mxu0
    %v6276 = vadd.f32 0.0, %v6275
    %v6277 = vpop.f32.mrb[0].mxu0
    %6278 = vmatprep.mubr.f32.mxu0 0.0
    %6279 = vmatmul.mubr.f32.gmra.mrb[0].mxu0 %v6102
    %v6280 = vpop.f32.mrb[0].mxu0
    %v6281 = vadd.f32 0.0, %v6280
    %v6282 = vpop.f32.mrb[0].mxu0
    %6283 = vdwg.mxu0
    %v6284 = vadd.f32 %v5362, %v6186
    %v6285 = vadd.f32 %v5363, %v6191
    %v6286 = vadd.f32 %v5364, %v6196
    %v6287 = vadd.f32 %v5365, %v6201
    %v6288 = vadd.f32 %v5366, %v6206
    %v6289 = vadd.f32 %v5367, %v6211
    %v6290 = vadd.f32 %v5368, %v6216
    %v6291 = vadd.f32 %v5369, %v6221
    %v6292 = vadd.f32 %v5370, %v6226
    %v6293 = vadd.f32 %v5371, %v6231
    %v6294 = vadd.f32 %v5372, %v6236
    %v6295 = vadd.f32 %v5373, %v6241
    %v6296 = vadd.f32 %v5374, %v6246
    %v6297 = vadd.f32 %v5375, %v6251
    %v6298 = vadd.f32 %v5376, %v6256
    %v6299 = vadd.f32 %v5377, %v6261
    %v6300 = vadd.f32 %v5378, %v6266
    %v6301 = vadd.f32 %v5379, %v6271
    %v6302 = vadd.f32 %v5380, %v6276
    %v6303 = vadd.f32 %v5381, %v6281
    %v6304 = vlaneseq
    %v6305 = vshrl.u32 %v6304, 7
    %v6306 = vsub.s32 0, %v6305
    %v6307 = vrot.slane %v94, %v6306
    %v6308 = vadd.f32 %v6284, %v6307
    %v6309 = vadd.f32 %v6285, %v6307
    %v6310 = vadd.f32 %v6286, %v6307
    %v6311 = vadd.f32 %v6287, %v6307
    %v6312 = vadd.f32 %v6288, %v6307
    %v6313 = vadd.f32 %v6289, %v6307
    %v6314 = vadd.f32 %v6290, %v6307
    %v6315 = vadd.f32 %v6291, %v6307
    %v6316 = vadd.f32 %v6292, %v6307
    %v6317 = vadd.f32 %v6293, %v6307
    %v6318 = vadd.f32 %v6294, %v6307
    %v6319 = vadd.f32 %v6295, %v6307
    %v6320 = vadd.f32 %v6296, %v6307
    %v6321 = vadd.f32 %v6297, %v6307
    %v6322 = vadd.f32 %v6298, %v6307
    %v6323 = vadd.f32 %v6299, %v6307
    %v6324 = vadd.f32 %v6300, %v6307
    %v6325 = vadd.f32 %v6301, %v6307
    %v6326 = vadd.f32 %v6302, %v6307
    %v6327 = vadd.f32 %v6303, %v6307
    %6328 = vst.msk [vmem:[%s9] sm:$0xff] %vm95, %v6308
    %6329 = vst.msk [vmem:[%s9 + $0x8] sm:$0xff] %vm95, %v6309
    %6330 = vst.msk [vmem:[%s9 + $0x10] sm:$0xff] %vm95, %v6310
    %6331 = vst.msk [vmem:[%s9 + $0x18] sm:$0xff] %vm95, %v6311
    %6332 = vst.msk [vmem:[%s9 + $0x20] sm:$0xff] %vm95, %v6312
    %6333 = vst.msk [vmem:[%s9 + $0x28] sm:$0xff] %vm95, %v6313
    %6334 = vst.msk [vmem:[%s9 + $0x30] sm:$0xff] %vm95, %v6314
    %6335 = vst.msk [vmem:[%s9 + $0x38] sm:$0xff] %vm95, %v6315
    %6336 = vst.msk [vmem:[%s9 + $0x40] sm:$0xff] %vm95, %v6316
    %6337 = vst.msk [vmem:[%s9 + $0x48] sm:$0xff] %vm95, %v6317
    %6338 = vst.msk [vmem:[%s9 + $0x50] sm:$0xff] %vm95, %v6318
    %6339 = vst.msk [vmem:[%s9 + $0x58] sm:$0xff] %vm95, %v6319
    %6340 = vst.msk [vmem:[%s9 + $0x60] sm:$0xff] %vm95, %v6320
    %6341 = vst.msk [vmem:[%s9 + $0x68] sm:$0xff] %vm95, %v6321
    %6342 = vst.msk [vmem:[%s9 + $0x70] sm:$0xff] %vm95, %v6322
    %6343 = vst.msk [vmem:[%s9 + $0x78] sm:$0xff] %vm95, %v6323
    %6344 = vst.msk [vmem:[%s9 + $0x80] sm:$0xff] %vm95, %v6324
    %6345 = vst.msk [vmem:[%s9 + $0x88] sm:$0xff] %vm95, %v6325
    %6346 = vst.msk [vmem:[%s9 + $0x90] sm:$0xff] %vm95, %v6326
    %6347 = vst.msk [vmem:[%s9 + $0x98] sm:$0xff] %vm95, %v6327
    // Predicated region
    $region50: #{tpu_custom_call.1} parent=1 // pred_check
      _
    $region51: #{tpu_custom_call.1} parent=1 // pred_check_branch
      %6349 = sbr.rel (0) target = $region53
    $region52: #{tpu_custom_call.1} parent=1 // pred_region
      _
    $region53: #{tpu_custom_call.1} parent=1 // pred_fallthru
      _
    // Predicated region
    $region54: #{tpu_custom_call.1} parent=1 // pred_check
      _
    $region55: #{tpu_custom_call.1} parent=1 // pred_check_branch
      %6351 = sbr.rel (0) target = $region57
    $region56: #{tpu_custom_call.1} parent=1 // pred_region
      _
    $region57: #{tpu_custom_call.1} parent=1 // pred_fallthru
      _
    %6352 = vsyncpa [#allocation3], 1
    %6353 = vsyncpa [#allocation5], 1

</llo_original>
